<compile_context>
chip_gen: v7x
topology: tpu7x:2x2x1
jax: 0.10.0
libtpu: 0.0.40
codegen_flags: <defaults>
</compile_context>

<pallas_src>
import jax
import jax.numpy as jnp
from jax.experimental import pallas as pl
from jax.experimental.pallas import tpu as pltpu

# ---------------- small, module-consistent config ----------------
B, S = 2, 8                    # batch, sequence length
POS_DIM = 8                    # nn.Embedding(pos_dim, dim) vocabulary
NHEAD = 4
NUM_LAYERS = 2
DIM_FF = 32                    # dim_feedforward
HIDDEN = 32                    # hidden
LN_EPS = 1e-5

# Synthetic "data" dict spec (mirrors __init__ dim computation):
#   index = [0, 1, 2], state = [0, 1, 3]
#   feature 0: categorical -> pretrained embedding table '0'  (10, 8)
#   feature 1: categorical -> pretrained embedding table '1'  (10, 5)
#   feature 2: raw scalar feature (state == 3)                (+1)
EMB0_VOCAB, EMB0_DIM = 10, 8
EMB1_VOCAB, EMB1_DIM = 10, 5
RAW_DIM = 1
_DIM_RAW = EMB0_DIM + EMB1_DIM + RAW_DIM            # 14
_M = _DIM_RAW % NHEAD
DIM = _DIM_RAW + (NHEAD - _M if _M > 0 else 0)      # padded to 16 (multiple of nhead)
HEAD_DIM = DIM // NHEAD


# ---------------- shared math ----------------
def _layernorm(x, g, b, eps=LN_EPS):
    mu = jnp.mean(x, axis=-1, keepdims=True)
    xc = x - mu
    var = jnp.mean(xc * xc, axis=-1, keepdims=True)
    return xc * jax.lax.rsqrt(var + eps) * g + b


# ---------------- fused Pallas kernel ----------------
def _fused_transformer_kernel(
        x_ref,
        ln1g_ref, ln1b_ref, wqkv_ref, bqkv_ref, wo_ref, bo_ref,
        ln2g_ref, ln2b_ref, w1_ref, b1_ref, w2_ref, b2_ref,
        lnfg_ref, lnfb_ref, whead_ref, bhead_ref,
        out_ref, memlast_ref):
    """Whole forward on the flattened batch: x_ref is (B*S, D)."""
    h = x_ref[...]                                             # (B*S, D)

    # ---- encoder layers (statically unrolled) ----
    for l in range(NUM_LAYERS):
        # --- self-attention block: h = h + MHA(LN1(h)) ---
        xn = _layernorm(h, ln1g_ref[l], ln1b_ref[l])
        qkv = jnp.dot(xn, wqkv_ref[l],
                      preferred_element_type=jnp.float32) + bqkv_ref[l]  # (B*S, 3D)
        q = qkv[:, 0 * DIM:1 * DIM]        # already scaled by 1/sqrt(head_dim)
        k = qkv[:, 1 * DIM:2 * DIM]
        v = qkv[:, 2 * DIM:3 * DIM]
        wo_l = wo_ref[l]                                        # (D, D), (in, out)

        attn_parts = []
        for b in range(B):
            rows = slice(b * S, (b + 1) * S)
            qb, kb, vb = q[rows], k[rows], v[rows]              # (S, D) each
            acc = jnp.zeros((S, DIM), jnp.float32)
            for hh in range(NHEAD):
                cols = slice(hh * HEAD_DIM, (hh + 1) * HEAD_DIM)
                qh, kh, vh = qb[:, cols], kb[:, cols], vb[:, cols]
                # scores: (S, S), NT matmul (no explicit transpose op)
                s = jax.lax.dot_general(
                    qh, kh, (((1,), (1,)), ((), ())),
                    preferred_element_type=jnp.float32)
                s = s - jnp.max(s, axis=-1, keepdims=True)
                p = jnp.exp(s)
                p = p * pl.reciprocal(jnp.sum(p, axis=-1, keepdims=True),
                                      approx=True)
                oh = jnp.dot(p, vh, preferred_element_type=jnp.float32)  # (S, HD)
                # project this head straight through its rows of W_O
                acc = acc + jnp.dot(oh, wo_l[cols, :],
                                    preferred_element_type=jnp.float32)
            attn_parts.append(acc)
        attn = jnp.concatenate(attn_parts, axis=0) + bo_ref[l]  # (B*S, D)
        h = h + attn

        # --- feedforward block: h = h + W2 relu(W1 LN2(h)) ---
        xn2 = _layernorm(h, ln2g_ref[l], ln2b_ref[l])
        hf = jnp.maximum(
            jnp.dot(xn2, w1_ref[l], preferred_element_type=jnp.float32)
            + b1_ref[l], 0.0)
        h = h + jnp.dot(hf, w2_ref[l],
                        preferred_element_type=jnp.float32) + b2_ref[l]

    # ---- head: final encoder LayerNorm -> (identity pool) -> folded fnn1/fnn2 ----
    mem = _layernorm(h, lnfg_ref[...], lnfb_ref[...])           # (B*S, D)

    # output: single NT matmul (1, D) x (B*S, D)^T -> lane-dense (1, B*S)
    out_ref[...] = jax.lax.dot_general(
        whead_ref[...], mem, (((1,), (1,)), ((), ())),
        preferred_element_type=jnp.float32) + bhead_ref[...]    # (1, B*S)

    # only memory[:, -1, :] is consumed downstream -> write just those rows.
    memlast_ref[...] = jnp.concatenate(
        [mem[b * S + S - 1: b * S + S, :] for b in range(B)], axis=0)    # (B, D)


def fused_forward_pallas(h_flat, fp):
    """h_flat: (B*S, D) -> (output (1, B*S), memory_last (B, D))."""
    args = [h_flat,
            fp['ln1_g'], fp['ln1_b'], fp['wqkv'], fp['bqkv'], fp['wo'], fp['bo'],
            fp['ln2_g'], fp['ln2_b'], fp['w1'], fp['b1'], fp['w2'], fp['b2'],
            fp['ln_f_g'], fp['ln_f_b'], fp['w_head'], fp['b_head']]
    return pl.pallas_call(
        _fused_transformer_kernel,
        out_shape=(jax.ShapeDtypeStruct((1, B * S), jnp.float32),
                   jax.ShapeDtypeStruct((B, DIM), jnp.float32)),
        compiler_params=pltpu.CompilerParams(
            vmem_limit_bytes=32 * 1024 * 1024),
    )(*args)


# ---------------- parameters (deterministic synthetic init) ----------------
def init_params(key):
    ks = iter(jax.random.split(key, 64))

    def dense(out_dim, in_dim, scale=0.05):
        w = jax.random.normal(next(ks), (out_dim, in_dim), jnp.float32) * scale
        b = jax.random.normal(next(ks), (1, out_dim), jnp.float32) * scale
        return w, b

    p = {}
    p['emb0'] = jax.random.normal(next(ks), (EMB0_VOCAB, EMB0_DIM), jnp.float32) * 0.1
    p['emb1'] = jax.random.normal(next(ks), (EMB1_VOCAB, EMB1_DIM), jnp.float32) * 0.1
    p['pos'] = jax.random.normal(next(ks), (POS_DIM, DIM), jnp.float32) * 0.1

    layers = []
    for _ in range(NUM_LAYERS):
        lp = {}
        lp['ln1_g'] = jnp.ones((1, DIM), jnp.float32)
        lp['ln1_b'] = jnp.zeros((1, DIM), jnp.float32)
        lp['wq'], lp['bq'] = dense(DIM, DIM)
        lp['wk'], lp['bk'] = dense(DIM, DIM)
        lp['wv'], lp['bv'] = dense(DIM, DIM)
        lp['wo'], lp['bo'] = dense(DIM, DIM)
        lp['ln2_g'] = jnp.ones((1, DIM), jnp.float32)
        lp['ln2_b'] = jnp.zeros((1, DIM), jnp.float32)
        lp['w1'], lp['b1'] = dense(DIM_FF, DIM)
        lp['w2'], lp['b2'] = dense(DIM, DIM_FF)
        layers.append(lp)
    p['layers'] = layers

    p['ln_f_g'] = jnp.ones((1, DIM), jnp.float32)
    p['ln_f_b'] = jnp.zeros((1, DIM), jnp.float32)
    p['fnn1_w'], p['fnn1_b'] = dense(HIDDEN, DIM)
    p['fnn2_w'], p['fnn2_b'] = dense(1, HIDDEN)
    return p


def prepare_fused_params(p):
    """Host-side weight prep: stack layers, pre-transpose, fuse QKV, fold scale,
    and fold the linear fnn1 -> dropout(eval) -> fnn2 chain into one (1, D) map."""
    scale = 1.0 / (HEAD_DIM ** 0.5)

    def stack(fn):
        return jnp.stack([fn(lp) for lp in p['layers']], axis=0)

    fp = {}
    fp['ln1_g'] = stack(lambda lp: lp['ln1_g'])                       # (L,1,D)
    fp['ln1_b'] = stack(lambda lp: lp['ln1_b'])
    fp['wqkv'] = stack(lambda lp: jnp.concatenate(
        [lp['wq'].T * scale, lp['wk'].T, lp['wv'].T], axis=1))        # (L,D,3D)
    fp['bqkv'] = stack(lambda lp: jnp.concatenate(
        [lp['bq'] * scale, lp['bk'], lp['bv']], axis=1))              # (L,1,3D)
    fp['wo'] = stack(lambda lp: lp['wo'].T)                           # (L,D,D)
    fp['bo'] = stack(lambda lp: lp['bo'])                             # (L,1,D)
    fp['ln2_g'] = stack(lambda lp: lp['ln2_g'])
    fp['ln2_b'] = stack(lambda lp: lp['ln2_b'])
    fp['w1'] = stack(lambda lp: lp['w1'].T)                           # (L,D,FF)
    fp['b1'] = stack(lambda lp: lp['b1'])                             # (L,1,FF)
    fp['w2'] = stack(lambda lp: lp['w2'].T)                           # (L,FF,D)
    fp['b2'] = stack(lambda lp: lp['b2'])                             # (L,1,D)
    fp['ln_f_g'] = p['ln_f_g']                                        # (1,D)
    fp['ln_f_b'] = p['ln_f_b']
    # fnn2(dropout(fnn1(x))) in eval mode == x @ (fnn2_w @ fnn1_w).T + const
    fp['w_head'] = p['fnn2_w'] @ p['fnn1_w']                          # (1,D)
    fp['b_head'] = (p['fnn1_b'] @ p['fnn2_w'].T + p['fnn2_b'])        # (1,1)
    return fp


# ---------------- glue: data-dict feature assembly + pos encoding ----------------
def assemble_inputs(x, p):
    # mirrors Transformer.forward feature assembly for index=[0,1,2], state=[0,1,3]:
    #   feat 0: embedding '0' lookup  -> (B,S,8)
    #   feat 1: embedding '1' lookup  -> concat -> (B,S,13)
    #   feat 2: raw scalar            -> concat -> (B,S,14)
    #   zero-pad to self.dim (16, multiple of nhead)
    e0 = jnp.take(p['emb0'], x[:, :, 0].astype(jnp.int32), axis=0)
    e1 = jnp.take(p['emb1'], x[:, :, 1].astype(jnp.int32), axis=0)
    raw = x[:, :, 2:3].astype(jnp.float32)
    inputc = jnp.concatenate([e0, e1, raw], axis=-1)
    pad = DIM - inputc.shape[-1]
    if pad > 0:
        inputc = jnp.concatenate(
            [inputc, jnp.zeros(inputc.shape[:-1] + (pad,), jnp.float32)], axis=-1)
    return inputc


def transformer_forward(x, pos_encode, p, fused):
    inputc = assemble_inputs(x, p)
    pos = jnp.take(p['pos'], pos_encode.astype(jnp.int32), axis=0)   # (B,S,DIM)
    h = (inputc + pos).reshape(B * S, DIM)
    out_flat, mem_last = fused_forward_pallas(h, fused)
    return out_flat.reshape(B, S, 1), mem_last


# ---------------- pure-JAX reference (original PyTorch-style math) ----------------
def _encoder_layer_math(x, g1, b1, wq, bq, wk, bk, wv, bv, wo, bo,
                        g2, b2, w1, bf1, w2, bf2):
    """One norm_first TransformerEncoderLayer on a single example x: (S, D)."""
    xn = _layernorm(x, g1, b1)
    q = jnp.dot(xn, wq.T, preferred_element_type=jnp.float32) + bq
    k = jnp.dot(xn, wk.T, preferred_element_type=jnp.float32) + bk
    v = jnp.dot(xn, wv.T, preferred_element_type=jnp.float32) + bv
    scale = 1.0 / (HEAD_DIM ** 0.5)
    heads = []
    for h in range(NHEAD):
        sl = slice(h * HEAD_DIM, (h + 1) * HEAD_DIM)
        qh, kh, vh = q[:, sl], k[:, sl], v[:, sl]
        s = jnp.dot(qh, kh.T, preferred_element_type=jnp.float32) * scale
        s = s - jnp.max(s, axis=-1, keepdims=True)
        pr = jnp.exp(s)
        pr = pr / jnp.sum(pr, axis=-1, keepdims=True)
        heads.append(jnp.dot(pr, vh, preferred_element_type=jnp.float32))
    attn = jnp.concatenate(heads, axis=-1)
    attn = jnp.dot(attn, wo.T, preferred_element_type=jnp.float32) + bo
    x = x + attn
    xn2 = _layernorm(x, g2, b2)
    h1 = jnp.maximum(
        jnp.dot(xn2, w1.T, preferred_element_type=jnp.float32) + bf1, 0.0)
    ff = jnp.dot(h1, w2.T, preferred_element_type=jnp.float32) + bf2
    return x + ff


def _head_math(x, gn, bn, wf1, bf1, wf2, bf2):
    mem = _layernorm(x, gn, bn)
    # AdaptiveAvgPool1d(DIM) on last axis of length DIM is the identity.
    h = jnp.dot(mem, wf1.T, preferred_element_type=jnp.float32) + bf1
    out = jnp.dot(h, wf2.T, preferred_element_type=jnp.float32) + bf2
    return mem, out


def transformer_forward_ref(x, pos_encode, p):
    inputc = assemble_inputs(x, p)
    pos = jnp.take(p['pos'], pos_encode.astype(jnp.int32), axis=0)
    h = inputc + pos
    for lp in p['layers']:
        weights = (lp['ln1_g'], lp['ln1_b'], lp['wq'], lp['bq'], lp['wk'], lp['bk'],
                   lp['wv'], lp['bv'], lp['wo'], lp['bo'], lp['ln2_g'], lp['ln2_b'],
                   lp['w1'], lp['b1'], lp['w2'], lp['b2'])
        h = jax.vmap(_encoder_layer_math, in_axes=(0,) + (None,) * 16)(h, *weights)
    mem, out = jax.vmap(_head_math, in_axes=(0,) + (None,) * 6)(
        h, p['ln_f_g'], p['ln_f_b'], p['fnn1_w'], p['fnn1_b'],
        p['fnn2_w'], p['fnn2_b'])
    return out, mem[:, -1, :]


# ---------------- main ----------------
if __name__ == "__main__":
    root = jax.random.PRNGKey(0)
    k_par, k_i0, k_i1, k_raw = jax.random.split(root, 4)

    params = init_params(k_par)
    fused = prepare_fused_params(params)

    # x: (B, S, 3) — columns 0/1 are categorical indices (stored as float,
    # like the PyTorch module which casts via LongTensor), column 2 is raw.
    idx0 = jax.random.randint(k_i0, (B, S), 0, EMB0_VOCAB).astype(jnp.float32)
    idx1 = jax.random.randint(k_i1, (B, S), 0, EMB1_VOCAB).astype(jnp.float32)
    rawf = jax.random.normal(k_raw, (B, S), jnp.float32)
    x = jnp.stack([idx0, idx1, rawf], axis=-1)                 # (2, 8, 3)

    pos_encode = jnp.broadcast_to(jnp.arange(S, dtype=jnp.int32), (B, S))  # (2, 8)

    forward_jit = jax.jit(transformer_forward)
    output, mem_last = forward_jit(x, pos_encode, params, fused)
    output = jax.block_until_ready(output)
    mem_last = jax.block_until_ready(mem_last)

    # sanity check against pure-JAX reference of the original module math
    ref_out, ref_mem = transformer_forward_ref(x, pos_encode, params)
    assert output.shape == (B, S, 1) and mem_last.shape == (B, DIM)
    assert jnp.allclose(output, ref_out, atol=2e-3, rtol=2e-3)
    assert jnp.allclose(mem_last, ref_mem, atol=2e-3, rtol=2e-3)

    print("KERNEL_OK")
</pallas_src>

<mosaic_0001>
module attributes {stable_mosaic.version = 11 : i64} {
  func.func @_fused_transformer_kernel(%arg0: memref<16x16xf32, #tpu.memory_space<vmem>>, %arg1: memref<2x1x16xf32, #tpu.memory_space<vmem>>, %arg2: memref<2x1x16xf32, #tpu.memory_space<vmem>>, %arg3: memref<2x16x48xf32, #tpu.memory_space<vmem>>, %arg4: memref<2x1x48xf32, #tpu.memory_space<vmem>>, %arg5: memref<2x16x16xf32, #tpu.memory_space<vmem>>, %arg6: memref<2x1x16xf32, #tpu.memory_space<vmem>>, %arg7: memref<2x1x16xf32, #tpu.memory_space<vmem>>, %arg8: memref<2x1x16xf32, #tpu.memory_space<vmem>>, %arg9: memref<2x16x32xf32, #tpu.memory_space<vmem>>, %arg10: memref<2x1x32xf32, #tpu.memory_space<vmem>>, %arg11: memref<2x32x16xf32, #tpu.memory_space<vmem>>, %arg12: memref<2x1x16xf32, #tpu.memory_space<vmem>>, %arg13: memref<1x16xf32, #tpu.memory_space<vmem>>, %arg14: memref<1x16xf32, #tpu.memory_space<vmem>>, %arg15: memref<1x16xf32, #tpu.memory_space<vmem>>, %arg16: memref<1x1xf32, #tpu.memory_space<vmem>>, %arg17: memref<1x16xf32, #tpu.memory_space<vmem>>, %arg18: memref<2x16xf32, #tpu.memory_space<vmem>>) attributes {dimension_semantics = [], scalar_prefetch = 0 : i64, scratch_operands = 0 : i64, tpu.core_type = #tpu.core_type<tc>} {
    %c0 = arith.constant 0 : index
    %c0_0 = arith.constant 0 : index
    %0 = vector.load %arg0[%c0, %c0_0] : memref<16x16xf32, #tpu.memory_space<vmem>>, vector<16x16xf32>
    %c0_1 = arith.constant 0 : index
    %c0_2 = arith.constant 0 : index
    %c0_3 = arith.constant 0 : index
    %1 = vector.load %arg1[%c0_1, %c0_2, %c0_3] : memref<2x1x16xf32, #tpu.memory_space<vmem>>, vector<1x1x16xf32>
    %2 = vector.shape_cast %1 : vector<1x1x16xf32> to vector<1x16xf32>
    %c0_4 = arith.constant 0 : index
    %c0_5 = arith.constant 0 : index
    %c0_6 = arith.constant 0 : index
    %3 = vector.load %arg2[%c0_4, %c0_5, %c0_6] : memref<2x1x16xf32, #tpu.memory_space<vmem>>, vector<1x1x16xf32>
    %4 = vector.shape_cast %3 : vector<1x1x16xf32> to vector<1x16xf32>
    %cst = arith.constant dense<0.000000e+00> : vector<16xf32>
    %5 = vector.multi_reduction <add>, %0, %cst [1] : vector<16x16xf32> to vector<16xf32>
    %6 = vector.shape_cast %5 : vector<16xf32> to vector<16x1xf32>
    %cst_7 = arith.constant 1.600000e+01 : f32
    %7 = vector.broadcast %cst_7 : f32 to vector<16x1xf32>
    %8 = arith.divf %6, %7 : vector<16x1xf32>
    %9 = vector.broadcast %8 : vector<16x1xf32> to vector<16x16xf32>
    %10 = arith.subf %0, %9 : vector<16x16xf32>
    %11 = arith.mulf %10, %10 : vector<16x16xf32>
    %cst_8 = arith.constant dense<0.000000e+00> : vector<16xf32>
    %12 = vector.multi_reduction <add>, %11, %cst_8 [1] : vector<16x16xf32> to vector<16xf32>
    %13 = vector.shape_cast %12 : vector<16xf32> to vector<16x1xf32>
    %cst_9 = arith.constant 1.600000e+01 : f32
    %14 = vector.broadcast %cst_9 : f32 to vector<16x1xf32>
    %15 = arith.divf %13, %14 : vector<16x1xf32>
    %cst_10 = arith.constant 9.99999974E-6 : f32
    %16 = vector.broadcast %cst_10 : f32 to vector<16x1xf32>
    %17 = arith.addf %15, %16 : vector<16x1xf32>
    %18 = math.rsqrt %17 : vector<16x1xf32>
    %19 = vector.broadcast %18 : vector<16x1xf32> to vector<16x16xf32>
    %20 = arith.mulf %10, %19 : vector<16x16xf32>
    %21 = vector.broadcast %2 : vector<1x16xf32> to vector<16x16xf32>
    %22 = arith.mulf %20, %21 : vector<16x16xf32>
    %23 = vector.broadcast %4 : vector<1x16xf32> to vector<16x16xf32>
    %24 = arith.addf %22, %23 : vector<16x16xf32>
    %c0_11 = arith.constant 0 : index
    %c0_12 = arith.constant 0 : index
    %c0_13 = arith.constant 0 : index
    %25 = vector.load %arg3[%c0_11, %c0_12, %c0_13] : memref<2x16x48xf32, #tpu.memory_space<vmem>>, vector<1x16x48xf32>
    %26 = vector.shape_cast %25 : vector<1x16x48xf32> to vector<16x48xf32>
    %cst_14 = arith.constant dense<0.000000e+00> : vector<16x48xf32>
    %27 = tpu.matmul %24, %26, %cst_14 {dimension_numbers = #tpu.dot_dimension_numbers<[1], [0], [0], [1], [0, 0, 1, 1], [], []>} : vector<16x16xf32>, vector<16x48xf32>, vector<16x48xf32> -> vector<16x48xf32>
    %c0_15 = arith.constant 0 : index
    %c0_16 = arith.constant 0 : index
    %c0_17 = arith.constant 0 : index
    %28 = vector.load %arg4[%c0_15, %c0_16, %c0_17] : memref<2x1x48xf32, #tpu.memory_space<vmem>>, vector<1x1x48xf32>
    %29 = vector.shape_cast %28 : vector<1x1x48xf32> to vector<1x48xf32>
    %30 = vector.broadcast %29 : vector<1x48xf32> to vector<16x48xf32>
    %31 = arith.addf %27, %30 : vector<16x48xf32>
    %32 = vector.extract_strided_slice %31 {offsets = [0, 0], sizes = [16, 16], strides = [1, 1]} : vector<16x48xf32> to vector<16x16xf32>
    %33 = vector.extract_strided_slice %31 {offsets = [0, 16], sizes = [16, 16], strides = [1, 1]} : vector<16x48xf32> to vector<16x16xf32>
    %34 = vector.extract_strided_slice %31 {offsets = [0, 32], sizes = [16, 16], strides = [1, 1]} : vector<16x48xf32> to vector<16x16xf32>
    %c0_18 = arith.constant 0 : index
    %c0_19 = arith.constant 0 : index
    %c0_20 = arith.constant 0 : index
    %35 = vector.load %arg5[%c0_18, %c0_19, %c0_20] : memref<2x16x16xf32, #tpu.memory_space<vmem>>, vector<1x16x16xf32>
    %36 = vector.shape_cast %35 : vector<1x16x16xf32> to vector<16x16xf32>
    %37 = vector.extract_strided_slice %32 {offsets = [0, 0], sizes = [8, 16], strides = [1, 1]} : vector<16x16xf32> to vector<8x16xf32>
    %38 = vector.extract_strided_slice %33 {offsets = [0, 0], sizes = [8, 16], strides = [1, 1]} : vector<16x16xf32> to vector<8x16xf32>
    %39 = vector.extract_strided_slice %34 {offsets = [0, 0], sizes = [8, 16], strides = [1, 1]} : vector<16x16xf32> to vector<8x16xf32>
    %cst_21 = arith.constant 0.000000e+00 : f32
    %40 = vector.broadcast %cst_21 : f32 to vector<8x16xf32>
    %41 = vector.extract_strided_slice %37 {offsets = [0, 0], sizes = [8, 4], strides = [1, 1]} : vector<8x16xf32> to vector<8x4xf32>
    %42 = vector.extract_strided_slice %38 {offsets = [0, 0], sizes = [8, 4], strides = [1, 1]} : vector<8x16xf32> to vector<8x4xf32>
    %43 = vector.extract_strided_slice %39 {offsets = [0, 0], sizes = [8, 4], strides = [1, 1]} : vector<8x16xf32> to vector<8x4xf32>
    %cst_22 = arith.constant dense<0.000000e+00> : vector<8x8xf32>
    %44 = tpu.matmul %41, %42, %cst_22 {dimension_numbers = #tpu.dot_dimension_numbers<[1], [1], [0], [0], [0, 0, 1, 0], [], []>} : vector<8x4xf32>, vector<8x4xf32>, vector<8x8xf32> -> vector<8x8xf32>
    %cst_23 = arith.constant dense<0xFF800000> : vector<8xf32>
    %45 = vector.multi_reduction <maximumf>, %44, %cst_23 [1] : vector<8x8xf32> to vector<8xf32>
    %46 = vector.shape_cast %45 : vector<8xf32> to vector<8x1xf32>
    %47 = vector.broadcast %46 : vector<8x1xf32> to vector<8x8xf32>
    %48 = arith.subf %44, %47 : vector<8x8xf32>
    %49 = math.exp %48 : vector<8x8xf32>
    %cst_24 = arith.constant dense<0.000000e+00> : vector<8xf32>
    %50 = vector.multi_reduction <add>, %49, %cst_24 [1] : vector<8x8xf32> to vector<8xf32>
    %51 = vector.shape_cast %50 : vector<8xf32> to vector<8x1xf32>
    %52 = tpu.reciprocal %51 {approx = true} : vector<8x1xf32> -> vector<8x1xf32>
    %53 = vector.broadcast %52 : vector<8x1xf32> to vector<8x8xf32>
    %54 = arith.mulf %49, %53 : vector<8x8xf32>
    %cst_25 = arith.constant dense<0.000000e+00> : vector<8x4xf32>
    %55 = tpu.matmul %54, %43, %cst_25 {dimension_numbers = #tpu.dot_dimension_numbers<[1], [0], [0], [1], [0, 0, 1, 1], [], []>} : vector<8x8xf32>, vector<8x4xf32>, vector<8x4xf32> -> vector<8x4xf32>
    %56 = vector.extract_strided_slice %36 {offsets = [0, 0], sizes = [4, 16], strides = [1, 1]} : vector<16x16xf32> to vector<4x16xf32>
    %cst_26 = arith.constant dense<0.000000e+00> : vector<8x16xf32>
    %57 = tpu.matmul %55, %56, %cst_26 {dimension_numbers = #tpu.dot_dimension_numbers<[1], [0], [0], [1], [0, 0, 1, 1], [], []>} : vector<8x4xf32>, vector<4x16xf32>, vector<8x16xf32> -> vector<8x16xf32>
    %58 = arith.addf %40, %57 : vector<8x16xf32>
    %59 = vector.extract_strided_slice %37 {offsets = [0, 4], sizes = [8, 4], strides = [1, 1]} : vector<8x16xf32> to vector<8x4xf32>
    %60 = vector.extract_strided_slice %38 {offsets = [0, 4], sizes = [8, 4], strides = [1, 1]} : vector<8x16xf32> to vector<8x4xf32>
    %61 = vector.extract_strided_slice %39 {offsets = [0, 4], sizes = [8, 4], strides = [1, 1]} : vector<8x16xf32> to vector<8x4xf32>
    %cst_27 = arith.constant dense<0.000000e+00> : vector<8x8xf32>
    %62 = tpu.matmul %59, %60, %cst_27 {dimension_numbers = #tpu.dot_dimension_numbers<[1], [1], [0], [0], [0, 0, 1, 0], [], []>} : vector<8x4xf32>, vector<8x4xf32>, vector<8x8xf32> -> vector<8x8xf32>
    %cst_28 = arith.constant dense<0xFF800000> : vector<8xf32>
    %63 = vector.multi_reduction <maximumf>, %62, %cst_28 [1] : vector<8x8xf32> to vector<8xf32>
    %64 = vector.shape_cast %63 : vector<8xf32> to vector<8x1xf32>
    %65 = vector.broadcast %64 : vector<8x1xf32> to vector<8x8xf32>
    %66 = arith.subf %62, %65 : vector<8x8xf32>
    %67 = math.exp %66 : vector<8x8xf32>
    %cst_29 = arith.constant dense<0.000000e+00> : vector<8xf32>
    %68 = vector.multi_reduction <add>, %67, %cst_29 [1] : vector<8x8xf32> to vector<8xf32>
    %69 = vector.shape_cast %68 : vector<8xf32> to vector<8x1xf32>
    %70 = tpu.reciprocal %69 {approx = true} : vector<8x1xf32> -> vector<8x1xf32>
    %71 = vector.broadcast %70 : vector<8x1xf32> to vector<8x8xf32>
    %72 = arith.mulf %67, %71 : vector<8x8xf32>
    %cst_30 = arith.constant dense<0.000000e+00> : vector<8x4xf32>
    %73 = tpu.matmul %72, %61, %cst_30 {dimension_numbers = #tpu.dot_dimension_numbers<[1], [0], [0], [1], [0, 0, 1, 1], [], []>} : vector<8x8xf32>, vector<8x4xf32>, vector<8x4xf32> -> vector<8x4xf32>
    %74 = vector.extract_strided_slice %36 {offsets = [4, 0], sizes = [4, 16], strides = [1, 1]} : vector<16x16xf32> to vector<4x16xf32>
    %cst_31 = arith.constant dense<0.000000e+00> : vector<8x16xf32>
    %75 = tpu.matmul %73, %74, %cst_31 {dimension_numbers = #tpu.dot_dimension_numbers<[1], [0], [0], [1], [0, 0, 1, 1], [], []>} : vector<8x4xf32>, vector<4x16xf32>, vector<8x16xf32> -> vector<8x16xf32>
    %76 = arith.addf %58, %75 : vector<8x16xf32>
    %77 = vector.extract_strided_slice %37 {offsets = [0, 8], sizes = [8, 4], strides = [1, 1]} : vector<8x16xf32> to vector<8x4xf32>
    %78 = vector.extract_strided_slice %38 {offsets = [0, 8], sizes = [8, 4], strides = [1, 1]} : vector<8x16xf32> to vector<8x4xf32>
    %79 = vector.extract_strided_slice %39 {offsets = [0, 8], sizes = [8, 4], strides = [1, 1]} : vector<8x16xf32> to vector<8x4xf32>
    %cst_32 = arith.constant dense<0.000000e+00> : vector<8x8xf32>
    %80 = tpu.matmul %77, %78, %cst_32 {dimension_numbers = #tpu.dot_dimension_numbers<[1], [1], [0], [0], [0, 0, 1, 0], [], []>} : vector<8x4xf32>, vector<8x4xf32>, vector<8x8xf32> -> vector<8x8xf32>
    %cst_33 = arith.constant dense<0xFF800000> : vector<8xf32>
    %81 = vector.multi_reduction <maximumf>, %80, %cst_33 [1] : vector<8x8xf32> to vector<8xf32>
    %82 = vector.shape_cast %81 : vector<8xf32> to vector<8x1xf32>
    %83 = vector.broadcast %82 : vector<8x1xf32> to vector<8x8xf32>
    %84 = arith.subf %80, %83 : vector<8x8xf32>
    %85 = math.exp %84 : vector<8x8xf32>
    %cst_34 = arith.constant dense<0.000000e+00> : vector<8xf32>
    %86 = vector.multi_reduction <add>, %85, %cst_34 [1] : vector<8x8xf32> to vector<8xf32>
    %87 = vector.shape_cast %86 : vector<8xf32> to vector<8x1xf32>
    %88 = tpu.reciprocal %87 {approx = true} : vector<8x1xf32> -> vector<8x1xf32>
    %89 = vector.broadcast %88 : vector<8x1xf32> to vector<8x8xf32>
    %90 = arith.mulf %85, %89 : vector<8x8xf32>
    %cst_35 = arith.constant dense<0.000000e+00> : vector<8x4xf32>
    %91 = tpu.matmul %90, %79, %cst_35 {dimension_numbers = #tpu.dot_dimension_numbers<[1], [0], [0], [1], [0, 0, 1, 1], [], []>} : vector<8x8xf32>, vector<8x4xf32>, vector<8x4xf32> -> vector<8x4xf32>
    %92 = vector.extract_strided_slice %36 {offsets = [8, 0], sizes = [4, 16], strides = [1, 1]} : vector<16x16xf32> to vector<4x16xf32>
    %cst_36 = arith.constant dense<0.000000e+00> : vector<8x16xf32>
    %93 = tpu.matmul %91, %92, %cst_36 {dimension_numbers = #tpu.dot_dimension_numbers<[1], [0], [0], [1], [0, 0, 1, 1], [], []>} : vector<8x4xf32>, vector<4x16xf32>, vector<8x16xf32> -> vector<8x16xf32>
    %94 = arith.addf %76, %93 : vector<8x16xf32>
    %95 = vector.extract_strided_slice %37 {offsets = [0, 12], sizes = [8, 4], strides = [1, 1]} : vector<8x16xf32> to vector<8x4xf32>
    %96 = vector.extract_strided_slice %38 {offsets = [0, 12], sizes = [8, 4], strides = [1, 1]} : vector<8x16xf32> to vector<8x4xf32>
    %97 = vector.extract_strided_slice %39 {offsets = [0, 12], sizes = [8, 4], strides = [1, 1]} : vector<8x16xf32> to vector<8x4xf32>
    %cst_37 = arith.constant dense<0.000000e+00> : vector<8x8xf32>
    %98 = tpu.matmul %95, %96, %cst_37 {dimension_numbers = #tpu.dot_dimension_numbers<[1], [1], [0], [0], [0, 0, 1, 0], [], []>} : vector<8x4xf32>, vector<8x4xf32>, vector<8x8xf32> -> vector<8x8xf32>
    %cst_38 = arith.constant dense<0xFF800000> : vector<8xf32>
    %99 = vector.multi_reduction <maximumf>, %98, %cst_38 [1] : vector<8x8xf32> to vector<8xf32>
    %100 = vector.shape_cast %99 : vector<8xf32> to vector<8x1xf32>
    %101 = vector.broadcast %100 : vector<8x1xf32> to vector<8x8xf32>
    %102 = arith.subf %98, %101 : vector<8x8xf32>
    %103 = math.exp %102 : vector<8x8xf32>
    %cst_39 = arith.constant dense<0.000000e+00> : vector<8xf32>
    %104 = vector.multi_reduction <add>, %103, %cst_39 [1] : vector<8x8xf32> to vector<8xf32>
    %105 = vector.shape_cast %104 : vector<8xf32> to vector<8x1xf32>
    %106 = tpu.reciprocal %105 {approx = true} : vector<8x1xf32> -> vector<8x1xf32>
    %107 = vector.broadcast %106 : vector<8x1xf32> to vector<8x8xf32>
    %108 = arith.mulf %103, %107 : vector<8x8xf32>
    %cst_40 = arith.constant dense<0.000000e+00> : vector<8x4xf32>
    %109 = tpu.matmul %108, %97, %cst_40 {dimension_numbers = #tpu.dot_dimension_numbers<[1], [0], [0], [1], [0, 0, 1, 1], [], []>} : vector<8x8xf32>, vector<8x4xf32>, vector<8x4xf32> -> vector<8x4xf32>
    %110 = vector.extract_strided_slice %36 {offsets = [12, 0], sizes = [4, 16], strides = [1, 1]} : vector<16x16xf32> to vector<4x16xf32>
    %cst_41 = arith.constant dense<0.000000e+00> : vector<8x16xf32>
    %111 = tpu.matmul %109, %110, %cst_41 {dimension_numbers = #tpu.dot_dimension_numbers<[1], [0], [0], [1], [0, 0, 1, 1], [], []>} : vector<8x4xf32>, vector<4x16xf32>, vector<8x16xf32> -> vector<8x16xf32>
    %112 = arith.addf %94, %111 : vector<8x16xf32>
    %113 = vector.extract_strided_slice %32 {offsets = [8, 0], sizes = [8, 16], strides = [1, 1]} : vector<16x16xf32> to vector<8x16xf32>
    %114 = vector.extract_strided_slice %33 {offsets = [8, 0], sizes = [8, 16], strides = [1, 1]} : vector<16x16xf32> to vector<8x16xf32>
    %115 = vector.extract_strided_slice %34 {offsets = [8, 0], sizes = [8, 16], strides = [1, 1]} : vector<16x16xf32> to vector<8x16xf32>
    %cst_42 = arith.constant 0.000000e+00 : f32
    %116 = vector.broadcast %cst_42 : f32 to vector<8x16xf32>
    %117 = vector.extract_strided_slice %113 {offsets = [0, 0], sizes = [8, 4], strides = [1, 1]} : vector<8x16xf32> to vector<8x4xf32>
    %118 = vector.extract_strided_slice %114 {offsets = [0, 0], sizes = [8, 4], strides = [1, 1]} : vector<8x16xf32> to vector<8x4xf32>
    %119 = vector.extract_strided_slice %115 {offsets = [0, 0], sizes = [8, 4], strides = [1, 1]} : vector<8x16xf32> to vector<8x4xf32>
    %cst_43 = arith.constant dense<0.000000e+00> : vector<8x8xf32>
    %120 = tpu.matmul %117, %118, %cst_43 {dimension_numbers = #tpu.dot_dimension_numbers<[1], [1], [0], [0], [0, 0, 1, 0], [], []>} : vector<8x4xf32>, vector<8x4xf32>, vector<8x8xf32> -> vector<8x8xf32>
    %cst_44 = arith.constant dense<0xFF800000> : vector<8xf32>
    %121 = vector.multi_reduction <maximumf>, %120, %cst_44 [1] : vector<8x8xf32> to vector<8xf32>
    %122 = vector.shape_cast %121 : vector<8xf32> to vector<8x1xf32>
    %123 = vector.broadcast %122 : vector<8x1xf32> to vector<8x8xf32>
    %124 = arith.subf %120, %123 : vector<8x8xf32>
    %125 = math.exp %124 : vector<8x8xf32>
    %cst_45 = arith.constant dense<0.000000e+00> : vector<8xf32>
    %126 = vector.multi_reduction <add>, %125, %cst_45 [1] : vector<8x8xf32> to vector<8xf32>
    %127 = vector.shape_cast %126 : vector<8xf32> to vector<8x1xf32>
    %128 = tpu.reciprocal %127 {approx = true} : vector<8x1xf32> -> vector<8x1xf32>
    %129 = vector.broadcast %128 : vector<8x1xf32> to vector<8x8xf32>
    %130 = arith.mulf %125, %129 : vector<8x8xf32>
    %cst_46 = arith.constant dense<0.000000e+00> : vector<8x4xf32>
    %131 = tpu.matmul %130, %119, %cst_46 {dimension_numbers = #tpu.dot_dimension_numbers<[1], [0], [0], [1], [0, 0, 1, 1], [], []>} : vector<8x8xf32>, vector<8x4xf32>, vector<8x4xf32> -> vector<8x4xf32>
    %132 = vector.extract_strided_slice %36 {offsets = [0, 0], sizes = [4, 16], strides = [1, 1]} : vector<16x16xf32> to vector<4x16xf32>
    %cst_47 = arith.constant dense<0.000000e+00> : vector<8x16xf32>
    %133 = tpu.matmul %131, %132, %cst_47 {dimension_numbers = #tpu.dot_dimension_numbers<[1], [0], [0], [1], [0, 0, 1, 1], [], []>} : vector<8x4xf32>, vector<4x16xf32>, vector<8x16xf32> -> vector<8x16xf32>
    %134 = arith.addf %116, %133 : vector<8x16xf32>
    %135 = vector.extract_strided_slice %113 {offsets = [0, 4], sizes = [8, 4], strides = [1, 1]} : vector<8x16xf32> to vector<8x4xf32>
    %136 = vector.extract_strided_slice %114 {offsets = [0, 4], sizes = [8, 4], strides = [1, 1]} : vector<8x16xf32> to vector<8x4xf32>
    %137 = vector.extract_strided_slice %115 {offsets = [0, 4], sizes = [8, 4], strides = [1, 1]} : vector<8x16xf32> to vector<8x4xf32>
    %cst_48 = arith.constant dense<0.000000e+00> : vector<8x8xf32>
    %138 = tpu.matmul %135, %136, %cst_48 {dimension_numbers = #tpu.dot_dimension_numbers<[1], [1], [0], [0], [0, 0, 1, 0], [], []>} : vector<8x4xf32>, vector<8x4xf32>, vector<8x8xf32> -> vector<8x8xf32>
    %cst_49 = arith.constant dense<0xFF800000> : vector<8xf32>
    %139 = vector.multi_reduction <maximumf>, %138, %cst_49 [1] : vector<8x8xf32> to vector<8xf32>
    %140 = vector.shape_cast %139 : vector<8xf32> to vector<8x1xf32>
    %141 = vector.broadcast %140 : vector<8x1xf32> to vector<8x8xf32>
    %142 = arith.subf %138, %141 : vector<8x8xf32>
    %143 = math.exp %142 : vector<8x8xf32>
    %cst_50 = arith.constant dense<0.000000e+00> : vector<8xf32>
    %144 = vector.multi_reduction <add>, %143, %cst_50 [1] : vector<8x8xf32> to vector<8xf32>
    %145 = vector.shape_cast %144 : vector<8xf32> to vector<8x1xf32>
    %146 = tpu.reciprocal %145 {approx = true} : vector<8x1xf32> -> vector<8x1xf32>
    %147 = vector.broadcast %146 : vector<8x1xf32> to vector<8x8xf32>
    %148 = arith.mulf %143, %147 : vector<8x8xf32>
    %cst_51 = arith.constant dense<0.000000e+00> : vector<8x4xf32>
    %149 = tpu.matmul %148, %137, %cst_51 {dimension_numbers = #tpu.dot_dimension_numbers<[1], [0], [0], [1], [0, 0, 1, 1], [], []>} : vector<8x8xf32>, vector<8x4xf32>, vector<8x4xf32> -> vector<8x4xf32>
    %150 = vector.extract_strided_slice %36 {offsets = [4, 0], sizes = [4, 16], strides = [1, 1]} : vector<16x16xf32> to vector<4x16xf32>
    %cst_52 = arith.constant dense<0.000000e+00> : vector<8x16xf32>
    %151 = tpu.matmul %149, %150, %cst_52 {dimension_numbers = #tpu.dot_dimension_numbers<[1], [0], [0], [1], [0, 0, 1, 1], [], []>} : vector<8x4xf32>, vector<4x16xf32>, vector<8x16xf32> -> vector<8x16xf32>
    %152 = arith.addf %134, %151 : vector<8x16xf32>
    %153 = vector.extract_strided_slice %113 {offsets = [0, 8], sizes = [8, 4], strides = [1, 1]} : vector<8x16xf32> to vector<8x4xf32>
    %154 = vector.extract_strided_slice %114 {offsets = [0, 8], sizes = [8, 4], strides = [1, 1]} : vector<8x16xf32> to vector<8x4xf32>
    %155 = vector.extract_strided_slice %115 {offsets = [0, 8], sizes = [8, 4], strides = [1, 1]} : vector<8x16xf32> to vector<8x4xf32>
    %cst_53 = arith.constant dense<0.000000e+00> : vector<8x8xf32>
    %156 = tpu.matmul %153, %154, %cst_53 {dimension_numbers = #tpu.dot_dimension_numbers<[1], [1], [0], [0], [0, 0, 1, 0], [], []>} : vector<8x4xf32>, vector<8x4xf32>, vector<8x8xf32> -> vector<8x8xf32>
    %cst_54 = arith.constant dense<0xFF800000> : vector<8xf32>
    %157 = vector.multi_reduction <maximumf>, %156, %cst_54 [1] : vector<8x8xf32> to vector<8xf32>
    %158 = vector.shape_cast %157 : vector<8xf32> to vector<8x1xf32>
    %159 = vector.broadcast %158 : vector<8x1xf32> to vector<8x8xf32>
    %160 = arith.subf %156, %159 : vector<8x8xf32>
    %161 = math.exp %160 : vector<8x8xf32>
    %cst_55 = arith.constant dense<0.000000e+00> : vector<8xf32>
    %162 = vector.multi_reduction <add>, %161, %cst_55 [1] : vector<8x8xf32> to vector<8xf32>
    %163 = vector.shape_cast %162 : vector<8xf32> to vector<8x1xf32>
    %164 = tpu.reciprocal %163 {approx = true} : vector<8x1xf32> -> vector<8x1xf32>
    %165 = vector.broadcast %164 : vector<8x1xf32> to vector<8x8xf32>
    %166 = arith.mulf %161, %165 : vector<8x8xf32>
    %cst_56 = arith.constant dense<0.000000e+00> : vector<8x4xf32>
    %167 = tpu.matmul %166, %155, %cst_56 {dimension_numbers = #tpu.dot_dimension_numbers<[1], [0], [0], [1], [0, 0, 1, 1], [], []>} : vector<8x8xf32>, vector<8x4xf32>, vector<8x4xf32> -> vector<8x4xf32>
    %168 = vector.extract_strided_slice %36 {offsets = [8, 0], sizes = [4, 16], strides = [1, 1]} : vector<16x16xf32> to vector<4x16xf32>
    %cst_57 = arith.constant dense<0.000000e+00> : vector<8x16xf32>
    %169 = tpu.matmul %167, %168, %cst_57 {dimension_numbers = #tpu.dot_dimension_numbers<[1], [0], [0], [1], [0, 0, 1, 1], [], []>} : vector<8x4xf32>, vector<4x16xf32>, vector<8x16xf32> -> vector<8x16xf32>
    %170 = arith.addf %152, %169 : vector<8x16xf32>
    %171 = vector.extract_strided_slice %113 {offsets = [0, 12], sizes = [8, 4], strides = [1, 1]} : vector<8x16xf32> to vector<8x4xf32>
    %172 = vector.extract_strided_slice %114 {offsets = [0, 12], sizes = [8, 4], strides = [1, 1]} : vector<8x16xf32> to vector<8x4xf32>
    %173 = vector.extract_strided_slice %115 {offsets = [0, 12], sizes = [8, 4], strides = [1, 1]} : vector<8x16xf32> to vector<8x4xf32>
    %cst_58 = arith.constant dense<0.000000e+00> : vector<8x8xf32>
    %174 = tpu.matmul %171, %172, %cst_58 {dimension_numbers = #tpu.dot_dimension_numbers<[1], [1], [0], [0], [0, 0, 1, 0], [], []>} : vector<8x4xf32>, vector<8x4xf32>, vector<8x8xf32> -> vector<8x8xf32>
    %cst_59 = arith.constant dense<0xFF800000> : vector<8xf32>
    %175 = vector.multi_reduction <maximumf>, %174, %cst_59 [1] : vector<8x8xf32> to vector<8xf32>
    %176 = vector.shape_cast %175 : vector<8xf32> to vector<8x1xf32>
    %177 = vector.broadcast %176 : vector<8x1xf32> to vector<8x8xf32>
    %178 = arith.subf %174, %177 : vector<8x8xf32>
    %179 = math.exp %178 : vector<8x8xf32>
    %cst_60 = arith.constant dense<0.000000e+00> : vector<8xf32>
    %180 = vector.multi_reduction <add>, %179, %cst_60 [1] : vector<8x8xf32> to vector<8xf32>
    %181 = vector.shape_cast %180 : vector<8xf32> to vector<8x1xf32>
    %182 = tpu.reciprocal %181 {approx = true} : vector<8x1xf32> -> vector<8x1xf32>
    %183 = vector.broadcast %182 : vector<8x1xf32> to vector<8x8xf32>
    %184 = arith.mulf %179, %183 : vector<8x8xf32>
    %cst_61 = arith.constant dense<0.000000e+00> : vector<8x4xf32>
    %185 = tpu.matmul %184, %173, %cst_61 {dimension_numbers = #tpu.dot_dimension_numbers<[1], [0], [0], [1], [0, 0, 1, 1], [], []>} : vector<8x8xf32>, vector<8x4xf32>, vector<8x4xf32> -> vector<8x4xf32>
    %186 = vector.extract_strided_slice %36 {offsets = [12, 0], sizes = [4, 16], strides = [1, 1]} : vector<16x16xf32> to vector<4x16xf32>
    %cst_62 = arith.constant dense<0.000000e+00> : vector<8x16xf32>
    %187 = tpu.matmul %185, %186, %cst_62 {dimension_numbers = #tpu.dot_dimension_numbers<[1], [0], [0], [1], [0, 0, 1, 1], [], []>} : vector<8x4xf32>, vector<4x16xf32>, vector<8x16xf32> -> vector<8x16xf32>
    %188 = arith.addf %170, %187 : vector<8x16xf32>
    %189 = tpu.concatenate %112, %188 in 0 : vector<8x16xf32>, vector<8x16xf32> -> vector<16x16xf32>
    %c0_63 = arith.constant 0 : index
    %c0_64 = arith.constant 0 : index
    %c0_65 = arith.constant 0 : index
    %190 = vector.load %arg6[%c0_63, %c0_64, %c0_65] : memref<2x1x16xf32, #tpu.memory_space<vmem>>, vector<1x1x16xf32>
    %191 = vector.shape_cast %190 : vector<1x1x16xf32> to vector<1x16xf32>
    %192 = vector.broadcast %191 : vector<1x16xf32> to vector<16x16xf32>
    %193 = arith.addf %189, %192 : vector<16x16xf32>
    %194 = arith.addf %0, %193 : vector<16x16xf32>
    %c0_66 = arith.constant 0 : index
    %c0_67 = arith.constant 0 : index
    %c0_68 = arith.constant 0 : index
    %195 = vector.load %arg7[%c0_66, %c0_67, %c0_68] : memref<2x1x16xf32, #tpu.memory_space<vmem>>, vector<1x1x16xf32>
    %196 = vector.shape_cast %195 : vector<1x1x16xf32> to vector<1x16xf32>
    %c0_69 = arith.constant 0 : index
    %c0_70 = arith.constant 0 : index
    %c0_71 = arith.constant 0 : index
    %197 = vector.load %arg8[%c0_69, %c0_70, %c0_71] : memref<2x1x16xf32, #tpu.memory_space<vmem>>, vector<1x1x16xf32>
    %198 = vector.shape_cast %197 : vector<1x1x16xf32> to vector<1x16xf32>
    %cst_72 = arith.constant dense<0.000000e+00> : vector<16xf32>
    %199 = vector.multi_reduction <add>, %194, %cst_72 [1] : vector<16x16xf32> to vector<16xf32>
    %200 = vector.shape_cast %199 : vector<16xf32> to vector<16x1xf32>
    %cst_73 = arith.constant 1.600000e+01 : f32
    %201 = vector.broadcast %cst_73 : f32 to vector<16x1xf32>
    %202 = arith.divf %200, %201 : vector<16x1xf32>
    %203 = vector.broadcast %202 : vector<16x1xf32> to vector<16x16xf32>
    %204 = arith.subf %194, %203 : vector<16x16xf32>
    %205 = arith.mulf %204, %204 : vector<16x16xf32>
    %cst_74 = arith.constant dense<0.000000e+00> : vector<16xf32>
    %206 = vector.multi_reduction <add>, %205, %cst_74 [1] : vector<16x16xf32> to vector<16xf32>
    %207 = vector.shape_cast %206 : vector<16xf32> to vector<16x1xf32>
    %cst_75 = arith.constant 1.600000e+01 : f32
    %208 = vector.broadcast %cst_75 : f32 to vector<16x1xf32>
    %209 = arith.divf %207, %208 : vector<16x1xf32>
    %cst_76 = arith.constant 9.99999974E-6 : f32
    %210 = vector.broadcast %cst_76 : f32 to vector<16x1xf32>
    %211 = arith.addf %209, %210 : vector<16x1xf32>
    %212 = math.rsqrt %211 : vector<16x1xf32>
    %213 = vector.broadcast %212 : vector<16x1xf32> to vector<16x16xf32>
    %214 = arith.mulf %204, %213 : vector<16x16xf32>
    %215 = vector.broadcast %196 : vector<1x16xf32> to vector<16x16xf32>
    %216 = arith.mulf %214, %215 : vector<16x16xf32>
    %217 = vector.broadcast %198 : vector<1x16xf32> to vector<16x16xf32>
    %218 = arith.addf %216, %217 : vector<16x16xf32>
    %c0_77 = arith.constant 0 : index
    %c0_78 = arith.constant 0 : index
    %c0_79 = arith.constant 0 : index
    %219 = vector.load %arg9[%c0_77, %c0_78, %c0_79] : memref<2x16x32xf32, #tpu.memory_space<vmem>>, vector<1x16x32xf32>
    %220 = vector.shape_cast %219 : vector<1x16x32xf32> to vector<16x32xf32>
    %cst_80 = arith.constant dense<0.000000e+00> : vector<16x32xf32>
    %221 = tpu.matmul %218, %220, %cst_80 {dimension_numbers = #tpu.dot_dimension_numbers<[1], [0], [0], [1], [0, 0, 1, 1], [], []>} : vector<16x16xf32>, vector<16x32xf32>, vector<16x32xf32> -> vector<16x32xf32>
    %c0_81 = arith.constant 0 : index
    %c0_82 = arith.constant 0 : index
    %c0_83 = arith.constant 0 : index
    %222 = vector.load %arg10[%c0_81, %c0_82, %c0_83] : memref<2x1x32xf32, #tpu.memory_space<vmem>>, vector<1x1x32xf32>
    %223 = vector.shape_cast %222 : vector<1x1x32xf32> to vector<1x32xf32>
    %224 = vector.broadcast %223 : vector<1x32xf32> to vector<16x32xf32>
    %225 = arith.addf %221, %224 : vector<16x32xf32>
    %cst_84 = arith.constant 0.000000e+00 : f32
    %226 = vector.broadcast %cst_84 : f32 to vector<16x32xf32>
    %227 = arith.maximumf %225, %226 : vector<16x32xf32>
    %c0_85 = arith.constant 0 : index
    %c0_86 = arith.constant 0 : index
    %c0_87 = arith.constant 0 : index
    %228 = vector.load %arg11[%c0_85, %c0_86, %c0_87] : memref<2x32x16xf32, #tpu.memory_space<vmem>>, vector<1x32x16xf32>
    %229 = vector.shape_cast %228 : vector<1x32x16xf32> to vector<32x16xf32>
    %cst_88 = arith.constant dense<0.000000e+00> : vector<16x16xf32>
    %230 = tpu.matmul %227, %229, %cst_88 {dimension_numbers = #tpu.dot_dimension_numbers<[1], [0], [0], [1], [0, 0, 1, 1], [], []>} : vector<16x32xf32>, vector<32x16xf32>, vector<16x16xf32> -> vector<16x16xf32>
    %231 = arith.addf %194, %230 : vector<16x16xf32>
    %c0_89 = arith.constant 0 : index
    %c0_90 = arith.constant 0 : index
    %c0_91 = arith.constant 0 : index
    %232 = vector.load %arg12[%c0_89, %c0_90, %c0_91] : memref<2x1x16xf32, #tpu.memory_space<vmem>>, vector<1x1x16xf32>
    %233 = vector.shape_cast %232 : vector<1x1x16xf32> to vector<1x16xf32>
    %234 = vector.broadcast %233 : vector<1x16xf32> to vector<16x16xf32>
    %235 = arith.addf %231, %234 : vector<16x16xf32>
    %c1 = arith.constant 1 : index
    %c0_92 = arith.constant 0 : index
    %c0_93 = arith.constant 0 : index
    %236 = vector.load %arg1[%c1, %c0_92, %c0_93] : memref<2x1x16xf32, #tpu.memory_space<vmem>>, vector<1x1x16xf32>
    %237 = vector.shape_cast %236 : vector<1x1x16xf32> to vector<1x16xf32>
    %c1_94 = arith.constant 1 : index
    %c0_95 = arith.constant 0 : index
    %c0_96 = arith.constant 0 : index
    %238 = vector.load %arg2[%c1_94, %c0_95, %c0_96] : memref<2x1x16xf32, #tpu.memory_space<vmem>>, vector<1x1x16xf32>
    %239 = vector.shape_cast %238 : vector<1x1x16xf32> to vector<1x16xf32>
    %cst_97 = arith.constant dense<0.000000e+00> : vector<16xf32>
    %240 = vector.multi_reduction <add>, %235, %cst_97 [1] : vector<16x16xf32> to vector<16xf32>
    %241 = vector.shape_cast %240 : vector<16xf32> to vector<16x1xf32>
    %cst_98 = arith.constant 1.600000e+01 : f32
    %242 = vector.broadcast %cst_98 : f32 to vector<16x1xf32>
    %243 = arith.divf %241, %242 : vector<16x1xf32>
    %244 = vector.broadcast %243 : vector<16x1xf32> to vector<16x16xf32>
    %245 = arith.subf %235, %244 : vector<16x16xf32>
    %246 = arith.mulf %245, %245 : vector<16x16xf32>
    %cst_99 = arith.constant dense<0.000000e+00> : vector<16xf32>
    %247 = vector.multi_reduction <add>, %246, %cst_99 [1] : vector<16x16xf32> to vector<16xf32>
    %248 = vector.shape_cast %247 : vector<16xf32> to vector<16x1xf32>
    %cst_100 = arith.constant 1.600000e+01 : f32
    %249 = vector.broadcast %cst_100 : f32 to vector<16x1xf32>
    %250 = arith.divf %248, %249 : vector<16x1xf32>
    %cst_101 = arith.constant 9.99999974E-6 : f32
    %251 = vector.broadcast %cst_101 : f32 to vector<16x1xf32>
    %252 = arith.addf %250, %251 : vector<16x1xf32>
    %253 = math.rsqrt %252 : vector<16x1xf32>
    %254 = vector.broadcast %253 : vector<16x1xf32> to vector<16x16xf32>
    %255 = arith.mulf %245, %254 : vector<16x16xf32>
    %256 = vector.broadcast %237 : vector<1x16xf32> to vector<16x16xf32>
    %257 = arith.mulf %255, %256 : vector<16x16xf32>
    %258 = vector.broadcast %239 : vector<1x16xf32> to vector<16x16xf32>
    %259 = arith.addf %257, %258 : vector<16x16xf32>
    %c1_102 = arith.constant 1 : index
    %c0_103 = arith.constant 0 : index
    %c0_104 = arith.constant 0 : index
    %260 = vector.load %arg3[%c1_102, %c0_103, %c0_104] : memref<2x16x48xf32, #tpu.memory_space<vmem>>, vector<1x16x48xf32>
    %261 = vector.shape_cast %260 : vector<1x16x48xf32> to vector<16x48xf32>
    %cst_105 = arith.constant dense<0.000000e+00> : vector<16x48xf32>
    %262 = tpu.matmul %259, %261, %cst_105 {dimension_numbers = #tpu.dot_dimension_numbers<[1], [0], [0], [1], [0, 0, 1, 1], [], []>} : vector<16x16xf32>, vector<16x48xf32>, vector<16x48xf32> -> vector<16x48xf32>
    %c1_106 = arith.constant 1 : index
    %c0_107 = arith.constant 0 : index
    %c0_108 = arith.constant 0 : index
    %263 = vector.load %arg4[%c1_106, %c0_107, %c0_108] : memref<2x1x48xf32, #tpu.memory_space<vmem>>, vector<1x1x48xf32>
    %264 = vector.shape_cast %263 : vector<1x1x48xf32> to vector<1x48xf32>
    %265 = vector.broadcast %264 : vector<1x48xf32> to vector<16x48xf32>
    %266 = arith.addf %262, %265 : vector<16x48xf32>
    %267 = vector.extract_strided_slice %266 {offsets = [0, 0], sizes = [16, 16], strides = [1, 1]} : vector<16x48xf32> to vector<16x16xf32>
    %268 = vector.extract_strided_slice %266 {offsets = [0, 16], sizes = [16, 16], strides = [1, 1]} : vector<16x48xf32> to vector<16x16xf32>
    %269 = vector.extract_strided_slice %266 {offsets = [0, 32], sizes = [16, 16], strides = [1, 1]} : vector<16x48xf32> to vector<16x16xf32>
    %c1_109 = arith.constant 1 : index
    %c0_110 = arith.constant 0 : index
    %c0_111 = arith.constant 0 : index
    %270 = vector.load %arg5[%c1_109, %c0_110, %c0_111] : memref<2x16x16xf32, #tpu.memory_space<vmem>>, vector<1x16x16xf32>
    %271 = vector.shape_cast %270 : vector<1x16x16xf32> to vector<16x16xf32>
    %272 = vector.extract_strided_slice %267 {offsets = [0, 0], sizes = [8, 16], strides = [1, 1]} : vector<16x16xf32> to vector<8x16xf32>
    %273 = vector.extract_strided_slice %268 {offsets = [0, 0], sizes = [8, 16], strides = [1, 1]} : vector<16x16xf32> to vector<8x16xf32>
    %274 = vector.extract_strided_slice %269 {offsets = [0, 0], sizes = [8, 16], strides = [1, 1]} : vector<16x16xf32> to vector<8x16xf32>
    %cst_112 = arith.constant 0.000000e+00 : f32
    %275 = vector.broadcast %cst_112 : f32 to vector<8x16xf32>
    %276 = vector.extract_strided_slice %272 {offsets = [0, 0], sizes = [8, 4], strides = [1, 1]} : vector<8x16xf32> to vector<8x4xf32>
    %277 = vector.extract_strided_slice %273 {offsets = [0, 0], sizes = [8, 4], strides = [1, 1]} : vector<8x16xf32> to vector<8x4xf32>
    %278 = vector.extract_strided_slice %274 {offsets = [0, 0], sizes = [8, 4], strides = [1, 1]} : vector<8x16xf32> to vector<8x4xf32>
    %cst_113 = arith.constant dense<0.000000e+00> : vector<8x8xf32>
    %279 = tpu.matmul %276, %277, %cst_113 {dimension_numbers = #tpu.dot_dimension_numbers<[1], [1], [0], [0], [0, 0, 1, 0], [], []>} : vector<8x4xf32>, vector<8x4xf32>, vector<8x8xf32> -> vector<8x8xf32>
    %cst_114 = arith.constant dense<0xFF800000> : vector<8xf32>
    %280 = vector.multi_reduction <maximumf>, %279, %cst_114 [1] : vector<8x8xf32> to vector<8xf32>
    %281 = vector.shape_cast %280 : vector<8xf32> to vector<8x1xf32>
    %282 = vector.broadcast %281 : vector<8x1xf32> to vector<8x8xf32>
    %283 = arith.subf %279, %282 : vector<8x8xf32>
    %284 = math.exp %283 : vector<8x8xf32>
    %cst_115 = arith.constant dense<0.000000e+00> : vector<8xf32>
    %285 = vector.multi_reduction <add>, %284, %cst_115 [1] : vector<8x8xf32> to vector<8xf32>
    %286 = vector.shape_cast %285 : vector<8xf32> to vector<8x1xf32>
    %287 = tpu.reciprocal %286 {approx = true} : vector<8x1xf32> -> vector<8x1xf32>
    %288 = vector.broadcast %287 : vector<8x1xf32> to vector<8x8xf32>
    %289 = arith.mulf %284, %288 : vector<8x8xf32>
    %cst_116 = arith.constant dense<0.000000e+00> : vector<8x4xf32>
    %290 = tpu.matmul %289, %278, %cst_116 {dimension_numbers = #tpu.dot_dimension_numbers<[1], [0], [0], [1], [0, 0, 1, 1], [], []>} : vector<8x8xf32>, vector<8x4xf32>, vector<8x4xf32> -> vector<8x4xf32>
    %291 = vector.extract_strided_slice %271 {offsets = [0, 0], sizes = [4, 16], strides = [1, 1]} : vector<16x16xf32> to vector<4x16xf32>
    %cst_117 = arith.constant dense<0.000000e+00> : vector<8x16xf32>
    %292 = tpu.matmul %290, %291, %cst_117 {dimension_numbers = #tpu.dot_dimension_numbers<[1], [0], [0], [1], [0, 0, 1, 1], [], []>} : vector<8x4xf32>, vector<4x16xf32>, vector<8x16xf32> -> vector<8x16xf32>
    %293 = arith.addf %275, %292 : vector<8x16xf32>
    %294 = vector.extract_strided_slice %272 {offsets = [0, 4], sizes = [8, 4], strides = [1, 1]} : vector<8x16xf32> to vector<8x4xf32>
    %295 = vector.extract_strided_slice %273 {offsets = [0, 4], sizes = [8, 4], strides = [1, 1]} : vector<8x16xf32> to vector<8x4xf32>
    %296 = vector.extract_strided_slice %274 {offsets = [0, 4], sizes = [8, 4], strides = [1, 1]} : vector<8x16xf32> to vector<8x4xf32>
    %cst_118 = arith.constant dense<0.000000e+00> : vector<8x8xf32>
    %297 = tpu.matmul %294, %295, %cst_118 {dimension_numbers = #tpu.dot_dimension_numbers<[1], [1], [0], [0], [0, 0, 1, 0], [], []>} : vector<8x4xf32>, vector<8x4xf32>, vector<8x8xf32> -> vector<8x8xf32>
    %cst_119 = arith.constant dense<0xFF800000> : vector<8xf32>
    %298 = vector.multi_reduction <maximumf>, %297, %cst_119 [1] : vector<8x8xf32> to vector<8xf32>
    %299 = vector.shape_cast %298 : vector<8xf32> to vector<8x1xf32>
    %300 = vector.broadcast %299 : vector<8x1xf32> to vector<8x8xf32>
    %301 = arith.subf %297, %300 : vector<8x8xf32>
    %302 = math.exp %301 : vector<8x8xf32>
    %cst_120 = arith.constant dense<0.000000e+00> : vector<8xf32>
    %303 = vector.multi_reduction <add>, %302, %cst_120 [1] : vector<8x8xf32> to vector<8xf32>
    %304 = vector.shape_cast %303 : vector<8xf32> to vector<8x1xf32>
    %305 = tpu.reciprocal %304 {approx = true} : vector<8x1xf32> -> vector<8x1xf32>
    %306 = vector.broadcast %305 : vector<8x1xf32> to vector<8x8xf32>
    %307 = arith.mulf %302, %306 : vector<8x8xf32>
    %cst_121 = arith.constant dense<0.000000e+00> : vector<8x4xf32>
    %308 = tpu.matmul %307, %296, %cst_121 {dimension_numbers = #tpu.dot_dimension_numbers<[1], [0], [0], [1], [0, 0, 1, 1], [], []>} : vector<8x8xf32>, vector<8x4xf32>, vector<8x4xf32> -> vector<8x4xf32>
    %309 = vector.extract_strided_slice %271 {offsets = [4, 0], sizes = [4, 16], strides = [1, 1]} : vector<16x16xf32> to vector<4x16xf32>
    %cst_122 = arith.constant dense<0.000000e+00> : vector<8x16xf32>
    %310 = tpu.matmul %308, %309, %cst_122 {dimension_numbers = #tpu.dot_dimension_numbers<[1], [0], [0], [1], [0, 0, 1, 1], [], []>} : vector<8x4xf32>, vector<4x16xf32>, vector<8x16xf32> -> vector<8x16xf32>
    %311 = arith.addf %293, %310 : vector<8x16xf32>
    %312 = vector.extract_strided_slice %272 {offsets = [0, 8], sizes = [8, 4], strides = [1, 1]} : vector<8x16xf32> to vector<8x4xf32>
    %313 = vector.extract_strided_slice %273 {offsets = [0, 8], sizes = [8, 4], strides = [1, 1]} : vector<8x16xf32> to vector<8x4xf32>
    %314 = vector.extract_strided_slice %274 {offsets = [0, 8], sizes = [8, 4], strides = [1, 1]} : vector<8x16xf32> to vector<8x4xf32>
    %cst_123 = arith.constant dense<0.000000e+00> : vector<8x8xf32>
    %315 = tpu.matmul %312, %313, %cst_123 {dimension_numbers = #tpu.dot_dimension_numbers<[1], [1], [0], [0], [0, 0, 1, 0], [], []>} : vector<8x4xf32>, vector<8x4xf32>, vector<8x8xf32> -> vector<8x8xf32>
    %cst_124 = arith.constant dense<0xFF800000> : vector<8xf32>
    %316 = vector.multi_reduction <maximumf>, %315, %cst_124 [1] : vector<8x8xf32> to vector<8xf32>
    %317 = vector.shape_cast %316 : vector<8xf32> to vector<8x1xf32>
    %318 = vector.broadcast %317 : vector<8x1xf32> to vector<8x8xf32>
    %319 = arith.subf %315, %318 : vector<8x8xf32>
    %320 = math.exp %319 : vector<8x8xf32>
    %cst_125 = arith.constant dense<0.000000e+00> : vector<8xf32>
    %321 = vector.multi_reduction <add>, %320, %cst_125 [1] : vector<8x8xf32> to vector<8xf32>
    %322 = vector.shape_cast %321 : vector<8xf32> to vector<8x1xf32>
    %323 = tpu.reciprocal %322 {approx = true} : vector<8x1xf32> -> vector<8x1xf32>
    %324 = vector.broadcast %323 : vector<8x1xf32> to vector<8x8xf32>
    %325 = arith.mulf %320, %324 : vector<8x8xf32>
    %cst_126 = arith.constant dense<0.000000e+00> : vector<8x4xf32>
    %326 = tpu.matmul %325, %314, %cst_126 {dimension_numbers = #tpu.dot_dimension_numbers<[1], [0], [0], [1], [0, 0, 1, 1], [], []>} : vector<8x8xf32>, vector<8x4xf32>, vector<8x4xf32> -> vector<8x4xf32>
    %327 = vector.extract_strided_slice %271 {offsets = [8, 0], sizes = [4, 16], strides = [1, 1]} : vector<16x16xf32> to vector<4x16xf32>
    %cst_127 = arith.constant dense<0.000000e+00> : vector<8x16xf32>
    %328 = tpu.matmul %326, %327, %cst_127 {dimension_numbers = #tpu.dot_dimension_numbers<[1], [0], [0], [1], [0, 0, 1, 1], [], []>} : vector<8x4xf32>, vector<4x16xf32>, vector<8x16xf32> -> vector<8x16xf32>
    %329 = arith.addf %311, %328 : vector<8x16xf32>
    %330 = vector.extract_strided_slice %272 {offsets = [0, 12], sizes = [8, 4], strides = [1, 1]} : vector<8x16xf32> to vector<8x4xf32>
    %331 = vector.extract_strided_slice %273 {offsets = [0, 12], sizes = [8, 4], strides = [1, 1]} : vector<8x16xf32> to vector<8x4xf32>
    %332 = vector.extract_strided_slice %274 {offsets = [0, 12], sizes = [8, 4], strides = [1, 1]} : vector<8x16xf32> to vector<8x4xf32>
    %cst_128 = arith.constant dense<0.000000e+00> : vector<8x8xf32>
    %333 = tpu.matmul %330, %331, %cst_128 {dimension_numbers = #tpu.dot_dimension_numbers<[1], [1], [0], [0], [0, 0, 1, 0], [], []>} : vector<8x4xf32>, vector<8x4xf32>, vector<8x8xf32> -> vector<8x8xf32>
    %cst_129 = arith.constant dense<0xFF800000> : vector<8xf32>
    %334 = vector.multi_reduction <maximumf>, %333, %cst_129 [1] : vector<8x8xf32> to vector<8xf32>
    %335 = vector.shape_cast %334 : vector<8xf32> to vector<8x1xf32>
    %336 = vector.broadcast %335 : vector<8x1xf32> to vector<8x8xf32>
    %337 = arith.subf %333, %336 : vector<8x8xf32>
    %338 = math.exp %337 : vector<8x8xf32>
    %cst_130 = arith.constant dense<0.000000e+00> : vector<8xf32>
    %339 = vector.multi_reduction <add>, %338, %cst_130 [1] : vector<8x8xf32> to vector<8xf32>
    %340 = vector.shape_cast %339 : vector<8xf32> to vector<8x1xf32>
    %341 = tpu.reciprocal %340 {approx = true} : vector<8x1xf32> -> vector<8x1xf32>
    %342 = vector.broadcast %341 : vector<8x1xf32> to vector<8x8xf32>
    %343 = arith.mulf %338, %342 : vector<8x8xf32>
    %cst_131 = arith.constant dense<0.000000e+00> : vector<8x4xf32>
    %344 = tpu.matmul %343, %332, %cst_131 {dimension_numbers = #tpu.dot_dimension_numbers<[1], [0], [0], [1], [0, 0, 1, 1], [], []>} : vector<8x8xf32>, vector<8x4xf32>, vector<8x4xf32> -> vector<8x4xf32>
    %345 = vector.extract_strided_slice %271 {offsets = [12, 0], sizes = [4, 16], strides = [1, 1]} : vector<16x16xf32> to vector<4x16xf32>
    %cst_132 = arith.constant dense<0.000000e+00> : vector<8x16xf32>
    %346 = tpu.matmul %344, %345, %cst_132 {dimension_numbers = #tpu.dot_dimension_numbers<[1], [0], [0], [1], [0, 0, 1, 1], [], []>} : vector<8x4xf32>, vector<4x16xf32>, vector<8x16xf32> -> vector<8x16xf32>
    %347 = arith.addf %329, %346 : vector<8x16xf32>
    %348 = vector.extract_strided_slice %267 {offsets = [8, 0], sizes = [8, 16], strides = [1, 1]} : vector<16x16xf32> to vector<8x16xf32>
    %349 = vector.extract_strided_slice %268 {offsets = [8, 0], sizes = [8, 16], strides = [1, 1]} : vector<16x16xf32> to vector<8x16xf32>
    %350 = vector.extract_strided_slice %269 {offsets = [8, 0], sizes = [8, 16], strides = [1, 1]} : vector<16x16xf32> to vector<8x16xf32>
    %cst_133 = arith.constant 0.000000e+00 : f32
    %351 = vector.broadcast %cst_133 : f32 to vector<8x16xf32>
    %352 = vector.extract_strided_slice %348 {offsets = [0, 0], sizes = [8, 4], strides = [1, 1]} : vector<8x16xf32> to vector<8x4xf32>
    %353 = vector.extract_strided_slice %349 {offsets = [0, 0], sizes = [8, 4], strides = [1, 1]} : vector<8x16xf32> to vector<8x4xf32>
    %354 = vector.extract_strided_slice %350 {offsets = [0, 0], sizes = [8, 4], strides = [1, 1]} : vector<8x16xf32> to vector<8x4xf32>
    %cst_134 = arith.constant dense<0.000000e+00> : vector<8x8xf32>
    %355 = tpu.matmul %352, %353, %cst_134 {dimension_numbers = #tpu.dot_dimension_numbers<[1], [1], [0], [0], [0, 0, 1, 0], [], []>} : vector<8x4xf32>, vector<8x4xf32>, vector<8x8xf32> -> vector<8x8xf32>
    %cst_135 = arith.constant dense<0xFF800000> : vector<8xf32>
    %356 = vector.multi_reduction <maximumf>, %355, %cst_135 [1] : vector<8x8xf32> to vector<8xf32>
    %357 = vector.shape_cast %356 : vector<8xf32> to vector<8x1xf32>
    %358 = vector.broadcast %357 : vector<8x1xf32> to vector<8x8xf32>
    %359 = arith.subf %355, %358 : vector<8x8xf32>
    %360 = math.exp %359 : vector<8x8xf32>
    %cst_136 = arith.constant dense<0.000000e+00> : vector<8xf32>
    %361 = vector.multi_reduction <add>, %360, %cst_136 [1] : vector<8x8xf32> to vector<8xf32>
    %362 = vector.shape_cast %361 : vector<8xf32> to vector<8x1xf32>
    %363 = tpu.reciprocal %362 {approx = true} : vector<8x1xf32> -> vector<8x1xf32>
    %364 = vector.broadcast %363 : vector<8x1xf32> to vector<8x8xf32>
    %365 = arith.mulf %360, %364 : vector<8x8xf32>
    %cst_137 = arith.constant dense<0.000000e+00> : vector<8x4xf32>
    %366 = tpu.matmul %365, %354, %cst_137 {dimension_numbers = #tpu.dot_dimension_numbers<[1], [0], [0], [1], [0, 0, 1, 1], [], []>} : vector<8x8xf32>, vector<8x4xf32>, vector<8x4xf32> -> vector<8x4xf32>
    %367 = vector.extract_strided_slice %271 {offsets = [0, 0], sizes = [4, 16], strides = [1, 1]} : vector<16x16xf32> to vector<4x16xf32>
    %cst_138 = arith.constant dense<0.000000e+00> : vector<8x16xf32>
    %368 = tpu.matmul %366, %367, %cst_138 {dimension_numbers = #tpu.dot_dimension_numbers<[1], [0], [0], [1], [0, 0, 1, 1], [], []>} : vector<8x4xf32>, vector<4x16xf32>, vector<8x16xf32> -> vector<8x16xf32>
    %369 = arith.addf %351, %368 : vector<8x16xf32>
    %370 = vector.extract_strided_slice %348 {offsets = [0, 4], sizes = [8, 4], strides = [1, 1]} : vector<8x16xf32> to vector<8x4xf32>
    %371 = vector.extract_strided_slice %349 {offsets = [0, 4], sizes = [8, 4], strides = [1, 1]} : vector<8x16xf32> to vector<8x4xf32>
    %372 = vector.extract_strided_slice %350 {offsets = [0, 4], sizes = [8, 4], strides = [1, 1]} : vector<8x16xf32> to vector<8x4xf32>
    %cst_139 = arith.constant dense<0.000000e+00> : vector<8x8xf32>
    %373 = tpu.matmul %370, %371, %cst_139 {dimension_numbers = #tpu.dot_dimension_numbers<[1], [1], [0], [0], [0, 0, 1, 0], [], []>} : vector<8x4xf32>, vector<8x4xf32>, vector<8x8xf32> -> vector<8x8xf32>
    %cst_140 = arith.constant dense<0xFF800000> : vector<8xf32>
    %374 = vector.multi_reduction <maximumf>, %373, %cst_140 [1] : vector<8x8xf32> to vector<8xf32>
    %375 = vector.shape_cast %374 : vector<8xf32> to vector<8x1xf32>
    %376 = vector.broadcast %375 : vector<8x1xf32> to vector<8x8xf32>
    %377 = arith.subf %373, %376 : vector<8x8xf32>
    %378 = math.exp %377 : vector<8x8xf32>
    %cst_141 = arith.constant dense<0.000000e+00> : vector<8xf32>
    %379 = vector.multi_reduction <add>, %378, %cst_141 [1] : vector<8x8xf32> to vector<8xf32>
    %380 = vector.shape_cast %379 : vector<8xf32> to vector<8x1xf32>
    %381 = tpu.reciprocal %380 {approx = true} : vector<8x1xf32> -> vector<8x1xf32>
    %382 = vector.broadcast %381 : vector<8x1xf32> to vector<8x8xf32>
    %383 = arith.mulf %378, %382 : vector<8x8xf32>
    %cst_142 = arith.constant dense<0.000000e+00> : vector<8x4xf32>
    %384 = tpu.matmul %383, %372, %cst_142 {dimension_numbers = #tpu.dot_dimension_numbers<[1], [0], [0], [1], [0, 0, 1, 1], [], []>} : vector<8x8xf32>, vector<8x4xf32>, vector<8x4xf32> -> vector<8x4xf32>
    %385 = vector.extract_strided_slice %271 {offsets = [4, 0], sizes = [4, 16], strides = [1, 1]} : vector<16x16xf32> to vector<4x16xf32>
    %cst_143 = arith.constant dense<0.000000e+00> : vector<8x16xf32>
    %386 = tpu.matmul %384, %385, %cst_143 {dimension_numbers = #tpu.dot_dimension_numbers<[1], [0], [0], [1], [0, 0, 1, 1], [], []>} : vector<8x4xf32>, vector<4x16xf32>, vector<8x16xf32> -> vector<8x16xf32>
    %387 = arith.addf %369, %386 : vector<8x16xf32>
    %388 = vector.extract_strided_slice %348 {offsets = [0, 8], sizes = [8, 4], strides = [1, 1]} : vector<8x16xf32> to vector<8x4xf32>
    %389 = vector.extract_strided_slice %349 {offsets = [0, 8], sizes = [8, 4], strides = [1, 1]} : vector<8x16xf32> to vector<8x4xf32>
    %390 = vector.extract_strided_slice %350 {offsets = [0, 8], sizes = [8, 4], strides = [1, 1]} : vector<8x16xf32> to vector<8x4xf32>
    %cst_144 = arith.constant dense<0.000000e+00> : vector<8x8xf32>
    %391 = tpu.matmul %388, %389, %cst_144 {dimension_numbers = #tpu.dot_dimension_numbers<[1], [1], [0], [0], [0, 0, 1, 0], [], []>} : vector<8x4xf32>, vector<8x4xf32>, vector<8x8xf32> -> vector<8x8xf32>
    %cst_145 = arith.constant dense<0xFF800000> : vector<8xf32>
    %392 = vector.multi_reduction <maximumf>, %391, %cst_145 [1] : vector<8x8xf32> to vector<8xf32>
    %393 = vector.shape_cast %392 : vector<8xf32> to vector<8x1xf32>
    %394 = vector.broadcast %393 : vector<8x1xf32> to vector<8x8xf32>
    %395 = arith.subf %391, %394 : vector<8x8xf32>
    %396 = math.exp %395 : vector<8x8xf32>
    %cst_146 = arith.constant dense<0.000000e+00> : vector<8xf32>
    %397 = vector.multi_reduction <add>, %396, %cst_146 [1] : vector<8x8xf32> to vector<8xf32>
    %398 = vector.shape_cast %397 : vector<8xf32> to vector<8x1xf32>
    %399 = tpu.reciprocal %398 {approx = true} : vector<8x1xf32> -> vector<8x1xf32>
    %400 = vector.broadcast %399 : vector<8x1xf32> to vector<8x8xf32>
    %401 = arith.mulf %396, %400 : vector<8x8xf32>
    %cst_147 = arith.constant dense<0.000000e+00> : vector<8x4xf32>
    %402 = tpu.matmul %401, %390, %cst_147 {dimension_numbers = #tpu.dot_dimension_numbers<[1], [0], [0], [1], [0, 0, 1, 1], [], []>} : vector<8x8xf32>, vector<8x4xf32>, vector<8x4xf32> -> vector<8x4xf32>
    %403 = vector.extract_strided_slice %271 {offsets = [8, 0], sizes = [4, 16], strides = [1, 1]} : vector<16x16xf32> to vector<4x16xf32>
    %cst_148 = arith.constant dense<0.000000e+00> : vector<8x16xf32>
    %404 = tpu.matmul %402, %403, %cst_148 {dimension_numbers = #tpu.dot_dimension_numbers<[1], [0], [0], [1], [0, 0, 1, 1], [], []>} : vector<8x4xf32>, vector<4x16xf32>, vector<8x16xf32> -> vector<8x16xf32>
    %405 = arith.addf %387, %404 : vector<8x16xf32>
    %406 = vector.extract_strided_slice %348 {offsets = [0, 12], sizes = [8, 4], strides = [1, 1]} : vector<8x16xf32> to vector<8x4xf32>
    %407 = vector.extract_strided_slice %349 {offsets = [0, 12], sizes = [8, 4], strides = [1, 1]} : vector<8x16xf32> to vector<8x4xf32>
    %408 = vector.extract_strided_slice %350 {offsets = [0, 12], sizes = [8, 4], strides = [1, 1]} : vector<8x16xf32> to vector<8x4xf32>
    %cst_149 = arith.constant dense<0.000000e+00> : vector<8x8xf32>
    %409 = tpu.matmul %406, %407, %cst_149 {dimension_numbers = #tpu.dot_dimension_numbers<[1], [1], [0], [0], [0, 0, 1, 0], [], []>} : vector<8x4xf32>, vector<8x4xf32>, vector<8x8xf32> -> vector<8x8xf32>
    %cst_150 = arith.constant dense<0xFF800000> : vector<8xf32>
    %410 = vector.multi_reduction <maximumf>, %409, %cst_150 [1] : vector<8x8xf32> to vector<8xf32>
    %411 = vector.shape_cast %410 : vector<8xf32> to vector<8x1xf32>
    %412 = vector.broadcast %411 : vector<8x1xf32> to vector<8x8xf32>
    %413 = arith.subf %409, %412 : vector<8x8xf32>
    %414 = math.exp %413 : vector<8x8xf32>
    %cst_151 = arith.constant dense<0.000000e+00> : vector<8xf32>
    %415 = vector.multi_reduction <add>, %414, %cst_151 [1] : vector<8x8xf32> to vector<8xf32>
    %416 = vector.shape_cast %415 : vector<8xf32> to vector<8x1xf32>
    %417 = tpu.reciprocal %416 {approx = true} : vector<8x1xf32> -> vector<8x1xf32>
    %418 = vector.broadcast %417 : vector<8x1xf32> to vector<8x8xf32>
    %419 = arith.mulf %414, %418 : vector<8x8xf32>
    %cst_152 = arith.constant dense<0.000000e+00> : vector<8x4xf32>
    %420 = tpu.matmul %419, %408, %cst_152 {dimension_numbers = #tpu.dot_dimension_numbers<[1], [0], [0], [1], [0, 0, 1, 1], [], []>} : vector<8x8xf32>, vector<8x4xf32>, vector<8x4xf32> -> vector<8x4xf32>
    %421 = vector.extract_strided_slice %271 {offsets = [12, 0], sizes = [4, 16], strides = [1, 1]} : vector<16x16xf32> to vector<4x16xf32>
    %cst_153 = arith.constant dense<0.000000e+00> : vector<8x16xf32>
    %422 = tpu.matmul %420, %421, %cst_153 {dimension_numbers = #tpu.dot_dimension_numbers<[1], [0], [0], [1], [0, 0, 1, 1], [], []>} : vector<8x4xf32>, vector<4x16xf32>, vector<8x16xf32> -> vector<8x16xf32>
    %423 = arith.addf %405, %422 : vector<8x16xf32>
    %424 = tpu.concatenate %347, %423 in 0 : vector<8x16xf32>, vector<8x16xf32> -> vector<16x16xf32>
    %c1_154 = arith.constant 1 : index
    %c0_155 = arith.constant 0 : index
    %c0_156 = arith.constant 0 : index
    %425 = vector.load %arg6[%c1_154, %c0_155, %c0_156] : memref<2x1x16xf32, #tpu.memory_space<vmem>>, vector<1x1x16xf32>
    %426 = vector.shape_cast %425 : vector<1x1x16xf32> to vector<1x16xf32>
    %427 = vector.broadcast %426 : vector<1x16xf32> to vector<16x16xf32>
    %428 = arith.addf %424, %427 : vector<16x16xf32>
    %429 = arith.addf %235, %428 : vector<16x16xf32>
    %c1_157 = arith.constant 1 : index
    %c0_158 = arith.constant 0 : index
    %c0_159 = arith.constant 0 : index
    %430 = vector.load %arg7[%c1_157, %c0_158, %c0_159] : memref<2x1x16xf32, #tpu.memory_space<vmem>>, vector<1x1x16xf32>
    %431 = vector.shape_cast %430 : vector<1x1x16xf32> to vector<1x16xf32>
    %c1_160 = arith.constant 1 : index
    %c0_161 = arith.constant 0 : index
    %c0_162 = arith.constant 0 : index
    %432 = vector.load %arg8[%c1_160, %c0_161, %c0_162] : memref<2x1x16xf32, #tpu.memory_space<vmem>>, vector<1x1x16xf32>
    %433 = vector.shape_cast %432 : vector<1x1x16xf32> to vector<1x16xf32>
    %cst_163 = arith.constant dense<0.000000e+00> : vector<16xf32>
    %434 = vector.multi_reduction <add>, %429, %cst_163 [1] : vector<16x16xf32> to vector<16xf32>
    %435 = vector.shape_cast %434 : vector<16xf32> to vector<16x1xf32>
    %cst_164 = arith.constant 1.600000e+01 : f32
    %436 = vector.broadcast %cst_164 : f32 to vector<16x1xf32>
    %437 = arith.divf %435, %436 : vector<16x1xf32>
    %438 = vector.broadcast %437 : vector<16x1xf32> to vector<16x16xf32>
    %439 = arith.subf %429, %438 : vector<16x16xf32>
    %440 = arith.mulf %439, %439 : vector<16x16xf32>
    %cst_165 = arith.constant dense<0.000000e+00> : vector<16xf32>
    %441 = vector.multi_reduction <add>, %440, %cst_165 [1] : vector<16x16xf32> to vector<16xf32>
    %442 = vector.shape_cast %441 : vector<16xf32> to vector<16x1xf32>
    %cst_166 = arith.constant 1.600000e+01 : f32
    %443 = vector.broadcast %cst_166 : f32 to vector<16x1xf32>
    %444 = arith.divf %442, %443 : vector<16x1xf32>
    %cst_167 = arith.constant 9.99999974E-6 : f32
    %445 = vector.broadcast %cst_167 : f32 to vector<16x1xf32>
    %446 = arith.addf %444, %445 : vector<16x1xf32>
    %447 = math.rsqrt %446 : vector<16x1xf32>
    %448 = vector.broadcast %447 : vector<16x1xf32> to vector<16x16xf32>
    %449 = arith.mulf %439, %448 : vector<16x16xf32>
    %450 = vector.broadcast %431 : vector<1x16xf32> to vector<16x16xf32>
    %451 = arith.mulf %449, %450 : vector<16x16xf32>
    %452 = vector.broadcast %433 : vector<1x16xf32> to vector<16x16xf32>
    %453 = arith.addf %451, %452 : vector<16x16xf32>
    %c1_168 = arith.constant 1 : index
    %c0_169 = arith.constant 0 : index
    %c0_170 = arith.constant 0 : index
    %454 = vector.load %arg9[%c1_168, %c0_169, %c0_170] : memref<2x16x32xf32, #tpu.memory_space<vmem>>, vector<1x16x32xf32>
    %455 = vector.shape_cast %454 : vector<1x16x32xf32> to vector<16x32xf32>
    %cst_171 = arith.constant dense<0.000000e+00> : vector<16x32xf32>
    %456 = tpu.matmul %453, %455, %cst_171 {dimension_numbers = #tpu.dot_dimension_numbers<[1], [0], [0], [1], [0, 0, 1, 1], [], []>} : vector<16x16xf32>, vector<16x32xf32>, vector<16x32xf32> -> vector<16x32xf32>
    %c1_172 = arith.constant 1 : index
    %c0_173 = arith.constant 0 : index
    %c0_174 = arith.constant 0 : index
    %457 = vector.load %arg10[%c1_172, %c0_173, %c0_174] : memref<2x1x32xf32, #tpu.memory_space<vmem>>, vector<1x1x32xf32>
    %458 = vector.shape_cast %457 : vector<1x1x32xf32> to vector<1x32xf32>
    %459 = vector.broadcast %458 : vector<1x32xf32> to vector<16x32xf32>
    %460 = arith.addf %456, %459 : vector<16x32xf32>
    %cst_175 = arith.constant 0.000000e+00 : f32
    %461 = vector.broadcast %cst_175 : f32 to vector<16x32xf32>
    %462 = arith.maximumf %460, %461 : vector<16x32xf32>
    %c1_176 = arith.constant 1 : index
    %c0_177 = arith.constant 0 : index
    %c0_178 = arith.constant 0 : index
    %463 = vector.load %arg11[%c1_176, %c0_177, %c0_178] : memref<2x32x16xf32, #tpu.memory_space<vmem>>, vector<1x32x16xf32>
    %464 = vector.shape_cast %463 : vector<1x32x16xf32> to vector<32x16xf32>
    %cst_179 = arith.constant dense<0.000000e+00> : vector<16x16xf32>
    %465 = tpu.matmul %462, %464, %cst_179 {dimension_numbers = #tpu.dot_dimension_numbers<[1], [0], [0], [1], [0, 0, 1, 1], [], []>} : vector<16x32xf32>, vector<32x16xf32>, vector<16x16xf32> -> vector<16x16xf32>
    %466 = arith.addf %429, %465 : vector<16x16xf32>
    %c1_180 = arith.constant 1 : index
    %c0_181 = arith.constant 0 : index
    %c0_182 = arith.constant 0 : index
    %467 = vector.load %arg12[%c1_180, %c0_181, %c0_182] : memref<2x1x16xf32, #tpu.memory_space<vmem>>, vector<1x1x16xf32>
    %468 = vector.shape_cast %467 : vector<1x1x16xf32> to vector<1x16xf32>
    %469 = vector.broadcast %468 : vector<1x16xf32> to vector<16x16xf32>
    %470 = arith.addf %466, %469 : vector<16x16xf32>
    %c0_183 = arith.constant 0 : index
    %c0_184 = arith.constant 0 : index
    %471 = vector.load %arg13[%c0_183, %c0_184] : memref<1x16xf32, #tpu.memory_space<vmem>>, vector<1x16xf32>
    %c0_185 = arith.constant 0 : index
    %c0_186 = arith.constant 0 : index
    %472 = vector.load %arg14[%c0_185, %c0_186] : memref<1x16xf32, #tpu.memory_space<vmem>>, vector<1x16xf32>
    %cst_187 = arith.constant dense<0.000000e+00> : vector<16xf32>
    %473 = vector.multi_reduction <add>, %470, %cst_187 [1] : vector<16x16xf32> to vector<16xf32>
    %474 = vector.shape_cast %473 : vector<16xf32> to vector<16x1xf32>
    %cst_188 = arith.constant 1.600000e+01 : f32
    %475 = vector.broadcast %cst_188 : f32 to vector<16x1xf32>
    %476 = arith.divf %474, %475 : vector<16x1xf32>
    %477 = vector.broadcast %476 : vector<16x1xf32> to vector<16x16xf32>
    %478 = arith.subf %470, %477 : vector<16x16xf32>
    %479 = arith.mulf %478, %478 : vector<16x16xf32>
    %cst_189 = arith.constant dense<0.000000e+00> : vector<16xf32>
    %480 = vector.multi_reduction <add>, %479, %cst_189 [1] : vector<16x16xf32> to vector<16xf32>
    %481 = vector.shape_cast %480 : vector<16xf32> to vector<16x1xf32>
    %cst_190 = arith.constant 1.600000e+01 : f32
    %482 = vector.broadcast %cst_190 : f32 to vector<16x1xf32>
    %483 = arith.divf %481, %482 : vector<16x1xf32>
    %cst_191 = arith.constant 9.99999974E-6 : f32
    %484 = vector.broadcast %cst_191 : f32 to vector<16x1xf32>
    %485 = arith.addf %483, %484 : vector<16x1xf32>
    %486 = math.rsqrt %485 : vector<16x1xf32>
    %487 = vector.broadcast %486 : vector<16x1xf32> to vector<16x16xf32>
    %488 = arith.mulf %478, %487 : vector<16x16xf32>
    %489 = vector.broadcast %471 : vector<1x16xf32> to vector<16x16xf32>
    %490 = arith.mulf %488, %489 : vector<16x16xf32>
    %491 = vector.broadcast %472 : vector<1x16xf32> to vector<16x16xf32>
    %492 = arith.addf %490, %491 : vector<16x16xf32>
    %c0_192 = arith.constant 0 : index
    %c0_193 = arith.constant 0 : index
    %493 = vector.load %arg15[%c0_192, %c0_193] : memref<1x16xf32, #tpu.memory_space<vmem>>, vector<1x16xf32>
    %cst_194 = arith.constant dense<0.000000e+00> : vector<1x16xf32>
    %494 = tpu.matmul %493, %492, %cst_194 {dimension_numbers = #tpu.dot_dimension_numbers<[1], [1], [0], [0], [0, 0, 1, 0], [], []>} : vector<1x16xf32>, vector<16x16xf32>, vector<1x16xf32> -> vector<1x16xf32>
    %c0_195 = arith.constant 0 : index
    %c0_196 = arith.constant 0 : index
    %495 = vector.load %arg16[%c0_195, %c0_196] : memref<1x1xf32, #tpu.memory_space<vmem>>, vector<1x1xf32>
    %496 = vector.broadcast %495 : vector<1x1xf32> to vector<1x16xf32>
    %497 = arith.addf %494, %496 : vector<1x16xf32>
    %c0_197 = arith.constant 0 : index
    %c0_198 = arith.constant 0 : index
    %498 = vector.load %arg17[%c0_197, %c0_198] : memref<1x16xf32, #tpu.memory_space<vmem>>, vector<1x16xf32>
    tpu.vector_store %arg17[%c0_197, %c0_198], %497 {strides = array<i32>} : memref<1x16xf32, #tpu.memory_space<vmem>>, vector<1x16xf32>,
    %499 = vector.extract_strided_slice %492 {offsets = [7, 0], sizes = [1, 16], strides = [1, 1]} : vector<16x16xf32> to vector<1x16xf32>
    %500 = vector.extract_strided_slice %492 {offsets = [15, 0], sizes = [1, 16], strides = [1, 1]} : vector<16x16xf32> to vector<1x16xf32>
    %501 = tpu.concatenate %499, %500 in 0 : vector<1x16xf32>, vector<1x16xf32> -> vector<2x16xf32>
    %c0_199 = arith.constant 0 : index
    %c0_200 = arith.constant 0 : index
    %502 = vector.load %arg18[%c0_199, %c0_200] : memref<2x16xf32, #tpu.memory_space<vmem>>, vector<2x16xf32>
    tpu.vector_store %arg18[%c0_199, %c0_200], %501 {strides = array<i32>} : memref<2x16xf32, #tpu.memory_space<vmem>>, vector<2x16xf32>,
    return
  }
}

</mosaic_0001>

<llo_original>
// kernel: transformer_forward.1
$region0: #{transformer_forward.1}
  #allocation0 [shape = 'u32[]', space=smem, size = 0x4, offset = 0x4, fixed_abs, tag = 'smem constant byte address 0x4 - core index']
  #allocation1 [shape = 'u32[144,128]{1,0:T(1,128)}', space=vmem, size = 0x12000, scoped, tag = 'internal scratch']
  #allocation2 [shape = 'f32[1,1]{1,0:T(1,128)S(1)}', space=vmem, size = 0x200, scoped, tag = 'scoped memory for transformer_forward.1']
  %s0 = inlined_call_operand.vmem [shape: f32[16,16], index: 0, kind: input, shape index: {}]
  %s1 = inlined_call_operand.vmem [shape: f32[2,1,16], index: 1, kind: input, shape index: {}]
  %s2 = inlined_call_operand.vmem [shape: f32[2,1,16], index: 2, kind: input, shape index: {}]
  %s3 = inlined_call_operand.vmem [shape: f32[2,16,48], index: 3, kind: input, shape index: {}]
  %s4 = inlined_call_operand.vmem [shape: f32[2,1,48], index: 4, kind: input, shape index: {}]
  %s5 = inlined_call_operand.vmem [shape: f32[2,16,16], index: 5, kind: input, shape index: {}]
  %s6 = inlined_call_operand.vmem [shape: f32[2,1,16], index: 6, kind: input, shape index: {}]
  %s7 = inlined_call_operand.vmem [shape: f32[2,1,16], index: 7, kind: input, shape index: {}]
  %s8 = inlined_call_operand.vmem [shape: f32[2,1,16], index: 8, kind: input, shape index: {}]
  %s9 = inlined_call_operand.vmem [shape: f32[2,16,32], index: 9, kind: input, shape index: {}]
  %s10 = inlined_call_operand.vmem [shape: f32[2,1,32], index: 10, kind: input, shape index: {}]
  %s11 = inlined_call_operand.vmem [shape: f32[2,32,16], index: 11, kind: input, shape index: {}]
  %s12 = inlined_call_operand.vmem [shape: f32[2,1,16], index: 12, kind: input, shape index: {}]
  %s13 = inlined_call_operand.vmem [shape: f32[1,16], index: 13, kind: input, shape index: {}]
  %s14 = inlined_call_operand.vmem [shape: f32[1,16], index: 14, kind: input, shape index: {}]
  %s15 = inlined_call_operand.vmem [shape: f32[1,16], index: 15, kind: input, shape index: {}]
  %s16 = inlined_call_operand.<no memory space> [shape: f32[1,1], index: 16, kind: input, shape index: {}]
  %s17 = inlined_call_operand.vmem [shape: f32[1,16], index: 17, kind: output, shape index: {0}]
  %s18 = inlined_call_operand.hbm [shape: f32[2,16], index: 18, kind: output, shape index: {1}]
  %19 = xla_tuple %s17, %s18
  %s20 = sld [smem:[#allocation0]]
  $region86: #{transformer_forward.1} parent=0
    _
  %s22 = ssub.s32 1, %s20
  %s23 = scalar_select 0, %s22, %s20
  %v24 = vstv %s16
  %25 = vst [vmem:[#allocation2] sm:$0x1] %v24
  $region1: #{transformer_forward.1} parent=0
    #allocation3 [shape = 'u8[1024]{0}', space=vmem, size = 0x400, scoped, tag = 'output window, operand 1, single buffered']
    #allocation4 [shape = 's32[1]{0}', space=sflag, size = 0x4, scoped, tag = 'scoped memory for transformer_forward.1']
    %26 = vsyncpa [#allocation4], 0
    // Predicated region
    $region2: #{transformer_forward.1} parent=1 // pred_check
      _
    $region3: #{transformer_forward.1} parent=1 // pred_check_branch
      %28 = sbr.rel (0) target = $region5
    $region4: #{transformer_forward.1} parent=1 // pred_region
      _
    $region5: #{transformer_forward.1} parent=1 // pred_fallthru
      _
    // Predicated region
    $region6: #{transformer_forward.1} parent=1 // pred_check
      _
    $region7: #{transformer_forward.1} parent=1 // pred_check_branch
      %30 = sbr.rel (0) target = $region9
    $region8: #{transformer_forward.1} parent=1 // pred_region
      _
    $region9: #{transformer_forward.1} parent=1 // pred_fallthru
      _
    // Predicated region
    $region10: #{transformer_forward.1} parent=1 // pred_check
      _
    $region11: #{transformer_forward.1} parent=1 // pred_check_branch
      %32 = sbr.rel (0) target = $region13
    $region12: #{transformer_forward.1} parent=1 // pred_region
      _
    $region13: #{transformer_forward.1} parent=1 // pred_fallthru
      _
    // Predicated region
    $region14: #{transformer_forward.1} parent=1 // pred_check
      _
    $region15: #{transformer_forward.1} parent=1 // pred_check_branch
      %34 = sbr.rel (0) target = $region17
    $region16: #{transformer_forward.1} parent=1 // pred_region
      _
    $region17: #{transformer_forward.1} parent=1 // pred_fallthru
      _
    // Predicated region
    $region18: #{transformer_forward.1} parent=1 // pred_check
      _
    $region19: #{transformer_forward.1} parent=1 // pred_check_branch
      %36 = sbr.rel (0) target = $region21
    $region20: #{transformer_forward.1} parent=1 // pred_region
      _
    $region21: #{transformer_forward.1} parent=1 // pred_fallthru
      _
    // Predicated region
    $region22: #{transformer_forward.1} parent=1 // pred_check
      _
    $region23: #{transformer_forward.1} parent=1 // pred_check_branch
      %38 = sbr.rel (0) target = $region25
    $region24: #{transformer_forward.1} parent=1 // pred_region
      _
    $region25: #{transformer_forward.1} parent=1 // pred_fallthru
      _
    // Predicated region
    $region26: #{transformer_forward.1} parent=1 // pred_check
      _
    $region27: #{transformer_forward.1} parent=1 // pred_check_branch
      %40 = sbr.rel (0) target = $region29
    $region28: #{transformer_forward.1} parent=1 // pred_region
      _
    $region29: #{transformer_forward.1} parent=1 // pred_fallthru
      _
    // Predicated region
    $region30: #{transformer_forward.1} parent=1 // pred_check
      _
    $region31: #{transformer_forward.1} parent=1 // pred_check_branch
      %42 = sbr.rel (0) target = $region33
    $region32: #{transformer_forward.1} parent=1 // pred_region
      _
    $region33: #{transformer_forward.1} parent=1 // pred_fallthru
      _
    // Predicated region
    $region34: #{transformer_forward.1} parent=1 // pred_check
      _
    $region35: #{transformer_forward.1} parent=1 // pred_check_branch
      %44 = sbr.rel (0) target = $region37
    $region36: #{transformer_forward.1} parent=1 // pred_region
      _
    $region37: #{transformer_forward.1} parent=1 // pred_fallthru
      _
    // Predicated region
    $region38: #{transformer_forward.1} parent=1 // pred_check
      _
    $region39: #{transformer_forward.1} parent=1 // pred_check_branch
      %46 = sbr.rel (0) target = $region41
    $region40: #{transformer_forward.1} parent=1 // pred_region
      _
    $region41: #{transformer_forward.1} parent=1 // pred_fallthru
      _
    // Predicated region
    $region42: #{transformer_forward.1} parent=1 // pred_check
      _
    $region43: #{transformer_forward.1} parent=1 // pred_check_branch
      %48 = sbr.rel (0) target = $region45
    $region44: #{transformer_forward.1} parent=1 // pred_region
      _
    $region45: #{transformer_forward.1} parent=1 // pred_fallthru
      _
    // Predicated region
    $region46: #{transformer_forward.1} parent=1 // pred_check
      _
    $region47: #{transformer_forward.1} parent=1 // pred_check_branch
      %50 = sbr.rel (0) target = $region49
    $region48: #{transformer_forward.1} parent=1 // pred_region
      _
    $region49: #{transformer_forward.1} parent=1 // pred_fallthru
      _
    // Predicated region
    $region50: #{transformer_forward.1} parent=1 // pred_check
      _
    $region51: #{transformer_forward.1} parent=1 // pred_check_branch
      %52 = sbr.rel (0) target = $region53
    $region52: #{transformer_forward.1} parent=1 // pred_region
      _
    $region53: #{transformer_forward.1} parent=1 // pred_fallthru
      _
    // Predicated region
    $region54: #{transformer_forward.1} parent=1 // pred_check
      _
    $region55: #{transformer_forward.1} parent=1 // pred_check_branch
      %54 = sbr.rel (0) target = $region57
    $region56: #{transformer_forward.1} parent=1 // pred_region
      _
    $region57: #{transformer_forward.1} parent=1 // pred_fallthru
      _
    // Predicated region
    $region58: #{transformer_forward.1} parent=1 // pred_check
      _
    $region59: #{transformer_forward.1} parent=1 // pred_check_branch
      %56 = sbr.rel (0) target = $region61
    $region60: #{transformer_forward.1} parent=1 // pred_region
      _
    $region61: #{transformer_forward.1} parent=1 // pred_fallthru
      _
    // Predicated region
    $region62: #{transformer_forward.1} parent=1 // pred_check
      _
    $region63: #{transformer_forward.1} parent=1 // pred_check_branch
      %58 = sbr.rel (0) target = $region65
    $region64: #{transformer_forward.1} parent=1 // pred_region
      _
    $region65: #{transformer_forward.1} parent=1 // pred_fallthru
      _
    // Predicated region
    $region66: #{transformer_forward.1} parent=1 // pred_check
      _
    $region67: #{transformer_forward.1} parent=1 // pred_check_branch
      %60 = sbr.rel (0) target = $region69
    $region68: #{transformer_forward.1} parent=1 // pred_region
      _
    $region69: #{transformer_forward.1} parent=1 // pred_fallthru
      _
    %v61 = vld [vmem:[%s0] sm:$0xff]
    %v62 = vld [vmem:[%s0 + $0x8] sm:$0xff]
    %v63 = vld [vmem:[%s1] sm:$0x1]
    %v64 = vld [vmem:[%s2] sm:$0x1]
    %vm65 = vcmask 130048
    %v66 = vsel %vm65, %v61, 0.0
    %67 = vadd.xlane.f32.xlu0 %v66
    %v68 = vpop.xlane.xlu0 %67
    %v69 = vsel %vm65, %v62, 0.0
    %70 = vadd.xlane.f32.xlu0 %v69
    %v71 = vpop.xlane.xlu0 %70
    %v72 = vrcp.pop 16.0
    %v73 = vmul.f32 %v68, %v72
    %v74 = vmul.f32 %v71, %v72
    %v75 = vsub.f32 %v61, %v73
    %v76 = vsub.f32 %v62, %v74
    %v77 = vmul.f32 %v75, %v75
    %v78 = vmul.f32 %v76, %v76
    %v79 = vsel %vm65, %v77, 0.0
    %80 = vadd.xlane.f32.xlu0 %v79
    %v81 = vpop.xlane.xlu0 %80
    %v82 = vsel %vm65, %v78, 0.0
    %83 = vadd.xlane.f32.xlu0 %v82
    %v84 = vpop.xlane.xlu0 %83
    %v85 = vmul.f32 %v81, %v72
    %v86 = vmul.f32 %v84, %v72
    %v87 = vadd.f32 %v85, 1e-05
    %v88 = vadd.f32 %v86, 1e-05
    %v89 = vrsqrt.pop %v87
    %v90 = vrsqrt.pop %v88
    %v91 = vmul.f32 %v75, %v89
    %v92 = vmul.f32 %v76, %v90
    %v94 = vlaneseq
    %v95 = vshrl.u32 %v94, 7
    %v96 = vsub.s32 0, %v95
    %v97 = vrot.slane %v63, %v96
    %v99 = vmul.f32 %v91, %v97
    %v100 = vmul.f32 %v92, %v97
    %v102 = vlaneseq
    %v103 = vshrl.u32 %v102, 7
    %v104 = vsub.s32 0, %v103
    %v105 = vrot.slane %v64, %v104
    %v107 = vadd.f32 %v99, %v105
    %v108 = vadd.f32 %v100, %v105
    %v109 = vld [vmem:[%s3] sm:$0xff]
    %v110 = vld [vmem:[%s3 + $0x8] sm:$0xff]
    %v111 = vld [vmem:[%s4] sm:$0x1]
    %v113 = vlaneseq
    %v114 = vshrl.u32 %v113, 7
    %v115 = vsub.s32 0, %v114
    %v116 = vrot.slane %v111, %v115
    %v119 = vsel %vm65, %v107, 0
    %v122 = vsel %vm65, %v108, 0
    %124 = vmatprep.subr.mxu0 0.0
    %125 = vmatpush1.msra.mxu0 %v109
    %126 = vmatprep.subr.mxu0 0.0
    %127 = vmatpush1.msra.mxu0 %v110
    %128 = vmatprep.subr.mxu0 0.0
    %129 = vmatpush1.msra.mxu0 0.0
    %130 = vmatprep.subr.mxu0 0.0
    %131 = vmatpush1.msra.mxu0 0.0
    %132 = vmatprep.subr.mxu0 0.0
    %133 = vmatpush1.msra.mxu0 0.0
    %134 = vmatprep.subr.mxu0 0.0
    %135 = vmatpush1.msra.mxu0 0.0
    %136 = vmatprep.subr.mxu0 0.0
    %137 = vmatpush1.msra.mxu0 0.0
    %138 = vmatprep.subr.mxu0 0.0
    %139 = vmatpush1.msra.mxu0 0.0
    %140 = vmatprep.subr.mxu0 0.0
    %141 = vmatpush1.msra.mxu0 0.0
    %142 = vmatprep.subr.mxu0 0.0
    %143 = vmatpush1.msra.mxu0 0.0
    %144 = vmatprep.subr.mxu0 0.0
    %145 = vmatpush1.msra.mxu0 0.0
    %146 = vmatprep.subr.mxu0 0.0
    %147 = vmatpush1.msra.mxu0 0.0
    %148 = vmatprep.subr.mxu0 0.0
    %149 = vmatpush1.msra.mxu0 0.0
    %150 = vmatprep.subr.mxu0 0.0
    %151 = vmatpush1.msra.mxu0 0.0
    %152 = vmatprep.subr.mxu0 0.0
    %153 = vmatpush1.msra.mxu0 0.0
    %154 = vmatprep.subr.mxu0 0.0
    %155 = vmatpush1.msra.mxu0 0.0
    %156 = vmatprep.subr.mxu0 0.0
    %157 = vmatpush1.msra.mxu0 0.0
    %158 = vmatprep.subr.mxu0 0.0
    %159 = vmatpush1.msra.mxu0 0.0
    %160 = vmatprep.subr.mxu0 0.0
    %161 = vmatpush1.msra.mxu0 0.0
    %162 = vmatprep.subr.mxu0 0.0
    %163 = vmatpush1.msra.mxu0 0.0
    %164 = vmatprep.subr.mxu0 0.0
    %165 = vmatpush1.msra.mxu0 0.0
    %166 = vmatprep.subr.mxu0 0.0
    %167 = vmatpush1.msra.mxu0 0.0
    %168 = vmatprep.subr.mxu0 0.0
    %169 = vmatpush1.msra.mxu0 0.0
    %170 = vmatprep.subr.mxu0 0.0
    %171 = vmatpush1.msra.mxu0 0.0
    %172 = vmatprep.subr.mxu0 0.0
    %173 = vmatpush1.msra.mxu0 0.0
    %174 = vmatprep.subr.mxu0 0.0
    %175 = vmatpush1.msra.mxu0 0.0
    %176 = vmatprep.subr.mxu0 0.0
    %177 = vmatpush1.msra.mxu0 0.0
    %178 = vmatprep.subr.mxu0 0.0
    %179 = vmatpush1.msra.mxu0 0.0
    %180 = vmatprep.subr.mxu0 0.0
    %181 = vmatpush1.msra.mxu0 0.0
    %182 = vmatprep.subr.mxu0 0.0
    %183 = vmatpush1.msra.mxu0 0.0
    %184 = vmatprep.subr.mxu0 0.0
    %185 = vmatpush1.msra.mxu0 0.0
    %186 = vmatprep.subr.mxu0 0.0
    %187 = vmatpush1.msra.mxu0 0.0
    %188 = vmatprep.mubr.f32.mxu0 0.0
    %189 = vmatmul.mubr.f32.gmra.mrb[0].mxu0 %v119
    %v190 = vpop.f32.mrb[0].mxu0
    %v191 = vadd.f32 %v116, %v190
    %v192 = vpop.f32.mrb[0].mxu0
    %193 = vmatprep.mubr.f32.mxu0 0.0
    %194 = vmatmul.mubr.f32.gmra.mrb[0].mxu0 %v122
    %v195 = vpop.f32.mrb[0].mxu0
    %v196 = vadd.f32 %v116, %v195
    %v197 = vpop.f32.mrb[0].mxu0
    %198 = vdwg.mxu0
    %v199 = vld [vmem:[%s5] sm:$0xff]
    %v200 = vld [vmem:[%s5 + $0x8] sm:$0xff]
    %202 = vrot.lane.b32.xlu0 %v191, 112
    %v203 = vpop.permute.xlu0 %202
    %vm204 = vcmask 31744
    %v205 = vsel %vm204, %v191, 0
    %v207 = vsel %vm204, %v203, 0
    %209 = vmatprep.subr.mxu0 0.0
    %210 = vmatpush1.xpose.msra.mxu0 %v207
    %211 = vmatprep.subr.mxu0 0.0
    %212 = vmatpush1.xpose.msra.mxu0 0.0
    %213 = vmatprep.subr.mxu0 0.0
    %214 = vmatpush1.xpose.msra.mxu0 0.0
    %215 = vmatprep.subr.mxu0 0.0
    %216 = vmatpush1.xpose.msra.mxu0 0.0
    %217 = vmatprep.subr.mxu0 0.0
    %218 = vmatpush1.xpose.msra.mxu0 0.0
    %219 = vmatprep.subr.mxu0 0.0
    %220 = vmatpush1.xpose.msra.mxu0 0.0
    %221 = vmatprep.subr.mxu0 0.0
    %222 = vmatpush1.xpose.msra.mxu0 0.0
    %223 = vmatprep.subr.mxu0 0.0
    %224 = vmatpush1.xpose.msra.mxu0 0.0
    %225 = vmatprep.subr.mxu0 0.0
    %226 = vmatpush1.xpose.msra.mxu0 0.0
    %227 = vmatprep.subr.mxu0 0.0
    %228 = vmatpush1.xpose.msra.mxu0 0.0
    %229 = vmatprep.subr.mxu0 0.0
    %230 = vmatpush1.xpose.msra.mxu0 0.0
    %231 = vmatprep.subr.mxu0 0.0
    %232 = vmatpush1.xpose.msra.mxu0 0.0
    %233 = vmatprep.subr.mxu0 0.0
    %234 = vmatpush1.xpose.msra.mxu0 0.0
    %235 = vmatprep.subr.mxu0 0.0
    %236 = vmatpush1.xpose.msra.mxu0 0.0
    %237 = vmatprep.subr.mxu0 0.0
    %238 = vmatpush1.xpose.msra.mxu0 0.0
    %239 = vmatprep.subr.mxu0 0.0
    %240 = vmatpush1.xpose.msra.mxu0 0.0
    %241 = vmatprep.subr.mxu0 0.0
    %242 = vmatpush1.xpose.msra.mxu0 0.0
    %243 = vmatprep.subr.mxu0 0.0
    %244 = vmatpush1.xpose.msra.mxu0 0.0
    %245 = vmatprep.subr.mxu0 0.0
    %246 = vmatpush1.xpose.msra.mxu0 0.0
    %247 = vmatprep.subr.mxu0 0.0
    %248 = vmatpush1.xpose.msra.mxu0 0.0
    %249 = vmatprep.subr.mxu0 0.0
    %250 = vmatpush1.xpose.msra.mxu0 0.0
    %251 = vmatprep.subr.mxu0 0.0
    %252 = vmatpush1.xpose.msra.mxu0 0.0
    %253 = vmatprep.subr.mxu0 0.0
    %254 = vmatpush1.xpose.msra.mxu0 0.0
    %255 = vmatprep.subr.mxu0 0.0
    %256 = vmatpush1.xpose.msra.mxu0 0.0
    %257 = vmatprep.subr.mxu0 0.0
    %258 = vmatpush1.xpose.msra.mxu0 0.0
    %259 = vmatprep.subr.mxu0 0.0
    %260 = vmatpush1.xpose.msra.mxu0 0.0
    %261 = vmatprep.subr.mxu0 0.0
    %262 = vmatpush1.xpose.msra.mxu0 0.0
    %263 = vmatprep.subr.mxu0 0.0
    %264 = vmatpush1.xpose.msra.mxu0 0.0
    %265 = vmatprep.subr.mxu0 0.0
    %266 = vmatpush1.xpose.msra.mxu0 0.0
    %267 = vmatprep.subr.mxu0 0.0
    %268 = vmatpush1.xpose.msra.mxu0 0.0
    %269 = vmatprep.subr.mxu0 0.0
    %270 = vmatpush1.xpose.msra.mxu0 0.0
    %271 = vmatprep.subr.mxu0 0.0
    %272 = vmatpush1.xpose.msra.mxu0 0.0
    %273 = vmatprep.mubr.f32.mxu0 0.0
    %274 = vmatmul.mubr.f32.gmra.mrb[0].mxu0 %v205
    %v275 = vpop.f32.mrb[0].mxu0
    %v276 = vadd.f32 0.0, %v275
    %v277 = vpop.f32.mrb[0].mxu0
    %278 = vdwg.mxu0
    %vm279 = vcmask 64512
    %v280 = vsel %vm279, %v276, -inf
    %281 = vmax.xlane.f32.xlu0 %v280
    %v282 = vpop.xlane.xlu0 %281
    %v283 = vsub.f32 %v276, %v282
    %v284 = vmul.f32 %v283, 1.442695
    %v285 = vpow.pop %v284
    %v286 = vsel %vm279, %v285, 0.0
    %287 = vadd.xlane.f32.xlu0 %v286
    %v288 = vpop.xlane.xlu0 %287
    %v289 = vrcp.pop %v288
    %v290 = vmul.f32 %v285, %v289
    %291 = vrot.lane.b32.xlu0 %v191, 96
    %v292 = vpop.permute.xlu0 %291
    %v295 = vsel %vm279, %v290, 0
    %297 = vmatprep.subr.mxu0 0.0
    %298 = vmatpush1.msra.mxu0 %v292
    %299 = vmatprep.subr.mxu0 0.0
    %300 = vmatpush1.msra.mxu0 0.0
    %301 = vmatprep.subr.mxu0 0.0
    %302 = vmatpush1.msra.mxu0 0.0
    %303 = vmatprep.subr.mxu0 0.0
    %304 = vmatpush1.msra.mxu0 0.0
    %305 = vmatprep.subr.mxu0 0.0
    %306 = vmatpush1.msra.mxu0 0.0
    %307 = vmatprep.subr.mxu0 0.0
    %308 = vmatpush1.msra.mxu0 0.0
    %309 = vmatprep.subr.mxu0 0.0
    %310 = vmatpush1.msra.mxu0 0.0
    %311 = vmatprep.subr.mxu0 0.0
    %312 = vmatpush1.msra.mxu0 0.0
    %313 = vmatprep.subr.mxu0 0.0
    %314 = vmatpush1.msra.mxu0 0.0
    %315 = vmatprep.subr.mxu0 0.0
    %316 = vmatpush1.msra.mxu0 0.0
    %317 = vmatprep.subr.mxu0 0.0
    %318 = vmatpush1.msra.mxu0 0.0
    %319 = vmatprep.subr.mxu0 0.0
    %320 = vmatpush1.msra.mxu0 0.0
    %321 = vmatprep.subr.mxu0 0.0
    %322 = vmatpush1.msra.mxu0 0.0
    %323 = vmatprep.subr.mxu0 0.0
    %324 = vmatpush1.msra.mxu0 0.0
    %325 = vmatprep.subr.mxu0 0.0
    %326 = vmatpush1.msra.mxu0 0.0
    %327 = vmatprep.subr.mxu0 0.0
    %328 = vmatpush1.msra.mxu0 0.0
    %329 = vmatprep.subr.mxu0 0.0
    %330 = vmatpush1.msra.mxu0 0.0
    %331 = vmatprep.subr.mxu0 0.0
    %332 = vmatpush1.msra.mxu0 0.0
    %333 = vmatprep.subr.mxu0 0.0
    %334 = vmatpush1.msra.mxu0 0.0
    %335 = vmatprep.subr.mxu0 0.0
    %336 = vmatpush1.msra.mxu0 0.0
    %337 = vmatprep.subr.mxu0 0.0
    %338 = vmatpush1.msra.mxu0 0.0
    %339 = vmatprep.subr.mxu0 0.0
    %340 = vmatpush1.msra.mxu0 0.0
    %341 = vmatprep.subr.mxu0 0.0
    %342 = vmatpush1.msra.mxu0 0.0
    %343 = vmatprep.subr.mxu0 0.0
    %344 = vmatpush1.msra.mxu0 0.0
    %345 = vmatprep.subr.mxu0 0.0
    %346 = vmatpush1.msra.mxu0 0.0
    %347 = vmatprep.subr.mxu0 0.0
    %348 = vmatpush1.msra.mxu0 0.0
    %349 = vmatprep.subr.mxu0 0.0
    %350 = vmatpush1.msra.mxu0 0.0
    %351 = vmatprep.subr.mxu0 0.0
    %352 = vmatpush1.msra.mxu0 0.0
    %353 = vmatprep.subr.mxu0 0.0
    %354 = vmatpush1.msra.mxu0 0.0
    %355 = vmatprep.subr.mxu0 0.0
    %356 = vmatpush1.msra.mxu0 0.0
    %357 = vmatprep.subr.mxu0 0.0
    %358 = vmatpush1.msra.mxu0 0.0
    %359 = vmatprep.subr.mxu0 0.0
    %360 = vmatpush1.msra.mxu0 0.0
    %361 = vmatprep.mubr.f32.mxu0 0.0
    %362 = vmatmul.mubr.f32.gmra.mrb[0].mxu0 %v295
    %v363 = vpop.f32.mrb[0].mxu0
    %v364 = vadd.f32 0.0, %v363
    %v365 = vpop.f32.mrb[0].mxu0
    %366 = vdwg.mxu0
    %367 = vrot.lane.b32.xlu0 %v191, 124
    %v368 = vpop.permute.xlu0 %367
    %369 = vrot.lane.b32.xlu0 %v191, 108
    %v370 = vpop.permute.xlu0 %369
    %v371 = vsel %vm204, %v368, 0
    %v373 = vsel %vm204, %v370, 0
    %375 = vmatprep.subr.mxu0 0.0
    %376 = vmatpush1.xpose.msra.mxu0 %v373
    %377 = vmatprep.subr.mxu0 0.0
    %378 = vmatpush1.xpose.msra.mxu0 0.0
    %379 = vmatprep.subr.mxu0 0.0
    %380 = vmatpush1.xpose.msra.mxu0 0.0
    %381 = vmatprep.subr.mxu0 0.0
    %382 = vmatpush1.xpose.msra.mxu0 0.0
    %383 = vmatprep.subr.mxu0 0.0
    %384 = vmatpush1.xpose.msra.mxu0 0.0
    %385 = vmatprep.subr.mxu0 0.0
    %386 = vmatpush1.xpose.msra.mxu0 0.0
    %387 = vmatprep.subr.mxu0 0.0
    %388 = vmatpush1.xpose.msra.mxu0 0.0
    %389 = vmatprep.subr.mxu0 0.0
    %390 = vmatpush1.xpose.msra.mxu0 0.0
    %391 = vmatprep.subr.mxu0 0.0
    %392 = vmatpush1.xpose.msra.mxu0 0.0
    %393 = vmatprep.subr.mxu0 0.0
    %394 = vmatpush1.xpose.msra.mxu0 0.0
    %395 = vmatprep.subr.mxu0 0.0
    %396 = vmatpush1.xpose.msra.mxu0 0.0
    %397 = vmatprep.subr.mxu0 0.0
    %398 = vmatpush1.xpose.msra.mxu0 0.0
    %399 = vmatprep.subr.mxu0 0.0
    %400 = vmatpush1.xpose.msra.mxu0 0.0
    %401 = vmatprep.subr.mxu0 0.0
    %402 = vmatpush1.xpose.msra.mxu0 0.0
    %403 = vmatprep.subr.mxu0 0.0
    %404 = vmatpush1.xpose.msra.mxu0 0.0
    %405 = vmatprep.subr.mxu0 0.0
    %406 = vmatpush1.xpose.msra.mxu0 0.0
    %407 = vmatprep.subr.mxu0 0.0
    %408 = vmatpush1.xpose.msra.mxu0 0.0
    %409 = vmatprep.subr.mxu0 0.0
    %410 = vmatpush1.xpose.msra.mxu0 0.0
    %411 = vmatprep.subr.mxu0 0.0
    %412 = vmatpush1.xpose.msra.mxu0 0.0
    %413 = vmatprep.subr.mxu0 0.0
    %414 = vmatpush1.xpose.msra.mxu0 0.0
    %415 = vmatprep.subr.mxu0 0.0
    %416 = vmatpush1.xpose.msra.mxu0 0.0
    %417 = vmatprep.subr.mxu0 0.0
    %418 = vmatpush1.xpose.msra.mxu0 0.0
    %419 = vmatprep.subr.mxu0 0.0
    %420 = vmatpush1.xpose.msra.mxu0 0.0
    %421 = vmatprep.subr.mxu0 0.0
    %422 = vmatpush1.xpose.msra.mxu0 0.0
    %423 = vmatprep.subr.mxu0 0.0
    %424 = vmatpush1.xpose.msra.mxu0 0.0
    %425 = vmatprep.subr.mxu0 0.0
    %426 = vmatpush1.xpose.msra.mxu0 0.0
    %427 = vmatprep.subr.mxu0 0.0
    %428 = vmatpush1.xpose.msra.mxu0 0.0
    %429 = vmatprep.subr.mxu0 0.0
    %430 = vmatpush1.xpose.msra.mxu0 0.0
    %431 = vmatprep.subr.mxu0 0.0
    %432 = vmatpush1.xpose.msra.mxu0 0.0
    %433 = vmatprep.subr.mxu0 0.0
    %434 = vmatpush1.xpose.msra.mxu0 0.0
    %435 = vmatprep.subr.mxu0 0.0
    %436 = vmatpush1.xpose.msra.mxu0 0.0
    %437 = vmatprep.subr.mxu0 0.0
    %438 = vmatpush1.xpose.msra.mxu0 0.0
    %439 = vmatprep.mubr.f32.mxu0 0.0
    %440 = vmatmul.mubr.f32.gmra.mrb[0].mxu0 %v371
    %v441 = vpop.f32.mrb[0].mxu0
    %v442 = vadd.f32 0.0, %v441
    %v443 = vpop.f32.mrb[0].mxu0
    %444 = vdwg.mxu0
    %v445 = vsel %vm279, %v442, -inf
    %446 = vmax.xlane.f32.xlu0 %v445
    %v447 = vpop.xlane.xlu0 %446
    %v448 = vsub.f32 %v442, %v447
    %v449 = vmul.f32 %v448, 1.442695
    %v450 = vpow.pop %v449
    %v451 = vsel %vm279, %v450, 0.0
    %452 = vadd.xlane.f32.xlu0 %v451
    %v453 = vpop.xlane.xlu0 %452
    %v454 = vrcp.pop %v453
    %v455 = vmul.f32 %v450, %v454
    %456 = vrot.lane.b32.xlu0 %v191, 92
    %v457 = vpop.permute.xlu0 %456
    %v460 = vsel %vm279, %v455, 0
    %462 = vmatprep.subr.mxu0 0.0
    %463 = vmatpush1.msra.mxu0 %v457
    %464 = vmatprep.subr.mxu0 0.0
    %465 = vmatpush1.msra.mxu0 0.0
    %466 = vmatprep.subr.mxu0 0.0
    %467 = vmatpush1.msra.mxu0 0.0
    %468 = vmatprep.subr.mxu0 0.0
    %469 = vmatpush1.msra.mxu0 0.0
    %470 = vmatprep.subr.mxu0 0.0
    %471 = vmatpush1.msra.mxu0 0.0
    %472 = vmatprep.subr.mxu0 0.0
    %473 = vmatpush1.msra.mxu0 0.0
    %474 = vmatprep.subr.mxu0 0.0
    %475 = vmatpush1.msra.mxu0 0.0
    %476 = vmatprep.subr.mxu0 0.0
    %477 = vmatpush1.msra.mxu0 0.0
    %478 = vmatprep.subr.mxu0 0.0
    %479 = vmatpush1.msra.mxu0 0.0
    %480 = vmatprep.subr.mxu0 0.0
    %481 = vmatpush1.msra.mxu0 0.0
    %482 = vmatprep.subr.mxu0 0.0
    %483 = vmatpush1.msra.mxu0 0.0
    %484 = vmatprep.subr.mxu0 0.0
    %485 = vmatpush1.msra.mxu0 0.0
    %486 = vmatprep.subr.mxu0 0.0
    %487 = vmatpush1.msra.mxu0 0.0
    %488 = vmatprep.subr.mxu0 0.0
    %489 = vmatpush1.msra.mxu0 0.0
    %490 = vmatprep.subr.mxu0 0.0
    %491 = vmatpush1.msra.mxu0 0.0
    %492 = vmatprep.subr.mxu0 0.0
    %493 = vmatpush1.msra.mxu0 0.0
    %494 = vmatprep.subr.mxu0 0.0
    %495 = vmatpush1.msra.mxu0 0.0
    %496 = vmatprep.subr.mxu0 0.0
    %497 = vmatpush1.msra.mxu0 0.0
    %498 = vmatprep.subr.mxu0 0.0
    %499 = vmatpush1.msra.mxu0 0.0
    %500 = vmatprep.subr.mxu0 0.0
    %501 = vmatpush1.msra.mxu0 0.0
    %502 = vmatprep.subr.mxu0 0.0
    %503 = vmatpush1.msra.mxu0 0.0
    %504 = vmatprep.subr.mxu0 0.0
    %505 = vmatpush1.msra.mxu0 0.0
    %506 = vmatprep.subr.mxu0 0.0
    %507 = vmatpush1.msra.mxu0 0.0
    %508 = vmatprep.subr.mxu0 0.0
    %509 = vmatpush1.msra.mxu0 0.0
    %510 = vmatprep.subr.mxu0 0.0
    %511 = vmatpush1.msra.mxu0 0.0
    %512 = vmatprep.subr.mxu0 0.0
    %513 = vmatpush1.msra.mxu0 0.0
    %514 = vmatprep.subr.mxu0 0.0
    %515 = vmatpush1.msra.mxu0 0.0
    %516 = vmatprep.subr.mxu0 0.0
    %517 = vmatpush1.msra.mxu0 0.0
    %518 = vmatprep.subr.mxu0 0.0
    %519 = vmatpush1.msra.mxu0 0.0
    %520 = vmatprep.subr.mxu0 0.0
    %521 = vmatpush1.msra.mxu0 0.0
    %522 = vmatprep.subr.mxu0 0.0
    %523 = vmatpush1.msra.mxu0 0.0
    %524 = vmatprep.subr.mxu0 0.0
    %525 = vmatpush1.msra.mxu0 0.0
    %526 = vmatprep.mubr.f32.mxu0 0.0
    %527 = vmatmul.mubr.f32.gmra.mrb[0].mxu0 %v460
    %v528 = vpop.f32.mrb[0].mxu0
    %v529 = vadd.f32 0.0, %v528
    %v530 = vpop.f32.mrb[0].mxu0
    %531 = vdwg.mxu0
    %v533 = vrot.slane %v199, 4
    %v535 = vsel %vm204, %v529, 0
    %vm537 = vcmask 1043456
    %v538 = vsel %vm537, %v533, 0
    %540 = vmatprep.subr.mxu0 0.0
    %541 = vmatpush1.msra.mxu0 %v538
    %542 = vmatprep.subr.mxu0 0.0
    %543 = vmatpush1.msra.mxu0 0.0
    %544 = vmatprep.subr.mxu0 0.0
    %545 = vmatpush1.msra.mxu0 0.0
    %546 = vmatprep.subr.mxu0 0.0
    %547 = vmatpush1.msra.mxu0 0.0
    %548 = vmatprep.subr.mxu0 0.0
    %549 = vmatpush1.msra.mxu0 0.0
    %550 = vmatprep.subr.mxu0 0.0
    %551 = vmatpush1.msra.mxu0 0.0
    %552 = vmatprep.subr.mxu0 0.0
    %553 = vmatpush1.msra.mxu0 0.0
    %554 = vmatprep.subr.mxu0 0.0
    %555 = vmatpush1.msra.mxu0 0.0
    %556 = vmatprep.subr.mxu0 0.0
    %557 = vmatpush1.msra.mxu0 0.0
    %558 = vmatprep.subr.mxu0 0.0
    %559 = vmatpush1.msra.mxu0 0.0
    %560 = vmatprep.subr.mxu0 0.0
    %561 = vmatpush1.msra.mxu0 0.0
    %562 = vmatprep.subr.mxu0 0.0
    %563 = vmatpush1.msra.mxu0 0.0
    %564 = vmatprep.subr.mxu0 0.0
    %565 = vmatpush1.msra.mxu0 0.0
    %566 = vmatprep.subr.mxu0 0.0
    %567 = vmatpush1.msra.mxu0 0.0
    %568 = vmatprep.subr.mxu0 0.0
    %569 = vmatpush1.msra.mxu0 0.0
    %570 = vmatprep.subr.mxu0 0.0
    %571 = vmatpush1.msra.mxu0 0.0
    %572 = vmatprep.subr.mxu0 0.0
    %573 = vmatpush1.msra.mxu0 0.0
    %574 = vmatprep.subr.mxu0 0.0
    %575 = vmatpush1.msra.mxu0 0.0
    %576 = vmatprep.subr.mxu0 0.0
    %577 = vmatpush1.msra.mxu0 0.0
    %578 = vmatprep.subr.mxu0 0.0
    %579 = vmatpush1.msra.mxu0 0.0
    %580 = vmatprep.subr.mxu0 0.0
    %581 = vmatpush1.msra.mxu0 0.0
    %582 = vmatprep.subr.mxu0 0.0
    %583 = vmatpush1.msra.mxu0 0.0
    %584 = vmatprep.subr.mxu0 0.0
    %585 = vmatpush1.msra.mxu0 0.0
    %586 = vmatprep.subr.mxu0 0.0
    %587 = vmatpush1.msra.mxu0 0.0
    %588 = vmatprep.subr.mxu0 0.0
    %589 = vmatpush1.msra.mxu0 0.0
    %590 = vmatprep.subr.mxu0 0.0
    %591 = vmatpush1.msra.mxu0 0.0
    %592 = vmatprep.subr.mxu0 0.0
    %593 = vmatpush1.msra.mxu0 0.0
    %594 = vmatprep.subr.mxu0 0.0
    %595 = vmatpush1.msra.mxu0 0.0
    %596 = vmatprep.subr.mxu0 0.0
    %597 = vmatpush1.msra.mxu0 0.0
    %598 = vmatprep.subr.mxu0 0.0
    %599 = vmatpush1.msra.mxu0 0.0
    %600 = vmatprep.subr.mxu0 0.0
    %601 = vmatpush1.msra.mxu0 0.0
    %602 = vmatprep.subr.mxu0 0.0
    %603 = vmatpush1.msra.mxu0 0.0
    %604 = vmatprep.mubr.f32.mxu0 0.0
    %605 = vmatmul.mubr.f32.gmra.mrb[0].mxu0 %v535
    %v606 = vpop.f32.mrb[0].mxu0
    %v607 = vadd.f32 0.0, %v606
    %v608 = vpop.f32.mrb[0].mxu0
    %609 = vdwg.mxu0
    %v611 = vsel %vm204, %v364, 0
    %v613 = vsel %vm537, %v199, 0
    %615 = vmatprep.subr.mxu0 0.0
    %616 = vmatpush1.msra.mxu0 %v613
    %617 = vmatprep.subr.mxu0 0.0
    %618 = vmatpush1.msra.mxu0 0.0
    %619 = vmatprep.subr.mxu0 0.0
    %620 = vmatpush1.msra.mxu0 0.0
    %621 = vmatprep.subr.mxu0 0.0
    %622 = vmatpush1.msra.mxu0 0.0
    %623 = vmatprep.subr.mxu0 0.0
    %624 = vmatpush1.msra.mxu0 0.0
    %625 = vmatprep.subr.mxu0 0.0
    %626 = vmatpush1.msra.mxu0 0.0
    %627 = vmatprep.subr.mxu0 0.0
    %628 = vmatpush1.msra.mxu0 0.0
    %629 = vmatprep.subr.mxu0 0.0
    %630 = vmatpush1.msra.mxu0 0.0
    %631 = vmatprep.subr.mxu0 0.0
    %632 = vmatpush1.msra.mxu0 0.0
    %633 = vmatprep.subr.mxu0 0.0
    %634 = vmatpush1.msra.mxu0 0.0
    %635 = vmatprep.subr.mxu0 0.0
    %636 = vmatpush1.msra.mxu0 0.0
    %637 = vmatprep.subr.mxu0 0.0
    %638 = vmatpush1.msra.mxu0 0.0
    %639 = vmatprep.subr.mxu0 0.0
    %640 = vmatpush1.msra.mxu0 0.0
    %641 = vmatprep.subr.mxu0 0.0
    %642 = vmatpush1.msra.mxu0 0.0
    %643 = vmatprep.subr.mxu0 0.0
    %644 = vmatpush1.msra.mxu0 0.0
    %645 = vmatprep.subr.mxu0 0.0
    %646 = vmatpush1.msra.mxu0 0.0
    %647 = vmatprep.subr.mxu0 0.0
    %648 = vmatpush1.msra.mxu0 0.0
    %649 = vmatprep.subr.mxu0 0.0
    %650 = vmatpush1.msra.mxu0 0.0
    %651 = vmatprep.subr.mxu0 0.0
    %652 = vmatpush1.msra.mxu0 0.0
    %653 = vmatprep.subr.mxu0 0.0
    %654 = vmatpush1.msra.mxu0 0.0
    %655 = vmatprep.subr.mxu0 0.0
    %656 = vmatpush1.msra.mxu0 0.0
    %657 = vmatprep.subr.mxu0 0.0
    %658 = vmatpush1.msra.mxu0 0.0
    %659 = vmatprep.subr.mxu0 0.0
    %660 = vmatpush1.msra.mxu0 0.0
    %661 = vmatprep.subr.mxu0 0.0
    %662 = vmatpush1.msra.mxu0 0.0
    %663 = vmatprep.subr.mxu0 0.0
    %664 = vmatpush1.msra.mxu0 0.0
    %665 = vmatprep.subr.mxu0 0.0
    %666 = vmatpush1.msra.mxu0 0.0
    %667 = vmatprep.subr.mxu0 0.0
    %668 = vmatpush1.msra.mxu0 0.0
    %669 = vmatprep.subr.mxu0 0.0
    %670 = vmatpush1.msra.mxu0 0.0
    %671 = vmatprep.subr.mxu0 0.0
    %672 = vmatpush1.msra.mxu0 0.0
    %673 = vmatprep.subr.mxu0 0.0
    %674 = vmatpush1.msra.mxu0 0.0
    %675 = vmatprep.subr.mxu0 0.0
    %676 = vmatpush1.msra.mxu0 0.0
    %677 = vmatprep.subr.mxu0 0.0
    %678 = vmatpush1.msra.mxu0 0.0
    %679 = vmatprep.mubr.f32.mxu0 0.0
    %680 = vmatmul.mubr.f32.gmra.mrb[0].mxu0 %v611
    %v681 = vpop.f32.mrb[0].mxu0
    %v682 = vadd.f32 %v607, %v681
    %v683 = vpop.f32.mrb[0].mxu0
    %684 = vdwg.mxu0
    %685 = vrot.lane.b32.xlu0 %v191, 120
    %v686 = vpop.permute.xlu0 %685
    %687 = vrot.lane.b32.xlu0 %v191, 104
    %v688 = vpop.permute.xlu0 %687
    %v689 = vsel %vm204, %v686, 0
    %v691 = vsel %vm204, %v688, 0
    %693 = vmatprep.subr.mxu0 0.0
    %694 = vmatpush1.xpose.msra.mxu0 %v691
    %695 = vmatprep.subr.mxu0 0.0
    %696 = vmatpush1.xpose.msra.mxu0 0.0
    %697 = vmatprep.subr.mxu0 0.0
    %698 = vmatpush1.xpose.msra.mxu0 0.0
    %699 = vmatprep.subr.mxu0 0.0
    %700 = vmatpush1.xpose.msra.mxu0 0.0
    %701 = vmatprep.subr.mxu0 0.0
    %702 = vmatpush1.xpose.msra.mxu0 0.0
    %703 = vmatprep.subr.mxu0 0.0
    %704 = vmatpush1.xpose.msra.mxu0 0.0
    %705 = vmatprep.subr.mxu0 0.0
    %706 = vmatpush1.xpose.msra.mxu0 0.0
    %707 = vmatprep.subr.mxu0 0.0
    %708 = vmatpush1.xpose.msra.mxu0 0.0
    %709 = vmatprep.subr.mxu0 0.0
    %710 = vmatpush1.xpose.msra.mxu0 0.0
    %711 = vmatprep.subr.mxu0 0.0
    %712 = vmatpush1.xpose.msra.mxu0 0.0
    %713 = vmatprep.subr.mxu0 0.0
    %714 = vmatpush1.xpose.msra.mxu0 0.0
    %715 = vmatprep.subr.mxu0 0.0
    %716 = vmatpush1.xpose.msra.mxu0 0.0
    %717 = vmatprep.subr.mxu0 0.0
    %718 = vmatpush1.xpose.msra.mxu0 0.0
    %719 = vmatprep.subr.mxu0 0.0
    %720 = vmatpush1.xpose.msra.mxu0 0.0
    %721 = vmatprep.subr.mxu0 0.0
    %722 = vmatpush1.xpose.msra.mxu0 0.0
    %723 = vmatprep.subr.mxu0 0.0
    %724 = vmatpush1.xpose.msra.mxu0 0.0
    %725 = vmatprep.subr.mxu0 0.0
    %726 = vmatpush1.xpose.msra.mxu0 0.0
    %727 = vmatprep.subr.mxu0 0.0
    %728 = vmatpush1.xpose.msra.mxu0 0.0
    %729 = vmatprep.subr.mxu0 0.0
    %730 = vmatpush1.xpose.msra.mxu0 0.0
    %731 = vmatprep.subr.mxu0 0.0
    %732 = vmatpush1.xpose.msra.mxu0 0.0
    %733 = vmatprep.subr.mxu0 0.0
    %734 = vmatpush1.xpose.msra.mxu0 0.0
    %735 = vmatprep.subr.mxu0 0.0
    %736 = vmatpush1.xpose.msra.mxu0 0.0
    %737 = vmatprep.subr.mxu0 0.0
    %738 = vmatpush1.xpose.msra.mxu0 0.0
    %739 = vmatprep.subr.mxu0 0.0
    %740 = vmatpush1.xpose.msra.mxu0 0.0
    %741 = vmatprep.subr.mxu0 0.0
    %742 = vmatpush1.xpose.msra.mxu0 0.0
    %743 = vmatprep.subr.mxu0 0.0
    %744 = vmatpush1.xpose.msra.mxu0 0.0
    %745 = vmatprep.subr.mxu0 0.0
    %746 = vmatpush1.xpose.msra.mxu0 0.0
    %747 = vmatprep.subr.mxu0 0.0
    %748 = vmatpush1.xpose.msra.mxu0 0.0
    %749 = vmatprep.subr.mxu0 0.0
    %750 = vmatpush1.xpose.msra.mxu0 0.0
    %751 = vmatprep.subr.mxu0 0.0
    %752 = vmatpush1.xpose.msra.mxu0 0.0
    %753 = vmatprep.subr.mxu0 0.0
    %754 = vmatpush1.xpose.msra.mxu0 0.0
    %755 = vmatprep.subr.mxu0 0.0
    %756 = vmatpush1.xpose.msra.mxu0 0.0
    %757 = vmatprep.mubr.f32.mxu0 0.0
    %758 = vmatmul.mubr.f32.gmra.mrb[0].mxu0 %v689
    %v759 = vpop.f32.mrb[0].mxu0
    %v760 = vadd.f32 0.0, %v759
    %v761 = vpop.f32.mrb[0].mxu0
    %762 = vdwg.mxu0
    %v763 = vsel %vm279, %v760, -inf
    %764 = vmax.xlane.f32.xlu0 %v763
    %v765 = vpop.xlane.xlu0 %764
    %v766 = vsub.f32 %v760, %v765
    %v767 = vmul.f32 %v766, 1.442695
    %v768 = vpow.pop %v767
    %v769 = vsel %vm279, %v768, 0.0
    %770 = vadd.xlane.f32.xlu0 %v769
    %v771 = vpop.xlane.xlu0 %770
    %v772 = vrcp.pop %v771
    %v773 = vmul.f32 %v768, %v772
    %774 = vrot.lane.b32.xlu0 %v191, 88
    %v775 = vpop.permute.xlu0 %774
    %v778 = vsel %vm279, %v773, 0
    %780 = vmatprep.subr.mxu0 0.0
    %781 = vmatpush1.msra.mxu0 %v775
    %782 = vmatprep.subr.mxu0 0.0
    %783 = vmatpush1.msra.mxu0 0.0
    %784 = vmatprep.subr.mxu0 0.0
    %785 = vmatpush1.msra.mxu0 0.0
    %786 = vmatprep.subr.mxu0 0.0
    %787 = vmatpush1.msra.mxu0 0.0
    %788 = vmatprep.subr.mxu0 0.0
    %789 = vmatpush1.msra.mxu0 0.0
    %790 = vmatprep.subr.mxu0 0.0
    %791 = vmatpush1.msra.mxu0 0.0
    %792 = vmatprep.subr.mxu0 0.0
    %793 = vmatpush1.msra.mxu0 0.0
    %794 = vmatprep.subr.mxu0 0.0
    %795 = vmatpush1.msra.mxu0 0.0
    %796 = vmatprep.subr.mxu0 0.0
    %797 = vmatpush1.msra.mxu0 0.0
    %798 = vmatprep.subr.mxu0 0.0
    %799 = vmatpush1.msra.mxu0 0.0
    %800 = vmatprep.subr.mxu0 0.0
    %801 = vmatpush1.msra.mxu0 0.0
    %802 = vmatprep.subr.mxu0 0.0
    %803 = vmatpush1.msra.mxu0 0.0
    %804 = vmatprep.subr.mxu0 0.0
    %805 = vmatpush1.msra.mxu0 0.0
    %806 = vmatprep.subr.mxu0 0.0
    %807 = vmatpush1.msra.mxu0 0.0
    %808 = vmatprep.subr.mxu0 0.0
    %809 = vmatpush1.msra.mxu0 0.0
    %810 = vmatprep.subr.mxu0 0.0
    %811 = vmatpush1.msra.mxu0 0.0
    %812 = vmatprep.subr.mxu0 0.0
    %813 = vmatpush1.msra.mxu0 0.0
    %814 = vmatprep.subr.mxu0 0.0
    %815 = vmatpush1.msra.mxu0 0.0
    %816 = vmatprep.subr.mxu0 0.0
    %817 = vmatpush1.msra.mxu0 0.0
    %818 = vmatprep.subr.mxu0 0.0
    %819 = vmatpush1.msra.mxu0 0.0
    %820 = vmatprep.subr.mxu0 0.0
    %821 = vmatpush1.msra.mxu0 0.0
    %822 = vmatprep.subr.mxu0 0.0
    %823 = vmatpush1.msra.mxu0 0.0
    %824 = vmatprep.subr.mxu0 0.0
    %825 = vmatpush1.msra.mxu0 0.0
    %826 = vmatprep.subr.mxu0 0.0
    %827 = vmatpush1.msra.mxu0 0.0
    %828 = vmatprep.subr.mxu0 0.0
    %829 = vmatpush1.msra.mxu0 0.0
    %830 = vmatprep.subr.mxu0 0.0
    %831 = vmatpush1.msra.mxu0 0.0
    %832 = vmatprep.subr.mxu0 0.0
    %833 = vmatpush1.msra.mxu0 0.0
    %834 = vmatprep.subr.mxu0 0.0
    %835 = vmatpush1.msra.mxu0 0.0
    %836 = vmatprep.subr.mxu0 0.0
    %837 = vmatpush1.msra.mxu0 0.0
    %838 = vmatprep.subr.mxu0 0.0
    %839 = vmatpush1.msra.mxu0 0.0
    %840 = vmatprep.subr.mxu0 0.0
    %841 = vmatpush1.msra.mxu0 0.0
    %842 = vmatprep.subr.mxu0 0.0
    %843 = vmatpush1.msra.mxu0 0.0
    %844 = vmatprep.mubr.f32.mxu0 0.0
    %845 = vmatmul.mubr.f32.gmra.mrb[0].mxu0 %v778
    %v846 = vpop.f32.mrb[0].mxu0
    %v847 = vadd.f32 0.0, %v846
    %v848 = vpop.f32.mrb[0].mxu0
    %849 = vdwg.mxu0
    %v851 = vsel %vm204, %v847, 0
    %v854 = vsel %vm537, %v200, 0
    %856 = vmatprep.subr.mxu0 0.0
    %857 = vmatpush1.msra.mxu0 %v854
    %858 = vmatprep.subr.mxu0 0.0
    %859 = vmatpush1.msra.mxu0 0.0
    %860 = vmatprep.subr.mxu0 0.0
    %861 = vmatpush1.msra.mxu0 0.0
    %862 = vmatprep.subr.mxu0 0.0
    %863 = vmatpush1.msra.mxu0 0.0
    %864 = vmatprep.subr.mxu0 0.0
    %865 = vmatpush1.msra.mxu0 0.0
    %866 = vmatprep.subr.mxu0 0.0
    %867 = vmatpush1.msra.mxu0 0.0
    %868 = vmatprep.subr.mxu0 0.0
    %869 = vmatpush1.msra.mxu0 0.0
    %870 = vmatprep.subr.mxu0 0.0
    %871 = vmatpush1.msra.mxu0 0.0
    %872 = vmatprep.subr.mxu0 0.0
    %873 = vmatpush1.msra.mxu0 0.0
    %874 = vmatprep.subr.mxu0 0.0
    %875 = vmatpush1.msra.mxu0 0.0
    %876 = vmatprep.subr.mxu0 0.0
    %877 = vmatpush1.msra.mxu0 0.0
    %878 = vmatprep.subr.mxu0 0.0
    %879 = vmatpush1.msra.mxu0 0.0
    %880 = vmatprep.subr.mxu0 0.0
    %881 = vmatpush1.msra.mxu0 0.0
    %882 = vmatprep.subr.mxu0 0.0
    %883 = vmatpush1.msra.mxu0 0.0
    %884 = vmatprep.subr.mxu0 0.0
    %885 = vmatpush1.msra.mxu0 0.0
    %886 = vmatprep.subr.mxu0 0.0
    %887 = vmatpush1.msra.mxu0 0.0
    %888 = vmatprep.subr.mxu0 0.0
    %889 = vmatpush1.msra.mxu0 0.0
    %890 = vmatprep.subr.mxu0 0.0
    %891 = vmatpush1.msra.mxu0 0.0
    %892 = vmatprep.subr.mxu0 0.0
    %893 = vmatpush1.msra.mxu0 0.0
    %894 = vmatprep.subr.mxu0 0.0
    %895 = vmatpush1.msra.mxu0 0.0
    %896 = vmatprep.subr.mxu0 0.0
    %897 = vmatpush1.msra.mxu0 0.0
    %898 = vmatprep.subr.mxu0 0.0
    %899 = vmatpush1.msra.mxu0 0.0
    %900 = vmatprep.subr.mxu0 0.0
    %901 = vmatpush1.msra.mxu0 0.0
    %902 = vmatprep.subr.mxu0 0.0
    %903 = vmatpush1.msra.mxu0 0.0
    %904 = vmatprep.subr.mxu0 0.0
    %905 = vmatpush1.msra.mxu0 0.0
    %906 = vmatprep.subr.mxu0 0.0
    %907 = vmatpush1.msra.mxu0 0.0
    %908 = vmatprep.subr.mxu0 0.0
    %909 = vmatpush1.msra.mxu0 0.0
    %910 = vmatprep.subr.mxu0 0.0
    %911 = vmatpush1.msra.mxu0 0.0
    %912 = vmatprep.subr.mxu0 0.0
    %913 = vmatpush1.msra.mxu0 0.0
    %914 = vmatprep.subr.mxu0 0.0
    %915 = vmatpush1.msra.mxu0 0.0
    %916 = vmatprep.subr.mxu0 0.0
    %917 = vmatpush1.msra.mxu0 0.0
    %918 = vmatprep.subr.mxu0 0.0
    %919 = vmatpush1.msra.mxu0 0.0
    %920 = vmatprep.mubr.f32.mxu0 0.0
    %921 = vmatmul.mubr.f32.gmra.mrb[0].mxu0 %v851
    %v922 = vpop.f32.mrb[0].mxu0
    %v923 = vadd.f32 0.0, %v922
    %v924 = vpop.f32.mrb[0].mxu0
    %925 = vdwg.mxu0
    %v926 = vadd.f32 %v682, %v923
    %927 = vrot.lane.b32.xlu0 %v191, 116
    %v928 = vpop.permute.xlu0 %927
    %929 = vrot.lane.b32.xlu0 %v191, 100
    %v930 = vpop.permute.xlu0 %929
    %v931 = vsel %vm204, %v928, 0
    %v933 = vsel %vm204, %v930, 0
    %935 = vmatprep.subr.mxu0 0.0
    %936 = vmatpush1.xpose.msra.mxu0 %v933
    %937 = vmatprep.subr.mxu0 0.0
    %938 = vmatpush1.xpose.msra.mxu0 0.0
    %939 = vmatprep.subr.mxu0 0.0
    %940 = vmatpush1.xpose.msra.mxu0 0.0
    %941 = vmatprep.subr.mxu0 0.0
    %942 = vmatpush1.xpose.msra.mxu0 0.0
    %943 = vmatprep.subr.mxu0 0.0
    %944 = vmatpush1.xpose.msra.mxu0 0.0
    %945 = vmatprep.subr.mxu0 0.0
    %946 = vmatpush1.xpose.msra.mxu0 0.0
    %947 = vmatprep.subr.mxu0 0.0
    %948 = vmatpush1.xpose.msra.mxu0 0.0
    %949 = vmatprep.subr.mxu0 0.0
    %950 = vmatpush1.xpose.msra.mxu0 0.0
    %951 = vmatprep.subr.mxu0 0.0
    %952 = vmatpush1.xpose.msra.mxu0 0.0
    %953 = vmatprep.subr.mxu0 0.0
    %954 = vmatpush1.xpose.msra.mxu0 0.0
    %955 = vmatprep.subr.mxu0 0.0
    %956 = vmatpush1.xpose.msra.mxu0 0.0
    %957 = vmatprep.subr.mxu0 0.0
    %958 = vmatpush1.xpose.msra.mxu0 0.0
    %959 = vmatprep.subr.mxu0 0.0
    %960 = vmatpush1.xpose.msra.mxu0 0.0
    %961 = vmatprep.subr.mxu0 0.0
    %962 = vmatpush1.xpose.msra.mxu0 0.0
    %963 = vmatprep.subr.mxu0 0.0
    %964 = vmatpush1.xpose.msra.mxu0 0.0
    %965 = vmatprep.subr.mxu0 0.0
    %966 = vmatpush1.xpose.msra.mxu0 0.0
    %967 = vmatprep.subr.mxu0 0.0
    %968 = vmatpush1.xpose.msra.mxu0 0.0
    %969 = vmatprep.subr.mxu0 0.0
    %970 = vmatpush1.xpose.msra.mxu0 0.0
    %971 = vmatprep.subr.mxu0 0.0
    %972 = vmatpush1.xpose.msra.mxu0 0.0
    %973 = vmatprep.subr.mxu0 0.0
    %974 = vmatpush1.xpose.msra.mxu0 0.0
    %975 = vmatprep.subr.mxu0 0.0
    %976 = vmatpush1.xpose.msra.mxu0 0.0
    %977 = vmatprep.subr.mxu0 0.0
    %978 = vmatpush1.xpose.msra.mxu0 0.0
    %979 = vmatprep.subr.mxu0 0.0
    %980 = vmatpush1.xpose.msra.mxu0 0.0
    %981 = vmatprep.subr.mxu0 0.0
    %982 = vmatpush1.xpose.msra.mxu0 0.0
    %983 = vmatprep.subr.mxu0 0.0
    %984 = vmatpush1.xpose.msra.mxu0 0.0
    %985 = vmatprep.subr.mxu0 0.0
    %986 = vmatpush1.xpose.msra.mxu0 0.0
    %987 = vmatprep.subr.mxu0 0.0
    %988 = vmatpush1.xpose.msra.mxu0 0.0
    %989 = vmatprep.subr.mxu0 0.0
    %990 = vmatpush1.xpose.msra.mxu0 0.0
    %991 = vmatprep.subr.mxu0 0.0
    %992 = vmatpush1.xpose.msra.mxu0 0.0
    %993 = vmatprep.subr.mxu0 0.0
    %994 = vmatpush1.xpose.msra.mxu0 0.0
    %995 = vmatprep.subr.mxu0 0.0
    %996 = vmatpush1.xpose.msra.mxu0 0.0
    %997 = vmatprep.subr.mxu0 0.0
    %998 = vmatpush1.xpose.msra.mxu0 0.0
    %999 = vmatprep.mubr.f32.mxu0 0.0
    %1000 = vmatmul.mubr.f32.gmra.mrb[0].mxu0 %v931
    %v1001 = vpop.f32.mrb[0].mxu0
    %v1002 = vadd.f32 0.0, %v1001
    %v1003 = vpop.f32.mrb[0].mxu0
    %1004 = vdwg.mxu0
    %v1005 = vsel %vm279, %v1002, -inf
    %1006 = vmax.xlane.f32.xlu0 %v1005
    %v1007 = vpop.xlane.xlu0 %1006
    %v1008 = vsub.f32 %v1002, %v1007
    %v1009 = vmul.f32 %v1008, 1.442695
    %v1010 = vpow.pop %v1009
    %v1011 = vsel %vm279, %v1010, 0.0
    %1012 = vadd.xlane.f32.xlu0 %v1011
    %v1013 = vpop.xlane.xlu0 %1012
    %v1014 = vrcp.pop %v1013
    %v1015 = vmul.f32 %v1010, %v1014
    %1016 = vrot.lane.b32.xlu0 %v191, 84
    %v1017 = vpop.permute.xlu0 %1016
    %v1020 = vsel %vm279, %v1015, 0
    %1022 = vmatprep.subr.mxu0 0.0
    %1023 = vmatpush1.msra.mxu0 %v1017
    %1024 = vmatprep.subr.mxu0 0.0
    %1025 = vmatpush1.msra.mxu0 0.0
    %1026 = vmatprep.subr.mxu0 0.0
    %1027 = vmatpush1.msra.mxu0 0.0
    %1028 = vmatprep.subr.mxu0 0.0
    %1029 = vmatpush1.msra.mxu0 0.0
    %1030 = vmatprep.subr.mxu0 0.0
    %1031 = vmatpush1.msra.mxu0 0.0
    %1032 = vmatprep.subr.mxu0 0.0
    %1033 = vmatpush1.msra.mxu0 0.0
    %1034 = vmatprep.subr.mxu0 0.0
    %1035 = vmatpush1.msra.mxu0 0.0
    %1036 = vmatprep.subr.mxu0 0.0
    %1037 = vmatpush1.msra.mxu0 0.0
    %1038 = vmatprep.subr.mxu0 0.0
    %1039 = vmatpush1.msra.mxu0 0.0
    %1040 = vmatprep.subr.mxu0 0.0
    %1041 = vmatpush1.msra.mxu0 0.0
    %1042 = vmatprep.subr.mxu0 0.0
    %1043 = vmatpush1.msra.mxu0 0.0
    %1044 = vmatprep.subr.mxu0 0.0
    %1045 = vmatpush1.msra.mxu0 0.0
    %1046 = vmatprep.subr.mxu0 0.0
    %1047 = vmatpush1.msra.mxu0 0.0
    %1048 = vmatprep.subr.mxu0 0.0
    %1049 = vmatpush1.msra.mxu0 0.0
    %1050 = vmatprep.subr.mxu0 0.0
    %1051 = vmatpush1.msra.mxu0 0.0
    %1052 = vmatprep.subr.mxu0 0.0
    %1053 = vmatpush1.msra.mxu0 0.0
    %1054 = vmatprep.subr.mxu0 0.0
    %1055 = vmatpush1.msra.mxu0 0.0
    %1056 = vmatprep.subr.mxu0 0.0
    %1057 = vmatpush1.msra.mxu0 0.0
    %1058 = vmatprep.subr.mxu0 0.0
    %1059 = vmatpush1.msra.mxu0 0.0
    %1060 = vmatprep.subr.mxu0 0.0
    %1061 = vmatpush1.msra.mxu0 0.0
    %1062 = vmatprep.subr.mxu0 0.0
    %1063 = vmatpush1.msra.mxu0 0.0
    %1064 = vmatprep.subr.mxu0 0.0
    %1065 = vmatpush1.msra.mxu0 0.0
    %1066 = vmatprep.subr.mxu0 0.0
    %1067 = vmatpush1.msra.mxu0 0.0
    %1068 = vmatprep.subr.mxu0 0.0
    %1069 = vmatpush1.msra.mxu0 0.0
    %1070 = vmatprep.subr.mxu0 0.0
    %1071 = vmatpush1.msra.mxu0 0.0
    %1072 = vmatprep.subr.mxu0 0.0
    %1073 = vmatpush1.msra.mxu0 0.0
    %1074 = vmatprep.subr.mxu0 0.0
    %1075 = vmatpush1.msra.mxu0 0.0
    %1076 = vmatprep.subr.mxu0 0.0
    %1077 = vmatpush1.msra.mxu0 0.0
    %1078 = vmatprep.subr.mxu0 0.0
    %1079 = vmatpush1.msra.mxu0 0.0
    %1080 = vmatprep.subr.mxu0 0.0
    %1081 = vmatpush1.msra.mxu0 0.0
    %1082 = vmatprep.subr.mxu0 0.0
    %1083 = vmatpush1.msra.mxu0 0.0
    %1084 = vmatprep.subr.mxu0 0.0
    %1085 = vmatpush1.msra.mxu0 0.0
    %1086 = vmatprep.mubr.f32.mxu0 0.0
    %1087 = vmatmul.mubr.f32.gmra.mrb[0].mxu0 %v1020
    %v1088 = vpop.f32.mrb[0].mxu0
    %v1089 = vadd.f32 0.0, %v1088
    %v1090 = vpop.f32.mrb[0].mxu0
    %1091 = vdwg.mxu0
    %v1092 = vrot.slane %v200, 4
    %v1094 = vsel %vm204, %v1089, 0
    %v1096 = vsel %vm537, %v1092, 0
    %1098 = vmatprep.subr.mxu0 0.0
    %1099 = vmatpush1.msra.mxu0 %v1096
    %1100 = vmatprep.subr.mxu0 0.0
    %1101 = vmatpush1.msra.mxu0 0.0
    %1102 = vmatprep.subr.mxu0 0.0
    %1103 = vmatpush1.msra.mxu0 0.0
    %1104 = vmatprep.subr.mxu0 0.0
    %1105 = vmatpush1.msra.mxu0 0.0
    %1106 = vmatprep.subr.mxu0 0.0
    %1107 = vmatpush1.msra.mxu0 0.0
    %1108 = vmatprep.subr.mxu0 0.0
    %1109 = vmatpush1.msra.mxu0 0.0
    %1110 = vmatprep.subr.mxu0 0.0
    %1111 = vmatpush1.msra.mxu0 0.0
    %1112 = vmatprep.subr.mxu0 0.0
    %1113 = vmatpush1.msra.mxu0 0.0
    %1114 = vmatprep.subr.mxu0 0.0
    %1115 = vmatpush1.msra.mxu0 0.0
    %1116 = vmatprep.subr.mxu0 0.0
    %1117 = vmatpush1.msra.mxu0 0.0
    %1118 = vmatprep.subr.mxu0 0.0
    %1119 = vmatpush1.msra.mxu0 0.0
    %1120 = vmatprep.subr.mxu0 0.0
    %1121 = vmatpush1.msra.mxu0 0.0
    %1122 = vmatprep.subr.mxu0 0.0
    %1123 = vmatpush1.msra.mxu0 0.0
    %1124 = vmatprep.subr.mxu0 0.0
    %1125 = vmatpush1.msra.mxu0 0.0
    %1126 = vmatprep.subr.mxu0 0.0
    %1127 = vmatpush1.msra.mxu0 0.0
    %1128 = vmatprep.subr.mxu0 0.0
    %1129 = vmatpush1.msra.mxu0 0.0
    %1130 = vmatprep.subr.mxu0 0.0
    %1131 = vmatpush1.msra.mxu0 0.0
    %1132 = vmatprep.subr.mxu0 0.0
    %1133 = vmatpush1.msra.mxu0 0.0
    %1134 = vmatprep.subr.mxu0 0.0
    %1135 = vmatpush1.msra.mxu0 0.0
    %1136 = vmatprep.subr.mxu0 0.0
    %1137 = vmatpush1.msra.mxu0 0.0
    %1138 = vmatprep.subr.mxu0 0.0
    %1139 = vmatpush1.msra.mxu0 0.0
    %1140 = vmatprep.subr.mxu0 0.0
    %1141 = vmatpush1.msra.mxu0 0.0
    %1142 = vmatprep.subr.mxu0 0.0
    %1143 = vmatpush1.msra.mxu0 0.0
    %1144 = vmatprep.subr.mxu0 0.0
    %1145 = vmatpush1.msra.mxu0 0.0
    %1146 = vmatprep.subr.mxu0 0.0
    %1147 = vmatpush1.msra.mxu0 0.0
    %1148 = vmatprep.subr.mxu0 0.0
    %1149 = vmatpush1.msra.mxu0 0.0
    %1150 = vmatprep.subr.mxu0 0.0
    %1151 = vmatpush1.msra.mxu0 0.0
    %1152 = vmatprep.subr.mxu0 0.0
    %1153 = vmatpush1.msra.mxu0 0.0
    %1154 = vmatprep.subr.mxu0 0.0
    %1155 = vmatpush1.msra.mxu0 0.0
    %1156 = vmatprep.subr.mxu0 0.0
    %1157 = vmatpush1.msra.mxu0 0.0
    %1158 = vmatprep.subr.mxu0 0.0
    %1159 = vmatpush1.msra.mxu0 0.0
    %1160 = vmatprep.subr.mxu0 0.0
    %1161 = vmatpush1.msra.mxu0 0.0
    %1162 = vmatprep.mubr.f32.mxu0 0.0
    %1163 = vmatmul.mubr.f32.gmra.mrb[0].mxu0 %v1094
    %v1164 = vpop.f32.mrb[0].mxu0
    %v1165 = vadd.f32 0.0, %v1164
    %v1166 = vpop.f32.mrb[0].mxu0
    %1167 = vdwg.mxu0
    %v1168 = vadd.f32 %v926, %v1165
    %1170 = vrot.lane.b32.xlu0 %v196, 112
    %v1171 = vpop.permute.xlu0 %1170
    %v1172 = vsel %vm204, %v196, 0
    %v1174 = vsel %vm204, %v1171, 0
    %1176 = vmatprep.subr.mxu0 0.0
    %1177 = vmatpush1.xpose.msra.mxu0 %v1174
    %1178 = vmatprep.subr.mxu0 0.0
    %1179 = vmatpush1.xpose.msra.mxu0 0.0
    %1180 = vmatprep.subr.mxu0 0.0
    %1181 = vmatpush1.xpose.msra.mxu0 0.0
    %1182 = vmatprep.subr.mxu0 0.0
    %1183 = vmatpush1.xpose.msra.mxu0 0.0
    %1184 = vmatprep.subr.mxu0 0.0
    %1185 = vmatpush1.xpose.msra.mxu0 0.0
    %1186 = vmatprep.subr.mxu0 0.0
    %1187 = vmatpush1.xpose.msra.mxu0 0.0
    %1188 = vmatprep.subr.mxu0 0.0
    %1189 = vmatpush1.xpose.msra.mxu0 0.0
    %1190 = vmatprep.subr.mxu0 0.0
    %1191 = vmatpush1.xpose.msra.mxu0 0.0
    %1192 = vmatprep.subr.mxu0 0.0
    %1193 = vmatpush1.xpose.msra.mxu0 0.0
    %1194 = vmatprep.subr.mxu0 0.0
    %1195 = vmatpush1.xpose.msra.mxu0 0.0
    %1196 = vmatprep.subr.mxu0 0.0
    %1197 = vmatpush1.xpose.msra.mxu0 0.0
    %1198 = vmatprep.subr.mxu0 0.0
    %1199 = vmatpush1.xpose.msra.mxu0 0.0
    %1200 = vmatprep.subr.mxu0 0.0
    %1201 = vmatpush1.xpose.msra.mxu0 0.0
    %1202 = vmatprep.subr.mxu0 0.0
    %1203 = vmatpush1.xpose.msra.mxu0 0.0
    %1204 = vmatprep.subr.mxu0 0.0
    %1205 = vmatpush1.xpose.msra.mxu0 0.0
    %1206 = vmatprep.subr.mxu0 0.0
    %1207 = vmatpush1.xpose.msra.mxu0 0.0
    %1208 = vmatprep.subr.mxu0 0.0
    %1209 = vmatpush1.xpose.msra.mxu0 0.0
    %1210 = vmatprep.subr.mxu0 0.0
    %1211 = vmatpush1.xpose.msra.mxu0 0.0
    %1212 = vmatprep.subr.mxu0 0.0
    %1213 = vmatpush1.xpose.msra.mxu0 0.0
    %1214 = vmatprep.subr.mxu0 0.0
    %1215 = vmatpush1.xpose.msra.mxu0 0.0
    %1216 = vmatprep.subr.mxu0 0.0
    %1217 = vmatpush1.xpose.msra.mxu0 0.0
    %1218 = vmatprep.subr.mxu0 0.0
    %1219 = vmatpush1.xpose.msra.mxu0 0.0
    %1220 = vmatprep.subr.mxu0 0.0
    %1221 = vmatpush1.xpose.msra.mxu0 0.0
    %1222 = vmatprep.subr.mxu0 0.0
    %1223 = vmatpush1.xpose.msra.mxu0 0.0
    %1224 = vmatprep.subr.mxu0 0.0
    %1225 = vmatpush1.xpose.msra.mxu0 0.0
    %1226 = vmatprep.subr.mxu0 0.0
    %1227 = vmatpush1.xpose.msra.mxu0 0.0
    %1228 = vmatprep.subr.mxu0 0.0
    %1229 = vmatpush1.xpose.msra.mxu0 0.0
    %1230 = vmatprep.subr.mxu0 0.0
    %1231 = vmatpush1.xpose.msra.mxu0 0.0
    %1232 = vmatprep.subr.mxu0 0.0
    %1233 = vmatpush1.xpose.msra.mxu0 0.0
    %1234 = vmatprep.subr.mxu0 0.0
    %1235 = vmatpush1.xpose.msra.mxu0 0.0
    %1236 = vmatprep.subr.mxu0 0.0
    %1237 = vmatpush1.xpose.msra.mxu0 0.0
    %1238 = vmatprep.subr.mxu0 0.0
    %1239 = vmatpush1.xpose.msra.mxu0 0.0
    %1240 = vmatprep.mubr.f32.mxu0 0.0
    %1241 = vmatmul.mubr.f32.gmra.mrb[0].mxu0 %v1172
    %v1242 = vpop.f32.mrb[0].mxu0
    %v1243 = vadd.f32 0.0, %v1242
    %v1244 = vpop.f32.mrb[0].mxu0
    %1245 = vdwg.mxu0
    %v1246 = vsel %vm279, %v1243, -inf
    %1247 = vmax.xlane.f32.xlu0 %v1246
    %v1248 = vpop.xlane.xlu0 %1247
    %v1249 = vsub.f32 %v1243, %v1248
    %v1250 = vmul.f32 %v1249, 1.442695
    %v1251 = vpow.pop %v1250
    %v1252 = vsel %vm279, %v1251, 0.0
    %1253 = vadd.xlane.f32.xlu0 %v1252
    %v1254 = vpop.xlane.xlu0 %1253
    %v1255 = vrcp.pop %v1254
    %v1256 = vmul.f32 %v1251, %v1255
    %1257 = vrot.lane.b32.xlu0 %v196, 96
    %v1258 = vpop.permute.xlu0 %1257
    %v1261 = vsel %vm279, %v1256, 0
    %1263 = vmatprep.subr.mxu0 0.0
    %1264 = vmatpush1.msra.mxu0 %v1258
    %1265 = vmatprep.subr.mxu0 0.0
    %1266 = vmatpush1.msra.mxu0 0.0
    %1267 = vmatprep.subr.mxu0 0.0
    %1268 = vmatpush1.msra.mxu0 0.0
    %1269 = vmatprep.subr.mxu0 0.0
    %1270 = vmatpush1.msra.mxu0 0.0
    %1271 = vmatprep.subr.mxu0 0.0
    %1272 = vmatpush1.msra.mxu0 0.0
    %1273 = vmatprep.subr.mxu0 0.0
    %1274 = vmatpush1.msra.mxu0 0.0
    %1275 = vmatprep.subr.mxu0 0.0
    %1276 = vmatpush1.msra.mxu0 0.0
    %1277 = vmatprep.subr.mxu0 0.0
    %1278 = vmatpush1.msra.mxu0 0.0
    %1279 = vmatprep.subr.mxu0 0.0
    %1280 = vmatpush1.msra.mxu0 0.0
    %1281 = vmatprep.subr.mxu0 0.0
    %1282 = vmatpush1.msra.mxu0 0.0
    %1283 = vmatprep.subr.mxu0 0.0
    %1284 = vmatpush1.msra.mxu0 0.0
    %1285 = vmatprep.subr.mxu0 0.0
    %1286 = vmatpush1.msra.mxu0 0.0
    %1287 = vmatprep.subr.mxu0 0.0
    %1288 = vmatpush1.msra.mxu0 0.0
    %1289 = vmatprep.subr.mxu0 0.0
    %1290 = vmatpush1.msra.mxu0 0.0
    %1291 = vmatprep.subr.mxu0 0.0
    %1292 = vmatpush1.msra.mxu0 0.0
    %1293 = vmatprep.subr.mxu0 0.0
    %1294 = vmatpush1.msra.mxu0 0.0
    %1295 = vmatprep.subr.mxu0 0.0
    %1296 = vmatpush1.msra.mxu0 0.0
    %1297 = vmatprep.subr.mxu0 0.0
    %1298 = vmatpush1.msra.mxu0 0.0
    %1299 = vmatprep.subr.mxu0 0.0
    %1300 = vmatpush1.msra.mxu0 0.0
    %1301 = vmatprep.subr.mxu0 0.0
    %1302 = vmatpush1.msra.mxu0 0.0
    %1303 = vmatprep.subr.mxu0 0.0
    %1304 = vmatpush1.msra.mxu0 0.0
    %1305 = vmatprep.subr.mxu0 0.0
    %1306 = vmatpush1.msra.mxu0 0.0
    %1307 = vmatprep.subr.mxu0 0.0
    %1308 = vmatpush1.msra.mxu0 0.0
    %1309 = vmatprep.subr.mxu0 0.0
    %1310 = vmatpush1.msra.mxu0 0.0
    %1311 = vmatprep.subr.mxu0 0.0
    %1312 = vmatpush1.msra.mxu0 0.0
    %1313 = vmatprep.subr.mxu0 0.0
    %1314 = vmatpush1.msra.mxu0 0.0
    %1315 = vmatprep.subr.mxu0 0.0
    %1316 = vmatpush1.msra.mxu0 0.0
    %1317 = vmatprep.subr.mxu0 0.0
    %1318 = vmatpush1.msra.mxu0 0.0
    %1319 = vmatprep.subr.mxu0 0.0
    %1320 = vmatpush1.msra.mxu0 0.0
    %1321 = vmatprep.subr.mxu0 0.0
    %1322 = vmatpush1.msra.mxu0 0.0
    %1323 = vmatprep.subr.mxu0 0.0
    %1324 = vmatpush1.msra.mxu0 0.0
    %1325 = vmatprep.subr.mxu0 0.0
    %1326 = vmatpush1.msra.mxu0 0.0
    %1327 = vmatprep.mubr.f32.mxu0 0.0
    %1328 = vmatmul.mubr.f32.gmra.mrb[0].mxu0 %v1261
    %v1329 = vpop.f32.mrb[0].mxu0
    %v1330 = vadd.f32 0.0, %v1329
    %v1331 = vpop.f32.mrb[0].mxu0
    %1332 = vdwg.mxu0
    %1333 = vrot.lane.b32.xlu0 %v196, 124
    %v1334 = vpop.permute.xlu0 %1333
    %1335 = vrot.lane.b32.xlu0 %v196, 108
    %v1336 = vpop.permute.xlu0 %1335
    %v1337 = vsel %vm204, %v1334, 0
    %v1339 = vsel %vm204, %v1336, 0
    %1341 = vmatprep.subr.mxu0 0.0
    %1342 = vmatpush1.xpose.msra.mxu0 %v1339
    %1343 = vmatprep.subr.mxu0 0.0
    %1344 = vmatpush1.xpose.msra.mxu0 0.0
    %1345 = vmatprep.subr.mxu0 0.0
    %1346 = vmatpush1.xpose.msra.mxu0 0.0
    %1347 = vmatprep.subr.mxu0 0.0
    %1348 = vmatpush1.xpose.msra.mxu0 0.0
    %1349 = vmatprep.subr.mxu0 0.0
    %1350 = vmatpush1.xpose.msra.mxu0 0.0
    %1351 = vmatprep.subr.mxu0 0.0
    %1352 = vmatpush1.xpose.msra.mxu0 0.0
    %1353 = vmatprep.subr.mxu0 0.0
    %1354 = vmatpush1.xpose.msra.mxu0 0.0
    %1355 = vmatprep.subr.mxu0 0.0
    %1356 = vmatpush1.xpose.msra.mxu0 0.0
    %1357 = vmatprep.subr.mxu0 0.0
    %1358 = vmatpush1.xpose.msra.mxu0 0.0
    %1359 = vmatprep.subr.mxu0 0.0
    %1360 = vmatpush1.xpose.msra.mxu0 0.0
    %1361 = vmatprep.subr.mxu0 0.0
    %1362 = vmatpush1.xpose.msra.mxu0 0.0
    %1363 = vmatprep.subr.mxu0 0.0
    %1364 = vmatpush1.xpose.msra.mxu0 0.0
    %1365 = vmatprep.subr.mxu0 0.0
    %1366 = vmatpush1.xpose.msra.mxu0 0.0
    %1367 = vmatprep.subr.mxu0 0.0
    %1368 = vmatpush1.xpose.msra.mxu0 0.0
    %1369 = vmatprep.subr.mxu0 0.0
    %1370 = vmatpush1.xpose.msra.mxu0 0.0
    %1371 = vmatprep.subr.mxu0 0.0
    %1372 = vmatpush1.xpose.msra.mxu0 0.0
    %1373 = vmatprep.subr.mxu0 0.0
    %1374 = vmatpush1.xpose.msra.mxu0 0.0
    %1375 = vmatprep.subr.mxu0 0.0
    %1376 = vmatpush1.xpose.msra.mxu0 0.0
    %1377 = vmatprep.subr.mxu0 0.0
    %1378 = vmatpush1.xpose.msra.mxu0 0.0
    %1379 = vmatprep.subr.mxu0 0.0
    %1380 = vmatpush1.xpose.msra.mxu0 0.0
    %1381 = vmatprep.subr.mxu0 0.0
    %1382 = vmatpush1.xpose.msra.mxu0 0.0
    %1383 = vmatprep.subr.mxu0 0.0
    %1384 = vmatpush1.xpose.msra.mxu0 0.0
    %1385 = vmatprep.subr.mxu0 0.0
    %1386 = vmatpush1.xpose.msra.mxu0 0.0
    %1387 = vmatprep.subr.mxu0 0.0
    %1388 = vmatpush1.xpose.msra.mxu0 0.0
    %1389 = vmatprep.subr.mxu0 0.0
    %1390 = vmatpush1.xpose.msra.mxu0 0.0
    %1391 = vmatprep.subr.mxu0 0.0
    %1392 = vmatpush1.xpose.msra.mxu0 0.0
    %1393 = vmatprep.subr.mxu0 0.0
    %1394 = vmatpush1.xpose.msra.mxu0 0.0
    %1395 = vmatprep.subr.mxu0 0.0
    %1396 = vmatpush1.xpose.msra.mxu0 0.0
    %1397 = vmatprep.subr.mxu0 0.0
    %1398 = vmatpush1.xpose.msra.mxu0 0.0
    %1399 = vmatprep.subr.mxu0 0.0
    %1400 = vmatpush1.xpose.msra.mxu0 0.0
    %1401 = vmatprep.subr.mxu0 0.0
    %1402 = vmatpush1.xpose.msra.mxu0 0.0
    %1403 = vmatprep.subr.mxu0 0.0
    %1404 = vmatpush1.xpose.msra.mxu0 0.0
    %1405 = vmatprep.mubr.f32.mxu0 0.0
    %1406 = vmatmul.mubr.f32.gmra.mrb[0].mxu0 %v1337
    %v1407 = vpop.f32.mrb[0].mxu0
    %v1408 = vadd.f32 0.0, %v1407
    %v1409 = vpop.f32.mrb[0].mxu0
    %1410 = vdwg.mxu0
    %v1411 = vsel %vm279, %v1408, -inf
    %1412 = vmax.xlane.f32.xlu0 %v1411
    %v1413 = vpop.xlane.xlu0 %1412
    %v1414 = vsub.f32 %v1408, %v1413
    %v1415 = vmul.f32 %v1414, 1.442695
    %v1416 = vpow.pop %v1415
    %v1417 = vsel %vm279, %v1416, 0.0
    %1418 = vadd.xlane.f32.xlu0 %v1417
    %v1419 = vpop.xlane.xlu0 %1418
    %v1420 = vrcp.pop %v1419
    %v1421 = vmul.f32 %v1416, %v1420
    %1422 = vrot.lane.b32.xlu0 %v196, 92
    %v1423 = vpop.permute.xlu0 %1422
    %v1426 = vsel %vm279, %v1421, 0
    %1428 = vmatprep.subr.mxu0 0.0
    %1429 = vmatpush1.msra.mxu0 %v1423
    %1430 = vmatprep.subr.mxu0 0.0
    %1431 = vmatpush1.msra.mxu0 0.0
    %1432 = vmatprep.subr.mxu0 0.0
    %1433 = vmatpush1.msra.mxu0 0.0
    %1434 = vmatprep.subr.mxu0 0.0
    %1435 = vmatpush1.msra.mxu0 0.0
    %1436 = vmatprep.subr.mxu0 0.0
    %1437 = vmatpush1.msra.mxu0 0.0
    %1438 = vmatprep.subr.mxu0 0.0
    %1439 = vmatpush1.msra.mxu0 0.0
    %1440 = vmatprep.subr.mxu0 0.0
    %1441 = vmatpush1.msra.mxu0 0.0
    %1442 = vmatprep.subr.mxu0 0.0
    %1443 = vmatpush1.msra.mxu0 0.0
    %1444 = vmatprep.subr.mxu0 0.0
    %1445 = vmatpush1.msra.mxu0 0.0
    %1446 = vmatprep.subr.mxu0 0.0
    %1447 = vmatpush1.msra.mxu0 0.0
    %1448 = vmatprep.subr.mxu0 0.0
    %1449 = vmatpush1.msra.mxu0 0.0
    %1450 = vmatprep.subr.mxu0 0.0
    %1451 = vmatpush1.msra.mxu0 0.0
    %1452 = vmatprep.subr.mxu0 0.0
    %1453 = vmatpush1.msra.mxu0 0.0
    %1454 = vmatprep.subr.mxu0 0.0
    %1455 = vmatpush1.msra.mxu0 0.0
    %1456 = vmatprep.subr.mxu0 0.0
    %1457 = vmatpush1.msra.mxu0 0.0
    %1458 = vmatprep.subr.mxu0 0.0
    %1459 = vmatpush1.msra.mxu0 0.0
    %1460 = vmatprep.subr.mxu0 0.0
    %1461 = vmatpush1.msra.mxu0 0.0
    %1462 = vmatprep.subr.mxu0 0.0
    %1463 = vmatpush1.msra.mxu0 0.0
    %1464 = vmatprep.subr.mxu0 0.0
    %1465 = vmatpush1.msra.mxu0 0.0
    %1466 = vmatprep.subr.mxu0 0.0
    %1467 = vmatpush1.msra.mxu0 0.0
    %1468 = vmatprep.subr.mxu0 0.0
    %1469 = vmatpush1.msra.mxu0 0.0
    %1470 = vmatprep.subr.mxu0 0.0
    %1471 = vmatpush1.msra.mxu0 0.0
    %1472 = vmatprep.subr.mxu0 0.0
    %1473 = vmatpush1.msra.mxu0 0.0
    %1474 = vmatprep.subr.mxu0 0.0
    %1475 = vmatpush1.msra.mxu0 0.0
    %1476 = vmatprep.subr.mxu0 0.0
    %1477 = vmatpush1.msra.mxu0 0.0
    %1478 = vmatprep.subr.mxu0 0.0
    %1479 = vmatpush1.msra.mxu0 0.0
    %1480 = vmatprep.subr.mxu0 0.0
    %1481 = vmatpush1.msra.mxu0 0.0
    %1482 = vmatprep.subr.mxu0 0.0
    %1483 = vmatpush1.msra.mxu0 0.0
    %1484 = vmatprep.subr.mxu0 0.0
    %1485 = vmatpush1.msra.mxu0 0.0
    %1486 = vmatprep.subr.mxu0 0.0
    %1487 = vmatpush1.msra.mxu0 0.0
    %1488 = vmatprep.subr.mxu0 0.0
    %1489 = vmatpush1.msra.mxu0 0.0
    %1490 = vmatprep.subr.mxu0 0.0
    %1491 = vmatpush1.msra.mxu0 0.0
    %1492 = vmatprep.mubr.f32.mxu0 0.0
    %1493 = vmatmul.mubr.f32.gmra.mrb[0].mxu0 %v1426
    %v1494 = vpop.f32.mrb[0].mxu0
    %v1495 = vadd.f32 0.0, %v1494
    %v1496 = vpop.f32.mrb[0].mxu0
    %1497 = vdwg.mxu0
    %v1499 = vsel %vm204, %v1495, 0
    %1501 = vmatprep.subr.mxu0 0.0
    %1502 = vmatpush1.msra.mxu0 %v538
    %1503 = vmatprep.subr.mxu0 0.0
    %1504 = vmatpush1.msra.mxu0 0.0
    %1505 = vmatprep.subr.mxu0 0.0
    %1506 = vmatpush1.msra.mxu0 0.0
    %1507 = vmatprep.subr.mxu0 0.0
    %1508 = vmatpush1.msra.mxu0 0.0
    %1509 = vmatprep.subr.mxu0 0.0
    %1510 = vmatpush1.msra.mxu0 0.0
    %1511 = vmatprep.subr.mxu0 0.0
    %1512 = vmatpush1.msra.mxu0 0.0
    %1513 = vmatprep.subr.mxu0 0.0
    %1514 = vmatpush1.msra.mxu0 0.0
    %1515 = vmatprep.subr.mxu0 0.0
    %1516 = vmatpush1.msra.mxu0 0.0
    %1517 = vmatprep.subr.mxu0 0.0
    %1518 = vmatpush1.msra.mxu0 0.0
    %1519 = vmatprep.subr.mxu0 0.0
    %1520 = vmatpush1.msra.mxu0 0.0
    %1521 = vmatprep.subr.mxu0 0.0
    %1522 = vmatpush1.msra.mxu0 0.0
    %1523 = vmatprep.subr.mxu0 0.0
    %1524 = vmatpush1.msra.mxu0 0.0
    %1525 = vmatprep.subr.mxu0 0.0
    %1526 = vmatpush1.msra.mxu0 0.0
    %1527 = vmatprep.subr.mxu0 0.0
    %1528 = vmatpush1.msra.mxu0 0.0
    %1529 = vmatprep.subr.mxu0 0.0
    %1530 = vmatpush1.msra.mxu0 0.0
    %1531 = vmatprep.subr.mxu0 0.0
    %1532 = vmatpush1.msra.mxu0 0.0
    %1533 = vmatprep.subr.mxu0 0.0
    %1534 = vmatpush1.msra.mxu0 0.0
    %1535 = vmatprep.subr.mxu0 0.0
    %1536 = vmatpush1.msra.mxu0 0.0
    %1537 = vmatprep.subr.mxu0 0.0
    %1538 = vmatpush1.msra.mxu0 0.0
    %1539 = vmatprep.subr.mxu0 0.0
    %1540 = vmatpush1.msra.mxu0 0.0
    %1541 = vmatprep.subr.mxu0 0.0
    %1542 = vmatpush1.msra.mxu0 0.0
    %1543 = vmatprep.subr.mxu0 0.0
    %1544 = vmatpush1.msra.mxu0 0.0
    %1545 = vmatprep.subr.mxu0 0.0
    %1546 = vmatpush1.msra.mxu0 0.0
    %1547 = vmatprep.subr.mxu0 0.0
    %1548 = vmatpush1.msra.mxu0 0.0
    %1549 = vmatprep.subr.mxu0 0.0
    %1550 = vmatpush1.msra.mxu0 0.0
    %1551 = vmatprep.subr.mxu0 0.0
    %1552 = vmatpush1.msra.mxu0 0.0
    %1553 = vmatprep.subr.mxu0 0.0
    %1554 = vmatpush1.msra.mxu0 0.0
    %1555 = vmatprep.subr.mxu0 0.0
    %1556 = vmatpush1.msra.mxu0 0.0
    %1557 = vmatprep.subr.mxu0 0.0
    %1558 = vmatpush1.msra.mxu0 0.0
    %1559 = vmatprep.subr.mxu0 0.0
    %1560 = vmatpush1.msra.mxu0 0.0
    %1561 = vmatprep.subr.mxu0 0.0
    %1562 = vmatpush1.msra.mxu0 0.0
    %1563 = vmatprep.subr.mxu0 0.0
    %1564 = vmatpush1.msra.mxu0 0.0
    %1565 = vmatprep.mubr.f32.mxu0 0.0
    %1566 = vmatmul.mubr.f32.gmra.mrb[0].mxu0 %v1499
    %v1567 = vpop.f32.mrb[0].mxu0
    %v1568 = vadd.f32 0.0, %v1567
    %v1569 = vpop.f32.mrb[0].mxu0
    %1570 = vdwg.mxu0
    %v1572 = vsel %vm204, %v1330, 0
    %1574 = vmatprep.subr.mxu0 0.0
    %1575 = vmatpush1.msra.mxu0 %v613
    %1576 = vmatprep.subr.mxu0 0.0
    %1577 = vmatpush1.msra.mxu0 0.0
    %1578 = vmatprep.subr.mxu0 0.0
    %1579 = vmatpush1.msra.mxu0 0.0
    %1580 = vmatprep.subr.mxu0 0.0
    %1581 = vmatpush1.msra.mxu0 0.0
    %1582 = vmatprep.subr.mxu0 0.0
    %1583 = vmatpush1.msra.mxu0 0.0
    %1584 = vmatprep.subr.mxu0 0.0
    %1585 = vmatpush1.msra.mxu0 0.0
    %1586 = vmatprep.subr.mxu0 0.0
    %1587 = vmatpush1.msra.mxu0 0.0
    %1588 = vmatprep.subr.mxu0 0.0
    %1589 = vmatpush1.msra.mxu0 0.0
    %1590 = vmatprep.subr.mxu0 0.0
    %1591 = vmatpush1.msra.mxu0 0.0
    %1592 = vmatprep.subr.mxu0 0.0
    %1593 = vmatpush1.msra.mxu0 0.0
    %1594 = vmatprep.subr.mxu0 0.0
    %1595 = vmatpush1.msra.mxu0 0.0
    %1596 = vmatprep.subr.mxu0 0.0
    %1597 = vmatpush1.msra.mxu0 0.0
    %1598 = vmatprep.subr.mxu0 0.0
    %1599 = vmatpush1.msra.mxu0 0.0
    %1600 = vmatprep.subr.mxu0 0.0
    %1601 = vmatpush1.msra.mxu0 0.0
    %1602 = vmatprep.subr.mxu0 0.0
    %1603 = vmatpush1.msra.mxu0 0.0
    %1604 = vmatprep.subr.mxu0 0.0
    %1605 = vmatpush1.msra.mxu0 0.0
    %1606 = vmatprep.subr.mxu0 0.0
    %1607 = vmatpush1.msra.mxu0 0.0
    %1608 = vmatprep.subr.mxu0 0.0
    %1609 = vmatpush1.msra.mxu0 0.0
    %1610 = vmatprep.subr.mxu0 0.0
    %1611 = vmatpush1.msra.mxu0 0.0
    %1612 = vmatprep.subr.mxu0 0.0
    %1613 = vmatpush1.msra.mxu0 0.0
    %1614 = vmatprep.subr.mxu0 0.0
    %1615 = vmatpush1.msra.mxu0 0.0
    %1616 = vmatprep.subr.mxu0 0.0
    %1617 = vmatpush1.msra.mxu0 0.0
    %1618 = vmatprep.subr.mxu0 0.0
    %1619 = vmatpush1.msra.mxu0 0.0
    %1620 = vmatprep.subr.mxu0 0.0
    %1621 = vmatpush1.msra.mxu0 0.0
    %1622 = vmatprep.subr.mxu0 0.0
    %1623 = vmatpush1.msra.mxu0 0.0
    %1624 = vmatprep.subr.mxu0 0.0
    %1625 = vmatpush1.msra.mxu0 0.0
    %1626 = vmatprep.subr.mxu0 0.0
    %1627 = vmatpush1.msra.mxu0 0.0
    %1628 = vmatprep.subr.mxu0 0.0
    %1629 = vmatpush1.msra.mxu0 0.0
    %1630 = vmatprep.subr.mxu0 0.0
    %1631 = vmatpush1.msra.mxu0 0.0
    %1632 = vmatprep.subr.mxu0 0.0
    %1633 = vmatpush1.msra.mxu0 0.0
    %1634 = vmatprep.subr.mxu0 0.0
    %1635 = vmatpush1.msra.mxu0 0.0
    %1636 = vmatprep.subr.mxu0 0.0
    %1637 = vmatpush1.msra.mxu0 0.0
    %1638 = vmatprep.mubr.f32.mxu0 0.0
    %1639 = vmatmul.mubr.f32.gmra.mrb[0].mxu0 %v1572
    %v1640 = vpop.f32.mrb[0].mxu0
    %v1641 = vadd.f32 %v1568, %v1640
    %v1642 = vpop.f32.mrb[0].mxu0
    %1643 = vdwg.mxu0
    %1644 = vrot.lane.b32.xlu0 %v196, 120
    %v1645 = vpop.permute.xlu0 %1644
    %1646 = vrot.lane.b32.xlu0 %v196, 104
    %v1647 = vpop.permute.xlu0 %1646
    %v1648 = vsel %vm204, %v1645, 0
    %v1650 = vsel %vm204, %v1647, 0
    %1652 = vmatprep.subr.mxu0 0.0
    %1653 = vmatpush1.xpose.msra.mxu0 %v1650
    %1654 = vmatprep.subr.mxu0 0.0
    %1655 = vmatpush1.xpose.msra.mxu0 0.0
    %1656 = vmatprep.subr.mxu0 0.0
    %1657 = vmatpush1.xpose.msra.mxu0 0.0
    %1658 = vmatprep.subr.mxu0 0.0
    %1659 = vmatpush1.xpose.msra.mxu0 0.0
    %1660 = vmatprep.subr.mxu0 0.0
    %1661 = vmatpush1.xpose.msra.mxu0 0.0
    %1662 = vmatprep.subr.mxu0 0.0
    %1663 = vmatpush1.xpose.msra.mxu0 0.0
    %1664 = vmatprep.subr.mxu0 0.0
    %1665 = vmatpush1.xpose.msra.mxu0 0.0
    %1666 = vmatprep.subr.mxu0 0.0
    %1667 = vmatpush1.xpose.msra.mxu0 0.0
    %1668 = vmatprep.subr.mxu0 0.0
    %1669 = vmatpush1.xpose.msra.mxu0 0.0
    %1670 = vmatprep.subr.mxu0 0.0
    %1671 = vmatpush1.xpose.msra.mxu0 0.0
    %1672 = vmatprep.subr.mxu0 0.0
    %1673 = vmatpush1.xpose.msra.mxu0 0.0
    %1674 = vmatprep.subr.mxu0 0.0
    %1675 = vmatpush1.xpose.msra.mxu0 0.0
    %1676 = vmatprep.subr.mxu0 0.0
    %1677 = vmatpush1.xpose.msra.mxu0 0.0
    %1678 = vmatprep.subr.mxu0 0.0
    %1679 = vmatpush1.xpose.msra.mxu0 0.0
    %1680 = vmatprep.subr.mxu0 0.0
    %1681 = vmatpush1.xpose.msra.mxu0 0.0
    %1682 = vmatprep.subr.mxu0 0.0
    %1683 = vmatpush1.xpose.msra.mxu0 0.0
    %1684 = vmatprep.subr.mxu0 0.0
    %1685 = vmatpush1.xpose.msra.mxu0 0.0
    %1686 = vmatprep.subr.mxu0 0.0
    %1687 = vmatpush1.xpose.msra.mxu0 0.0
    %1688 = vmatprep.subr.mxu0 0.0
    %1689 = vmatpush1.xpose.msra.mxu0 0.0
    %1690 = vmatprep.subr.mxu0 0.0
    %1691 = vmatpush1.xpose.msra.mxu0 0.0
    %1692 = vmatprep.subr.mxu0 0.0
    %1693 = vmatpush1.xpose.msra.mxu0 0.0
    %1694 = vmatprep.subr.mxu0 0.0
    %1695 = vmatpush1.xpose.msra.mxu0 0.0
    %1696 = vmatprep.subr.mxu0 0.0
    %1697 = vmatpush1.xpose.msra.mxu0 0.0
    %1698 = vmatprep.subr.mxu0 0.0
    %1699 = vmatpush1.xpose.msra.mxu0 0.0
    %1700 = vmatprep.subr.mxu0 0.0
    %1701 = vmatpush1.xpose.msra.mxu0 0.0
    %1702 = vmatprep.subr.mxu0 0.0
    %1703 = vmatpush1.xpose.msra.mxu0 0.0
    %1704 = vmatprep.subr.mxu0 0.0
    %1705 = vmatpush1.xpose.msra.mxu0 0.0
    %1706 = vmatprep.subr.mxu0 0.0
    %1707 = vmatpush1.xpose.msra.mxu0 0.0
    %1708 = vmatprep.subr.mxu0 0.0
    %1709 = vmatpush1.xpose.msra.mxu0 0.0
    %1710 = vmatprep.subr.mxu0 0.0
    %1711 = vmatpush1.xpose.msra.mxu0 0.0
    %1712 = vmatprep.subr.mxu0 0.0
    %1713 = vmatpush1.xpose.msra.mxu0 0.0
    %1714 = vmatprep.subr.mxu0 0.0
    %1715 = vmatpush1.xpose.msra.mxu0 0.0
    %1716 = vmatprep.mubr.f32.mxu0 0.0
    %1717 = vmatmul.mubr.f32.gmra.mrb[0].mxu0 %v1648
    %v1718 = vpop.f32.mrb[0].mxu0
    %v1719 = vadd.f32 0.0, %v1718
    %v1720 = vpop.f32.mrb[0].mxu0
    %1721 = vdwg.mxu0
    %v1722 = vsel %vm279, %v1719, -inf
    %1723 = vmax.xlane.f32.xlu0 %v1722
    %v1724 = vpop.xlane.xlu0 %1723
    %v1725 = vsub.f32 %v1719, %v1724
    %v1726 = vmul.f32 %v1725, 1.442695
    %v1727 = vpow.pop %v1726
    %v1728 = vsel %vm279, %v1727, 0.0
    %1729 = vadd.xlane.f32.xlu0 %v1728
    %v1730 = vpop.xlane.xlu0 %1729
    %v1731 = vrcp.pop %v1730
    %v1732 = vmul.f32 %v1727, %v1731
    %1733 = vrot.lane.b32.xlu0 %v196, 88
    %v1734 = vpop.permute.xlu0 %1733
    %v1737 = vsel %vm279, %v1732, 0
    %1739 = vmatprep.subr.mxu0 0.0
    %1740 = vmatpush1.msra.mxu0 %v1734
    %1741 = vmatprep.subr.mxu0 0.0
    %1742 = vmatpush1.msra.mxu0 0.0
    %1743 = vmatprep.subr.mxu0 0.0
    %1744 = vmatpush1.msra.mxu0 0.0
    %1745 = vmatprep.subr.mxu0 0.0
    %1746 = vmatpush1.msra.mxu0 0.0
    %1747 = vmatprep.subr.mxu0 0.0
    %1748 = vmatpush1.msra.mxu0 0.0
    %1749 = vmatprep.subr.mxu0 0.0
    %1750 = vmatpush1.msra.mxu0 0.0
    %1751 = vmatprep.subr.mxu0 0.0
    %1752 = vmatpush1.msra.mxu0 0.0
    %1753 = vmatprep.subr.mxu0 0.0
    %1754 = vmatpush1.msra.mxu0 0.0
    %1755 = vmatprep.subr.mxu0 0.0
    %1756 = vmatpush1.msra.mxu0 0.0
    %1757 = vmatprep.subr.mxu0 0.0
    %1758 = vmatpush1.msra.mxu0 0.0
    %1759 = vmatprep.subr.mxu0 0.0
    %1760 = vmatpush1.msra.mxu0 0.0
    %1761 = vmatprep.subr.mxu0 0.0
    %1762 = vmatpush1.msra.mxu0 0.0
    %1763 = vmatprep.subr.mxu0 0.0
    %1764 = vmatpush1.msra.mxu0 0.0
    %1765 = vmatprep.subr.mxu0 0.0
    %1766 = vmatpush1.msra.mxu0 0.0
    %1767 = vmatprep.subr.mxu0 0.0
    %1768 = vmatpush1.msra.mxu0 0.0
    %1769 = vmatprep.subr.mxu0 0.0
    %1770 = vmatpush1.msra.mxu0 0.0
    %1771 = vmatprep.subr.mxu0 0.0
    %1772 = vmatpush1.msra.mxu0 0.0
    %1773 = vmatprep.subr.mxu0 0.0
    %1774 = vmatpush1.msra.mxu0 0.0
    %1775 = vmatprep.subr.mxu0 0.0
    %1776 = vmatpush1.msra.mxu0 0.0
    %1777 = vmatprep.subr.mxu0 0.0
    %1778 = vmatpush1.msra.mxu0 0.0
    %1779 = vmatprep.subr.mxu0 0.0
    %1780 = vmatpush1.msra.mxu0 0.0
    %1781 = vmatprep.subr.mxu0 0.0
    %1782 = vmatpush1.msra.mxu0 0.0
    %1783 = vmatprep.subr.mxu0 0.0
    %1784 = vmatpush1.msra.mxu0 0.0
    %1785 = vmatprep.subr.mxu0 0.0
    %1786 = vmatpush1.msra.mxu0 0.0
    %1787 = vmatprep.subr.mxu0 0.0
    %1788 = vmatpush1.msra.mxu0 0.0
    %1789 = vmatprep.subr.mxu0 0.0
    %1790 = vmatpush1.msra.mxu0 0.0
    %1791 = vmatprep.subr.mxu0 0.0
    %1792 = vmatpush1.msra.mxu0 0.0
    %1793 = vmatprep.subr.mxu0 0.0
    %1794 = vmatpush1.msra.mxu0 0.0
    %1795 = vmatprep.subr.mxu0 0.0
    %1796 = vmatpush1.msra.mxu0 0.0
    %1797 = vmatprep.subr.mxu0 0.0
    %1798 = vmatpush1.msra.mxu0 0.0
    %1799 = vmatprep.subr.mxu0 0.0
    %1800 = vmatpush1.msra.mxu0 0.0
    %1801 = vmatprep.subr.mxu0 0.0
    %1802 = vmatpush1.msra.mxu0 0.0
    %1803 = vmatprep.mubr.f32.mxu0 0.0
    %1804 = vmatmul.mubr.f32.gmra.mrb[0].mxu0 %v1737
    %v1805 = vpop.f32.mrb[0].mxu0
    %v1806 = vadd.f32 0.0, %v1805
    %v1807 = vpop.f32.mrb[0].mxu0
    %1808 = vdwg.mxu0
    %v1810 = vsel %vm204, %v1806, 0
    %1812 = vmatprep.subr.mxu0 0.0
    %1813 = vmatpush1.msra.mxu0 %v854
    %1814 = vmatprep.subr.mxu0 0.0
    %1815 = vmatpush1.msra.mxu0 0.0
    %1816 = vmatprep.subr.mxu0 0.0
    %1817 = vmatpush1.msra.mxu0 0.0
    %1818 = vmatprep.subr.mxu0 0.0
    %1819 = vmatpush1.msra.mxu0 0.0
    %1820 = vmatprep.subr.mxu0 0.0
    %1821 = vmatpush1.msra.mxu0 0.0
    %1822 = vmatprep.subr.mxu0 0.0
    %1823 = vmatpush1.msra.mxu0 0.0
    %1824 = vmatprep.subr.mxu0 0.0
    %1825 = vmatpush1.msra.mxu0 0.0
    %1826 = vmatprep.subr.mxu0 0.0
    %1827 = vmatpush1.msra.mxu0 0.0
    %1828 = vmatprep.subr.mxu0 0.0
    %1829 = vmatpush1.msra.mxu0 0.0
    %1830 = vmatprep.subr.mxu0 0.0
    %1831 = vmatpush1.msra.mxu0 0.0
    %1832 = vmatprep.subr.mxu0 0.0
    %1833 = vmatpush1.msra.mxu0 0.0
    %1834 = vmatprep.subr.mxu0 0.0
    %1835 = vmatpush1.msra.mxu0 0.0
    %1836 = vmatprep.subr.mxu0 0.0
    %1837 = vmatpush1.msra.mxu0 0.0
    %1838 = vmatprep.subr.mxu0 0.0
    %1839 = vmatpush1.msra.mxu0 0.0
    %1840 = vmatprep.subr.mxu0 0.0
    %1841 = vmatpush1.msra.mxu0 0.0
    %1842 = vmatprep.subr.mxu0 0.0
    %1843 = vmatpush1.msra.mxu0 0.0
    %1844 = vmatprep.subr.mxu0 0.0
    %1845 = vmatpush1.msra.mxu0 0.0
    %1846 = vmatprep.subr.mxu0 0.0
    %1847 = vmatpush1.msra.mxu0 0.0
    %1848 = vmatprep.subr.mxu0 0.0
    %1849 = vmatpush1.msra.mxu0 0.0
    %1850 = vmatprep.subr.mxu0 0.0
    %1851 = vmatpush1.msra.mxu0 0.0
    %1852 = vmatprep.subr.mxu0 0.0
    %1853 = vmatpush1.msra.mxu0 0.0
    %1854 = vmatprep.subr.mxu0 0.0
    %1855 = vmatpush1.msra.mxu0 0.0
    %1856 = vmatprep.subr.mxu0 0.0
    %1857 = vmatpush1.msra.mxu0 0.0
    %1858 = vmatprep.subr.mxu0 0.0
    %1859 = vmatpush1.msra.mxu0 0.0
    %1860 = vmatprep.subr.mxu0 0.0
    %1861 = vmatpush1.msra.mxu0 0.0
    %1862 = vmatprep.subr.mxu0 0.0
    %1863 = vmatpush1.msra.mxu0 0.0
    %1864 = vmatprep.subr.mxu0 0.0
    %1865 = vmatpush1.msra.mxu0 0.0
    %1866 = vmatprep.subr.mxu0 0.0
    %1867 = vmatpush1.msra.mxu0 0.0
    %1868 = vmatprep.subr.mxu0 0.0
    %1869 = vmatpush1.msra.mxu0 0.0
    %1870 = vmatprep.subr.mxu0 0.0
    %1871 = vmatpush1.msra.mxu0 0.0
    %1872 = vmatprep.subr.mxu0 0.0
    %1873 = vmatpush1.msra.mxu0 0.0
    %1874 = vmatprep.subr.mxu0 0.0
    %1875 = vmatpush1.msra.mxu0 0.0
    %1876 = vmatprep.mubr.f32.mxu0 0.0
    %1877 = vmatmul.mubr.f32.gmra.mrb[0].mxu0 %v1810
    %v1878 = vpop.f32.mrb[0].mxu0
    %v1879 = vadd.f32 0.0, %v1878
    %v1880 = vpop.f32.mrb[0].mxu0
    %1881 = vdwg.mxu0
    %v1882 = vadd.f32 %v1641, %v1879
    %1883 = vrot.lane.b32.xlu0 %v196, 116
    %v1884 = vpop.permute.xlu0 %1883
    %1885 = vrot.lane.b32.xlu0 %v196, 100
    %v1886 = vpop.permute.xlu0 %1885
    %v1887 = vsel %vm204, %v1884, 0
    %v1889 = vsel %vm204, %v1886, 0
    %1891 = vmatprep.subr.mxu0 0.0
    %1892 = vmatpush1.xpose.msra.mxu0 %v1889
    %1893 = vmatprep.subr.mxu0 0.0
    %1894 = vmatpush1.xpose.msra.mxu0 0.0
    %1895 = vmatprep.subr.mxu0 0.0
    %1896 = vmatpush1.xpose.msra.mxu0 0.0
    %1897 = vmatprep.subr.mxu0 0.0
    %1898 = vmatpush1.xpose.msra.mxu0 0.0
    %1899 = vmatprep.subr.mxu0 0.0
    %1900 = vmatpush1.xpose.msra.mxu0 0.0
    %1901 = vmatprep.subr.mxu0 0.0
    %1902 = vmatpush1.xpose.msra.mxu0 0.0
    %1903 = vmatprep.subr.mxu0 0.0
    %1904 = vmatpush1.xpose.msra.mxu0 0.0
    %1905 = vmatprep.subr.mxu0 0.0
    %1906 = vmatpush1.xpose.msra.mxu0 0.0
    %1907 = vmatprep.subr.mxu0 0.0
    %1908 = vmatpush1.xpose.msra.mxu0 0.0
    %1909 = vmatprep.subr.mxu0 0.0
    %1910 = vmatpush1.xpose.msra.mxu0 0.0
    %1911 = vmatprep.subr.mxu0 0.0
    %1912 = vmatpush1.xpose.msra.mxu0 0.0
    %1913 = vmatprep.subr.mxu0 0.0
    %1914 = vmatpush1.xpose.msra.mxu0 0.0
    %1915 = vmatprep.subr.mxu0 0.0
    %1916 = vmatpush1.xpose.msra.mxu0 0.0
    %1917 = vmatprep.subr.mxu0 0.0
    %1918 = vmatpush1.xpose.msra.mxu0 0.0
    %1919 = vmatprep.subr.mxu0 0.0
    %1920 = vmatpush1.xpose.msra.mxu0 0.0
    %1921 = vmatprep.subr.mxu0 0.0
    %1922 = vmatpush1.xpose.msra.mxu0 0.0
    %1923 = vmatprep.subr.mxu0 0.0
    %1924 = vmatpush1.xpose.msra.mxu0 0.0
    %1925 = vmatprep.subr.mxu0 0.0
    %1926 = vmatpush1.xpose.msra.mxu0 0.0
    %1927 = vmatprep.subr.mxu0 0.0
    %1928 = vmatpush1.xpose.msra.mxu0 0.0
    %1929 = vmatprep.subr.mxu0 0.0
    %1930 = vmatpush1.xpose.msra.mxu0 0.0
    %1931 = vmatprep.subr.mxu0 0.0
    %1932 = vmatpush1.xpose.msra.mxu0 0.0
    %1933 = vmatprep.subr.mxu0 0.0
    %1934 = vmatpush1.xpose.msra.mxu0 0.0
    %1935 = vmatprep.subr.mxu0 0.0
    %1936 = vmatpush1.xpose.msra.mxu0 0.0
    %1937 = vmatprep.subr.mxu0 0.0
    %1938 = vmatpush1.xpose.msra.mxu0 0.0
    %1939 = vmatprep.subr.mxu0 0.0
    %1940 = vmatpush1.xpose.msra.mxu0 0.0
    %1941 = vmatprep.subr.mxu0 0.0
    %1942 = vmatpush1.xpose.msra.mxu0 0.0
    %1943 = vmatprep.subr.mxu0 0.0
    %1944 = vmatpush1.xpose.msra.mxu0 0.0
    %1945 = vmatprep.subr.mxu0 0.0
    %1946 = vmatpush1.xpose.msra.mxu0 0.0
    %1947 = vmatprep.subr.mxu0 0.0
    %1948 = vmatpush1.xpose.msra.mxu0 0.0
    %1949 = vmatprep.subr.mxu0 0.0
    %1950 = vmatpush1.xpose.msra.mxu0 0.0
    %1951 = vmatprep.subr.mxu0 0.0
    %1952 = vmatpush1.xpose.msra.mxu0 0.0
    %1953 = vmatprep.subr.mxu0 0.0
    %1954 = vmatpush1.xpose.msra.mxu0 0.0
    %1955 = vmatprep.mubr.f32.mxu0 0.0
    %1956 = vmatmul.mubr.f32.gmra.mrb[0].mxu0 %v1887
    %v1957 = vpop.f32.mrb[0].mxu0
    %v1958 = vadd.f32 0.0, %v1957
    %v1959 = vpop.f32.mrb[0].mxu0
    %1960 = vdwg.mxu0
    %v1961 = vsel %vm279, %v1958, -inf
    %1962 = vmax.xlane.f32.xlu0 %v1961
    %v1963 = vpop.xlane.xlu0 %1962
    %v1964 = vsub.f32 %v1958, %v1963
    %v1965 = vmul.f32 %v1964, 1.442695
    %v1966 = vpow.pop %v1965
    %v1967 = vsel %vm279, %v1966, 0.0
    %1968 = vadd.xlane.f32.xlu0 %v1967
    %v1969 = vpop.xlane.xlu0 %1968
    %v1970 = vrcp.pop %v1969
    %v1971 = vmul.f32 %v1966, %v1970
    %1972 = vrot.lane.b32.xlu0 %v196, 84
    %v1973 = vpop.permute.xlu0 %1972
    %v1976 = vsel %vm279, %v1971, 0
    %1978 = vmatprep.subr.mxu0 0.0
    %1979 = vmatpush1.msra.mxu0 %v1973
    %1980 = vmatprep.subr.mxu0 0.0
    %1981 = vmatpush1.msra.mxu0 0.0
    %1982 = vmatprep.subr.mxu0 0.0
    %1983 = vmatpush1.msra.mxu0 0.0
    %1984 = vmatprep.subr.mxu0 0.0
    %1985 = vmatpush1.msra.mxu0 0.0
    %1986 = vmatprep.subr.mxu0 0.0
    %1987 = vmatpush1.msra.mxu0 0.0
    %1988 = vmatprep.subr.mxu0 0.0
    %1989 = vmatpush1.msra.mxu0 0.0
    %1990 = vmatprep.subr.mxu0 0.0
    %1991 = vmatpush1.msra.mxu0 0.0
    %1992 = vmatprep.subr.mxu0 0.0
    %1993 = vmatpush1.msra.mxu0 0.0
    %1994 = vmatprep.subr.mxu0 0.0
    %1995 = vmatpush1.msra.mxu0 0.0
    %1996 = vmatprep.subr.mxu0 0.0
    %1997 = vmatpush1.msra.mxu0 0.0
    %1998 = vmatprep.subr.mxu0 0.0
    %1999 = vmatpush1.msra.mxu0 0.0
    %2000 = vmatprep.subr.mxu0 0.0
    %2001 = vmatpush1.msra.mxu0 0.0
    %2002 = vmatprep.subr.mxu0 0.0
    %2003 = vmatpush1.msra.mxu0 0.0
    %2004 = vmatprep.subr.mxu0 0.0
    %2005 = vmatpush1.msra.mxu0 0.0
    %2006 = vmatprep.subr.mxu0 0.0
    %2007 = vmatpush1.msra.mxu0 0.0
    %2008 = vmatprep.subr.mxu0 0.0
    %2009 = vmatpush1.msra.mxu0 0.0
    %2010 = vmatprep.subr.mxu0 0.0
    %2011 = vmatpush1.msra.mxu0 0.0
    %2012 = vmatprep.subr.mxu0 0.0
    %2013 = vmatpush1.msra.mxu0 0.0
    %2014 = vmatprep.subr.mxu0 0.0
    %2015 = vmatpush1.msra.mxu0 0.0
    %2016 = vmatprep.subr.mxu0 0.0
    %2017 = vmatpush1.msra.mxu0 0.0
    %2018 = vmatprep.subr.mxu0 0.0
    %2019 = vmatpush1.msra.mxu0 0.0
    %2020 = vmatprep.subr.mxu0 0.0
    %2021 = vmatpush1.msra.mxu0 0.0
    %2022 = vmatprep.subr.mxu0 0.0
    %2023 = vmatpush1.msra.mxu0 0.0
    %2024 = vmatprep.subr.mxu0 0.0
    %2025 = vmatpush1.msra.mxu0 0.0
    %2026 = vmatprep.subr.mxu0 0.0
    %2027 = vmatpush1.msra.mxu0 0.0
    %2028 = vmatprep.subr.mxu0 0.0
    %2029 = vmatpush1.msra.mxu0 0.0
    %2030 = vmatprep.subr.mxu0 0.0
    %2031 = vmatpush1.msra.mxu0 0.0
    %2032 = vmatprep.subr.mxu0 0.0
    %2033 = vmatpush1.msra.mxu0 0.0
    %2034 = vmatprep.subr.mxu0 0.0
    %2035 = vmatpush1.msra.mxu0 0.0
    %2036 = vmatprep.subr.mxu0 0.0
    %2037 = vmatpush1.msra.mxu0 0.0
    %2038 = vmatprep.subr.mxu0 0.0
    %2039 = vmatpush1.msra.mxu0 0.0
    %2040 = vmatprep.subr.mxu0 0.0
    %2041 = vmatpush1.msra.mxu0 0.0
    %2042 = vmatprep.mubr.f32.mxu0 0.0
    %2043 = vmatmul.mubr.f32.gmra.mrb[0].mxu0 %v1976
    %v2044 = vpop.f32.mrb[0].mxu0
    %v2045 = vadd.f32 0.0, %v2044
    %v2046 = vpop.f32.mrb[0].mxu0
    %2047 = vdwg.mxu0
    %v2049 = vsel %vm204, %v2045, 0
    %2051 = vmatprep.subr.mxu0 0.0
    %2052 = vmatpush1.msra.mxu0 %v1096
    %2053 = vmatprep.subr.mxu0 0.0
    %2054 = vmatpush1.msra.mxu0 0.0
    %2055 = vmatprep.subr.mxu0 0.0
    %2056 = vmatpush1.msra.mxu0 0.0
    %2057 = vmatprep.subr.mxu0 0.0
    %2058 = vmatpush1.msra.mxu0 0.0
    %2059 = vmatprep.subr.mxu0 0.0
    %2060 = vmatpush1.msra.mxu0 0.0
    %2061 = vmatprep.subr.mxu0 0.0
    %2062 = vmatpush1.msra.mxu0 0.0
    %2063 = vmatprep.subr.mxu0 0.0
    %2064 = vmatpush1.msra.mxu0 0.0
    %2065 = vmatprep.subr.mxu0 0.0
    %2066 = vmatpush1.msra.mxu0 0.0
    %2067 = vmatprep.subr.mxu0 0.0
    %2068 = vmatpush1.msra.mxu0 0.0
    %2069 = vmatprep.subr.mxu0 0.0
    %2070 = vmatpush1.msra.mxu0 0.0
    %2071 = vmatprep.subr.mxu0 0.0
    %2072 = vmatpush1.msra.mxu0 0.0
    %2073 = vmatprep.subr.mxu0 0.0
    %2074 = vmatpush1.msra.mxu0 0.0
    %2075 = vmatprep.subr.mxu0 0.0
    %2076 = vmatpush1.msra.mxu0 0.0
    %2077 = vmatprep.subr.mxu0 0.0
    %2078 = vmatpush1.msra.mxu0 0.0
    %2079 = vmatprep.subr.mxu0 0.0
    %2080 = vmatpush1.msra.mxu0 0.0
    %2081 = vmatprep.subr.mxu0 0.0
    %2082 = vmatpush1.msra.mxu0 0.0
    %2083 = vmatprep.subr.mxu0 0.0
    %2084 = vmatpush1.msra.mxu0 0.0
    %2085 = vmatprep.subr.mxu0 0.0
    %2086 = vmatpush1.msra.mxu0 0.0
    %2087 = vmatprep.subr.mxu0 0.0
    %2088 = vmatpush1.msra.mxu0 0.0
    %2089 = vmatprep.subr.mxu0 0.0
    %2090 = vmatpush1.msra.mxu0 0.0
    %2091 = vmatprep.subr.mxu0 0.0
    %2092 = vmatpush1.msra.mxu0 0.0
    %2093 = vmatprep.subr.mxu0 0.0
    %2094 = vmatpush1.msra.mxu0 0.0
    %2095 = vmatprep.subr.mxu0 0.0
    %2096 = vmatpush1.msra.mxu0 0.0
    %2097 = vmatprep.subr.mxu0 0.0
    %2098 = vmatpush1.msra.mxu0 0.0
    %2099 = vmatprep.subr.mxu0 0.0
    %2100 = vmatpush1.msra.mxu0 0.0
    %2101 = vmatprep.subr.mxu0 0.0
    %2102 = vmatpush1.msra.mxu0 0.0
    %2103 = vmatprep.subr.mxu0 0.0
    %2104 = vmatpush1.msra.mxu0 0.0
    %2105 = vmatprep.subr.mxu0 0.0
    %2106 = vmatpush1.msra.mxu0 0.0
    %2107 = vmatprep.subr.mxu0 0.0
    %2108 = vmatpush1.msra.mxu0 0.0
    %2109 = vmatprep.subr.mxu0 0.0
    %2110 = vmatpush1.msra.mxu0 0.0
    %2111 = vmatprep.subr.mxu0 0.0
    %2112 = vmatpush1.msra.mxu0 0.0
    %2113 = vmatprep.subr.mxu0 0.0
    %2114 = vmatpush1.msra.mxu0 0.0
    %2115 = vmatprep.mubr.f32.mxu0 0.0
    %2116 = vmatmul.mubr.f32.gmra.mrb[0].mxu0 %v2049
    %v2117 = vpop.f32.mrb[0].mxu0
    %v2118 = vadd.f32 0.0, %v2117
    %v2119 = vpop.f32.mrb[0].mxu0
    %2120 = vdwg.mxu0
    %v2121 = vadd.f32 %v1882, %v2118
    %v2122 = vld [vmem:[%s6] sm:$0x1]
    %v2124 = vlaneseq
    %v2125 = vshrl.u32 %v2124, 7
    %v2126 = vsub.s32 0, %v2125
    %v2127 = vrot.slane %v2122, %v2126
    %v2129 = vadd.f32 %v1168, %v2127
    %v2130 = vadd.f32 %v2121, %v2127
    %v2131 = vadd.f32 %v61, %v2129
    %v2132 = vadd.f32 %v62, %v2130
    %v2133 = vld [vmem:[%s7] sm:$0x1]
    %v2134 = vld [vmem:[%s8] sm:$0x1]
    %v2135 = vsel %vm65, %v2131, 0.0
    %2136 = vadd.xlane.f32.xlu0 %v2135
    %v2137 = vpop.xlane.xlu0 %2136
    %v2138 = vsel %vm65, %v2132, 0.0
    %2139 = vadd.xlane.f32.xlu0 %v2138
    %v2140 = vpop.xlane.xlu0 %2139
    %v2141 = vmul.f32 %v2137, %v72
    %v2142 = vmul.f32 %v2140, %v72
    %v2143 = vsub.f32 %v2131, %v2141
    %v2144 = vsub.f32 %v2132, %v2142
    %v2145 = vmul.f32 %v2143, %v2143
    %v2146 = vmul.f32 %v2144, %v2144
    %v2147 = vsel %vm65, %v2145, 0.0
    %2148 = vadd.xlane.f32.xlu0 %v2147
    %v2149 = vpop.xlane.xlu0 %2148
    %v2150 = vsel %vm65, %v2146, 0.0
    %2151 = vadd.xlane.f32.xlu0 %v2150
    %v2152 = vpop.xlane.xlu0 %2151
    %v2153 = vmul.f32 %v2149, %v72
    %v2154 = vmul.f32 %v2152, %v72
    %v2155 = vadd.f32 %v2153, 1e-05
    %v2156 = vadd.f32 %v2154, 1e-05
    %v2157 = vrsqrt.pop %v2155
    %v2158 = vrsqrt.pop %v2156
    %v2159 = vmul.f32 %v2143, %v2157
    %v2160 = vmul.f32 %v2144, %v2158
    %v2162 = vlaneseq
    %v2163 = vshrl.u32 %v2162, 7
    %v2164 = vsub.s32 0, %v2163
    %v2165 = vrot.slane %v2133, %v2164
    %v2167 = vmul.f32 %v2159, %v2165
    %v2168 = vmul.f32 %v2160, %v2165
    %v2170 = vlaneseq
    %v2171 = vshrl.u32 %v2170, 7
    %v2172 = vsub.s32 0, %v2171
    %v2173 = vrot.slane %v2134, %v2172
    %v2175 = vadd.f32 %v2167, %v2173
    %v2176 = vadd.f32 %v2168, %v2173
    %v2177 = vld [vmem:[%s9] sm:$0xff]
    %v2178 = vld [vmem:[%s9 + $0x8] sm:$0xff]
    %v2179 = vld [vmem:[%s10] sm:$0x1]
    %v2181 = vlaneseq
    %v2182 = vshrl.u32 %v2181, 7
    %v2183 = vsub.s32 0, %v2182
    %v2184 = vrot.slane %v2179, %v2183
    %v2187 = vsel %vm65, %v2175, 0
    %v2190 = vsel %vm65, %v2176, 0
    %2192 = vmatprep.subr.mxu0 0.0
    %2193 = vmatpush1.msra.mxu0 %v2177
    %2194 = vmatprep.subr.mxu0 0.0
    %2195 = vmatpush1.msra.mxu0 %v2178
    %2196 = vmatprep.subr.mxu0 0.0
    %2197 = vmatpush1.msra.mxu0 0.0
    %2198 = vmatprep.subr.mxu0 0.0
    %2199 = vmatpush1.msra.mxu0 0.0
    %2200 = vmatprep.subr.mxu0 0.0
    %2201 = vmatpush1.msra.mxu0 0.0
    %2202 = vmatprep.subr.mxu0 0.0
    %2203 = vmatpush1.msra.mxu0 0.0
    %2204 = vmatprep.subr.mxu0 0.0
    %2205 = vmatpush1.msra.mxu0 0.0
    %2206 = vmatprep.subr.mxu0 0.0
    %2207 = vmatpush1.msra.mxu0 0.0
    %2208 = vmatprep.subr.mxu0 0.0
    %2209 = vmatpush1.msra.mxu0 0.0
    %2210 = vmatprep.subr.mxu0 0.0
    %2211 = vmatpush1.msra.mxu0 0.0
    %2212 = vmatprep.subr.mxu0 0.0
    %2213 = vmatpush1.msra.mxu0 0.0
    %2214 = vmatprep.subr.mxu0 0.0
    %2215 = vmatpush1.msra.mxu0 0.0
    %2216 = vmatprep.subr.mxu0 0.0
    %2217 = vmatpush1.msra.mxu0 0.0
    %2218 = vmatprep.subr.mxu0 0.0
    %2219 = vmatpush1.msra.mxu0 0.0
    %2220 = vmatprep.subr.mxu0 0.0
    %2221 = vmatpush1.msra.mxu0 0.0
    %2222 = vmatprep.subr.mxu0 0.0
    %2223 = vmatpush1.msra.mxu0 0.0
    %2224 = vmatprep.subr.mxu0 0.0
    %2225 = vmatpush1.msra.mxu0 0.0
    %2226 = vmatprep.subr.mxu0 0.0
    %2227 = vmatpush1.msra.mxu0 0.0
    %2228 = vmatprep.subr.mxu0 0.0
    %2229 = vmatpush1.msra.mxu0 0.0
    %2230 = vmatprep.subr.mxu0 0.0
    %2231 = vmatpush1.msra.mxu0 0.0
    %2232 = vmatprep.subr.mxu0 0.0
    %2233 = vmatpush1.msra.mxu0 0.0
    %2234 = vmatprep.subr.mxu0 0.0
    %2235 = vmatpush1.msra.mxu0 0.0
    %2236 = vmatprep.subr.mxu0 0.0
    %2237 = vmatpush1.msra.mxu0 0.0
    %2238 = vmatprep.subr.mxu0 0.0
    %2239 = vmatpush1.msra.mxu0 0.0
    %2240 = vmatprep.subr.mxu0 0.0
    %2241 = vmatpush1.msra.mxu0 0.0
    %2242 = vmatprep.subr.mxu0 0.0
    %2243 = vmatpush1.msra.mxu0 0.0
    %2244 = vmatprep.subr.mxu0 0.0
    %2245 = vmatpush1.msra.mxu0 0.0
    %2246 = vmatprep.subr.mxu0 0.0
    %2247 = vmatpush1.msra.mxu0 0.0
    %2248 = vmatprep.subr.mxu0 0.0
    %2249 = vmatpush1.msra.mxu0 0.0
    %2250 = vmatprep.subr.mxu0 0.0
    %2251 = vmatpush1.msra.mxu0 0.0
    %2252 = vmatprep.subr.mxu0 0.0
    %2253 = vmatpush1.msra.mxu0 0.0
    %2254 = vmatprep.subr.mxu0 0.0
    %2255 = vmatpush1.msra.mxu0 0.0
    %2256 = vmatprep.mubr.f32.mxu0 0.0
    %2257 = vmatmul.mubr.f32.gmra.mrb[0].mxu0 %v2187
    %v2258 = vpop.f32.mrb[0].mxu0
    %v2259 = vadd.f32 %v2184, %v2258
    %v2260 = vpop.f32.mrb[0].mxu0
    %2261 = vmatprep.mubr.f32.mxu0 0.0
    %2262 = vmatmul.mubr.f32.gmra.mrb[0].mxu0 %v2190
    %v2263 = vpop.f32.mrb[0].mxu0
    %v2264 = vadd.f32 %v2184, %v2263
    %v2265 = vpop.f32.mrb[0].mxu0
    %2266 = vdwg.mxu0
    %v2267 = vmax.f32 %v2259, 0.0
    %v2268 = vmax.f32 %v2264, 0.0
    %v2269 = vld [vmem:[%s11] sm:$0xff]
    %v2270 = vld [vmem:[%s11 + $0x8] sm:$0xff]
    %v2271 = vld [vmem:[%s11 + $0x10] sm:$0xff]
    %v2272 = vld [vmem:[%s11 + $0x18] sm:$0xff]
    %vm2273 = vcmask 261120
    %v2275 = vsel %vm2273, %v2267, 0
    %v2278 = vsel %vm2273, %v2268, 0
    %2280 = vmatprep.subr.mxu0 0.0
    %2281 = vmatpush1.msra.mxu0 %v2269
    %2282 = vmatprep.subr.mxu0 0.0
    %2283 = vmatpush1.msra.mxu0 %v2270
    %2284 = vmatprep.subr.mxu0 0.0
    %2285 = vmatpush1.msra.mxu0 %v2271
    %2286 = vmatprep.subr.mxu0 0.0
    %2287 = vmatpush1.msra.mxu0 %v2272
    %2288 = vmatprep.subr.mxu0 0.0
    %2289 = vmatpush1.msra.mxu0 0.0
    %2290 = vmatprep.subr.mxu0 0.0
    %2291 = vmatpush1.msra.mxu0 0.0
    %2292 = vmatprep.subr.mxu0 0.0
    %2293 = vmatpush1.msra.mxu0 0.0
    %2294 = vmatprep.subr.mxu0 0.0
    %2295 = vmatpush1.msra.mxu0 0.0
    %2296 = vmatprep.subr.mxu0 0.0
    %2297 = vmatpush1.msra.mxu0 0.0
    %2298 = vmatprep.subr.mxu0 0.0
    %2299 = vmatpush1.msra.mxu0 0.0
    %2300 = vmatprep.subr.mxu0 0.0
    %2301 = vmatpush1.msra.mxu0 0.0
    %2302 = vmatprep.subr.mxu0 0.0
    %2303 = vmatpush1.msra.mxu0 0.0
    %2304 = vmatprep.subr.mxu0 0.0
    %2305 = vmatpush1.msra.mxu0 0.0
    %2306 = vmatprep.subr.mxu0 0.0
    %2307 = vmatpush1.msra.mxu0 0.0
    %2308 = vmatprep.subr.mxu0 0.0
    %2309 = vmatpush1.msra.mxu0 0.0
    %2310 = vmatprep.subr.mxu0 0.0
    %2311 = vmatpush1.msra.mxu0 0.0
    %2312 = vmatprep.subr.mxu0 0.0
    %2313 = vmatpush1.msra.mxu0 0.0
    %2314 = vmatprep.subr.mxu0 0.0
    %2315 = vmatpush1.msra.mxu0 0.0
    %2316 = vmatprep.subr.mxu0 0.0
    %2317 = vmatpush1.msra.mxu0 0.0
    %2318 = vmatprep.subr.mxu0 0.0
    %2319 = vmatpush1.msra.mxu0 0.0
    %2320 = vmatprep.subr.mxu0 0.0
    %2321 = vmatpush1.msra.mxu0 0.0
    %2322 = vmatprep.subr.mxu0 0.0
    %2323 = vmatpush1.msra.mxu0 0.0
    %2324 = vmatprep.subr.mxu0 0.0
    %2325 = vmatpush1.msra.mxu0 0.0
    %2326 = vmatprep.subr.mxu0 0.0
    %2327 = vmatpush1.msra.mxu0 0.0
    %2328 = vmatprep.subr.mxu0 0.0
    %2329 = vmatpush1.msra.mxu0 0.0
    %2330 = vmatprep.subr.mxu0 0.0
    %2331 = vmatpush1.msra.mxu0 0.0
    %2332 = vmatprep.subr.mxu0 0.0
    %2333 = vmatpush1.msra.mxu0 0.0
    %2334 = vmatprep.subr.mxu0 0.0
    %2335 = vmatpush1.msra.mxu0 0.0
    %2336 = vmatprep.subr.mxu0 0.0
    %2337 = vmatpush1.msra.mxu0 0.0
    %2338 = vmatprep.subr.mxu0 0.0
    %2339 = vmatpush1.msra.mxu0 0.0
    %2340 = vmatprep.subr.mxu0 0.0
    %2341 = vmatpush1.msra.mxu0 0.0
    %2342 = vmatprep.subr.mxu0 0.0
    %2343 = vmatpush1.msra.mxu0 0.0
    %2344 = vmatprep.mubr.f32.mxu0 0.0
    %2345 = vmatmul.mubr.f32.gmra.mrb[0].mxu0 %v2275
    %v2346 = vpop.f32.mrb[0].mxu0
    %v2347 = vadd.f32 0.0, %v2346
    %v2348 = vpop.f32.mrb[0].mxu0
    %2349 = vmatprep.mubr.f32.mxu0 0.0
    %2350 = vmatmul.mubr.f32.gmra.mrb[0].mxu0 %v2278
    %v2351 = vpop.f32.mrb[0].mxu0
    %v2352 = vadd.f32 0.0, %v2351
    %v2353 = vpop.f32.mrb[0].mxu0
    %2354 = vdwg.mxu0
    %v2355 = vadd.f32 %v2131, %v2347
    %v2356 = vadd.f32 %v2132, %v2352
    %v2357 = vld [vmem:[%s12] sm:$0x1]
    %v2359 = vlaneseq
    %v2360 = vshrl.u32 %v2359, 7
    %v2361 = vsub.s32 0, %v2360
    %v2362 = vrot.slane %v2357, %v2361
    %v2364 = vadd.f32 %v2355, %v2362
    %v2365 = vadd.f32 %v2356, %v2362
    %s2366 = scalar_lea.vmem %s1, 1
    %v2367 = vld [vmem:[%s2366] sm:$0x1]
    %s2368 = scalar_lea.vmem %s2, 1
    %v2369 = vld [vmem:[%s2368] sm:$0x1]
    %v2370 = vsel %vm65, %v2364, 0.0
    %2371 = vadd.xlane.f32.xlu0 %v2370
    %v2372 = vpop.xlane.xlu0 %2371
    %v2373 = vsel %vm65, %v2365, 0.0
    %2374 = vadd.xlane.f32.xlu0 %v2373
    %v2375 = vpop.xlane.xlu0 %2374
    %v2376 = vmul.f32 %v2372, %v72
    %v2377 = vmul.f32 %v2375, %v72
    %v2378 = vsub.f32 %v2364, %v2376
    %v2379 = vsub.f32 %v2365, %v2377
    %v2380 = vmul.f32 %v2378, %v2378
    %v2381 = vmul.f32 %v2379, %v2379
    %v2382 = vsel %vm65, %v2380, 0.0
    %2383 = vadd.xlane.f32.xlu0 %v2382
    %v2384 = vpop.xlane.xlu0 %2383
    %v2385 = vsel %vm65, %v2381, 0.0
    %2386 = vadd.xlane.f32.xlu0 %v2385
    %v2387 = vpop.xlane.xlu0 %2386
    %v2388 = vmul.f32 %v2384, %v72
    %v2389 = vmul.f32 %v2387, %v72
    %v2390 = vadd.f32 %v2388, 1e-05
    %v2391 = vadd.f32 %v2389, 1e-05
    %v2392 = vrsqrt.pop %v2390
    %v2393 = vrsqrt.pop %v2391
    %v2394 = vmul.f32 %v2378, %v2392
    %v2395 = vmul.f32 %v2379, %v2393
    %v2397 = vlaneseq
    %v2398 = vshrl.u32 %v2397, 7
    %v2399 = vsub.s32 0, %v2398
    %v2400 = vrot.slane %v2367, %v2399
    %v2402 = vmul.f32 %v2394, %v2400
    %v2403 = vmul.f32 %v2395, %v2400
    %v2405 = vlaneseq
    %v2406 = vshrl.u32 %v2405, 7
    %v2407 = vsub.s32 0, %v2406
    %v2408 = vrot.slane %v2369, %v2407
    %v2410 = vadd.f32 %v2402, %v2408
    %v2411 = vadd.f32 %v2403, %v2408
    %s2412 = scalar_lea.vmem %s3, 16
    %v2413 = vld [vmem:[%s2412] sm:$0xff]
    %v2414 = vld [vmem:[%s2412 + $0x8] sm:$0xff]
    %s2415 = scalar_lea.vmem %s4, 1
    %v2416 = vld [vmem:[%s2415] sm:$0x1]
    %v2418 = vlaneseq
    %v2419 = vshrl.u32 %v2418, 7
    %v2420 = vsub.s32 0, %v2419
    %v2421 = vrot.slane %v2416, %v2420
    %v2424 = vsel %vm65, %v2410, 0
    %v2427 = vsel %vm65, %v2411, 0
    %2429 = vmatprep.subr.mxu0 0.0
    %2430 = vmatpush1.msra.mxu0 %v2413
    %2431 = vmatprep.subr.mxu0 0.0
    %2432 = vmatpush1.msra.mxu0 %v2414
    %2433 = vmatprep.subr.mxu0 0.0
    %2434 = vmatpush1.msra.mxu0 0.0
    %2435 = vmatprep.subr.mxu0 0.0
    %2436 = vmatpush1.msra.mxu0 0.0
    %2437 = vmatprep.subr.mxu0 0.0
    %2438 = vmatpush1.msra.mxu0 0.0
    %2439 = vmatprep.subr.mxu0 0.0
    %2440 = vmatpush1.msra.mxu0 0.0
    %2441 = vmatprep.subr.mxu0 0.0
    %2442 = vmatpush1.msra.mxu0 0.0
    %2443 = vmatprep.subr.mxu0 0.0
    %2444 = vmatpush1.msra.mxu0 0.0
    %2445 = vmatprep.subr.mxu0 0.0
    %2446 = vmatpush1.msra.mxu0 0.0
    %2447 = vmatprep.subr.mxu0 0.0
    %2448 = vmatpush1.msra.mxu0 0.0
    %2449 = vmatprep.subr.mxu0 0.0
    %2450 = vmatpush1.msra.mxu0 0.0
    %2451 = vmatprep.subr.mxu0 0.0
    %2452 = vmatpush1.msra.mxu0 0.0
    %2453 = vmatprep.subr.mxu0 0.0
    %2454 = vmatpush1.msra.mxu0 0.0
    %2455 = vmatprep.subr.mxu0 0.0
    %2456 = vmatpush1.msra.mxu0 0.0
    %2457 = vmatprep.subr.mxu0 0.0
    %2458 = vmatpush1.msra.mxu0 0.0
    %2459 = vmatprep.subr.mxu0 0.0
    %2460 = vmatpush1.msra.mxu0 0.0
    %2461 = vmatprep.subr.mxu0 0.0
    %2462 = vmatpush1.msra.mxu0 0.0
    %2463 = vmatprep.subr.mxu0 0.0
    %2464 = vmatpush1.msra.mxu0 0.0
    %2465 = vmatprep.subr.mxu0 0.0
    %2466 = vmatpush1.msra.mxu0 0.0
    %2467 = vmatprep.subr.mxu0 0.0
    %2468 = vmatpush1.msra.mxu0 0.0
    %2469 = vmatprep.subr.mxu0 0.0
    %2470 = vmatpush1.msra.mxu0 0.0
    %2471 = vmatprep.subr.mxu0 0.0
    %2472 = vmatpush1.msra.mxu0 0.0
    %2473 = vmatprep.subr.mxu0 0.0
    %2474 = vmatpush1.msra.mxu0 0.0
    %2475 = vmatprep.subr.mxu0 0.0
    %2476 = vmatpush1.msra.mxu0 0.0
    %2477 = vmatprep.subr.mxu0 0.0
    %2478 = vmatpush1.msra.mxu0 0.0
    %2479 = vmatprep.subr.mxu0 0.0
    %2480 = vmatpush1.msra.mxu0 0.0
    %2481 = vmatprep.subr.mxu0 0.0
    %2482 = vmatpush1.msra.mxu0 0.0
    %2483 = vmatprep.subr.mxu0 0.0
    %2484 = vmatpush1.msra.mxu0 0.0
    %2485 = vmatprep.subr.mxu0 0.0
    %2486 = vmatpush1.msra.mxu0 0.0
    %2487 = vmatprep.subr.mxu0 0.0
    %2488 = vmatpush1.msra.mxu0 0.0
    %2489 = vmatprep.subr.mxu0 0.0
    %2490 = vmatpush1.msra.mxu0 0.0
    %2491 = vmatprep.subr.mxu0 0.0
    %2492 = vmatpush1.msra.mxu0 0.0
    %2493 = vmatprep.mubr.f32.mxu0 0.0
    %2494 = vmatmul.mubr.f32.gmra.mrb[0].mxu0 %v2424
    %v2495 = vpop.f32.mrb[0].mxu0
    %v2496 = vadd.f32 %v2421, %v2495
    %v2497 = vpop.f32.mrb[0].mxu0
    %2498 = vmatprep.mubr.f32.mxu0 0.0
    %2499 = vmatmul.mubr.f32.gmra.mrb[0].mxu0 %v2427
    %v2500 = vpop.f32.mrb[0].mxu0
    %v2501 = vadd.f32 %v2421, %v2500
    %v2502 = vpop.f32.mrb[0].mxu0
    %2503 = vdwg.mxu0
    %s2504 = scalar_lea.vmem %s5, 16
    %v2505 = vld [vmem:[%s2504] sm:$0xff]
    %v2506 = vld [vmem:[%s2504 + $0x8] sm:$0xff]
    %2508 = vrot.lane.b32.xlu0 %v2496, 112
    %v2509 = vpop.permute.xlu0 %2508
    %v2510 = vsel %vm204, %v2496, 0
    %v2512 = vsel %vm204, %v2509, 0
    %2514 = vmatprep.subr.mxu0 0.0
    %2515 = vmatpush1.xpose.msra.mxu0 %v2512
    %2516 = vmatprep.subr.mxu0 0.0
    %2517 = vmatpush1.xpose.msra.mxu0 0.0
    %2518 = vmatprep.subr.mxu0 0.0
    %2519 = vmatpush1.xpose.msra.mxu0 0.0
    %2520 = vmatprep.subr.mxu0 0.0
    %2521 = vmatpush1.xpose.msra.mxu0 0.0
    %2522 = vmatprep.subr.mxu0 0.0
    %2523 = vmatpush1.xpose.msra.mxu0 0.0
    %2524 = vmatprep.subr.mxu0 0.0
    %2525 = vmatpush1.xpose.msra.mxu0 0.0
    %2526 = vmatprep.subr.mxu0 0.0
    %2527 = vmatpush1.xpose.msra.mxu0 0.0
    %2528 = vmatprep.subr.mxu0 0.0
    %2529 = vmatpush1.xpose.msra.mxu0 0.0
    %2530 = vmatprep.subr.mxu0 0.0
    %2531 = vmatpush1.xpose.msra.mxu0 0.0
    %2532 = vmatprep.subr.mxu0 0.0
    %2533 = vmatpush1.xpose.msra.mxu0 0.0
    %2534 = vmatprep.subr.mxu0 0.0
    %2535 = vmatpush1.xpose.msra.mxu0 0.0
    %2536 = vmatprep.subr.mxu0 0.0
    %2537 = vmatpush1.xpose.msra.mxu0 0.0
    %2538 = vmatprep.subr.mxu0 0.0
    %2539 = vmatpush1.xpose.msra.mxu0 0.0
    %2540 = vmatprep.subr.mxu0 0.0
    %2541 = vmatpush1.xpose.msra.mxu0 0.0
    %2542 = vmatprep.subr.mxu0 0.0
    %2543 = vmatpush1.xpose.msra.mxu0 0.0
    %2544 = vmatprep.subr.mxu0 0.0
    %2545 = vmatpush1.xpose.msra.mxu0 0.0
    %2546 = vmatprep.subr.mxu0 0.0
    %2547 = vmatpush1.xpose.msra.mxu0 0.0
    %2548 = vmatprep.subr.mxu0 0.0
    %2549 = vmatpush1.xpose.msra.mxu0 0.0
    %2550 = vmatprep.subr.mxu0 0.0
    %2551 = vmatpush1.xpose.msra.mxu0 0.0
    %2552 = vmatprep.subr.mxu0 0.0
    %2553 = vmatpush1.xpose.msra.mxu0 0.0
    %2554 = vmatprep.subr.mxu0 0.0
    %2555 = vmatpush1.xpose.msra.mxu0 0.0
    %2556 = vmatprep.subr.mxu0 0.0
    %2557 = vmatpush1.xpose.msra.mxu0 0.0
    %2558 = vmatprep.subr.mxu0 0.0
    %2559 = vmatpush1.xpose.msra.mxu0 0.0
    %2560 = vmatprep.subr.mxu0 0.0
    %2561 = vmatpush1.xpose.msra.mxu0 0.0
    %2562 = vmatprep.subr.mxu0 0.0
    %2563 = vmatpush1.xpose.msra.mxu0 0.0
    %2564 = vmatprep.subr.mxu0 0.0
    %2565 = vmatpush1.xpose.msra.mxu0 0.0
    %2566 = vmatprep.subr.mxu0 0.0
    %2567 = vmatpush1.xpose.msra.mxu0 0.0
    %2568 = vmatprep.subr.mxu0 0.0
    %2569 = vmatpush1.xpose.msra.mxu0 0.0
    %2570 = vmatprep.subr.mxu0 0.0
    %2571 = vmatpush1.xpose.msra.mxu0 0.0
    %2572 = vmatprep.subr.mxu0 0.0
    %2573 = vmatpush1.xpose.msra.mxu0 0.0
    %2574 = vmatprep.subr.mxu0 0.0
    %2575 = vmatpush1.xpose.msra.mxu0 0.0
    %2576 = vmatprep.subr.mxu0 0.0
    %2577 = vmatpush1.xpose.msra.mxu0 0.0
    %2578 = vmatprep.mubr.f32.mxu0 0.0
    %2579 = vmatmul.mubr.f32.gmra.mrb[0].mxu0 %v2510
    %v2580 = vpop.f32.mrb[0].mxu0
    %v2581 = vadd.f32 0.0, %v2580
    %v2582 = vpop.f32.mrb[0].mxu0
    %2583 = vdwg.mxu0
    %v2584 = vsel %vm279, %v2581, -inf
    %2585 = vmax.xlane.f32.xlu0 %v2584
    %v2586 = vpop.xlane.xlu0 %2585
    %v2587 = vsub.f32 %v2581, %v2586
    %v2588 = vmul.f32 %v2587, 1.442695
    %v2589 = vpow.pop %v2588
    %v2590 = vsel %vm279, %v2589, 0.0
    %2591 = vadd.xlane.f32.xlu0 %v2590
    %v2592 = vpop.xlane.xlu0 %2591
    %v2593 = vrcp.pop %v2592
    %v2594 = vmul.f32 %v2589, %v2593
    %2595 = vrot.lane.b32.xlu0 %v2496, 96
    %v2596 = vpop.permute.xlu0 %2595
    %v2599 = vsel %vm279, %v2594, 0
    %2601 = vmatprep.subr.mxu0 0.0
    %2602 = vmatpush1.msra.mxu0 %v2596
    %2603 = vmatprep.subr.mxu0 0.0
    %2604 = vmatpush1.msra.mxu0 0.0
    %2605 = vmatprep.subr.mxu0 0.0
    %2606 = vmatpush1.msra.mxu0 0.0
    %2607 = vmatprep.subr.mxu0 0.0
    %2608 = vmatpush1.msra.mxu0 0.0
    %2609 = vmatprep.subr.mxu0 0.0
    %2610 = vmatpush1.msra.mxu0 0.0
    %2611 = vmatprep.subr.mxu0 0.0
    %2612 = vmatpush1.msra.mxu0 0.0
    %2613 = vmatprep.subr.mxu0 0.0
    %2614 = vmatpush1.msra.mxu0 0.0
    %2615 = vmatprep.subr.mxu0 0.0
    %2616 = vmatpush1.msra.mxu0 0.0
    %2617 = vmatprep.subr.mxu0 0.0
    %2618 = vmatpush1.msra.mxu0 0.0
    %2619 = vmatprep.subr.mxu0 0.0
    %2620 = vmatpush1.msra.mxu0 0.0
    %2621 = vmatprep.subr.mxu0 0.0
    %2622 = vmatpush1.msra.mxu0 0.0
    %2623 = vmatprep.subr.mxu0 0.0
    %2624 = vmatpush1.msra.mxu0 0.0
    %2625 = vmatprep.subr.mxu0 0.0
    %2626 = vmatpush1.msra.mxu0 0.0
    %2627 = vmatprep.subr.mxu0 0.0
    %2628 = vmatpush1.msra.mxu0 0.0
    %2629 = vmatprep.subr.mxu0 0.0
    %2630 = vmatpush1.msra.mxu0 0.0
    %2631 = vmatprep.subr.mxu0 0.0
    %2632 = vmatpush1.msra.mxu0 0.0
    %2633 = vmatprep.subr.mxu0 0.0
    %2634 = vmatpush1.msra.mxu0 0.0
    %2635 = vmatprep.subr.mxu0 0.0
    %2636 = vmatpush1.msra.mxu0 0.0
    %2637 = vmatprep.subr.mxu0 0.0
    %2638 = vmatpush1.msra.mxu0 0.0
    %2639 = vmatprep.subr.mxu0 0.0
    %2640 = vmatpush1.msra.mxu0 0.0
    %2641 = vmatprep.subr.mxu0 0.0
    %2642 = vmatpush1.msra.mxu0 0.0
    %2643 = vmatprep.subr.mxu0 0.0
    %2644 = vmatpush1.msra.mxu0 0.0
    %2645 = vmatprep.subr.mxu0 0.0
    %2646 = vmatpush1.msra.mxu0 0.0
    %2647 = vmatprep.subr.mxu0 0.0
    %2648 = vmatpush1.msra.mxu0 0.0
    %2649 = vmatprep.subr.mxu0 0.0
    %2650 = vmatpush1.msra.mxu0 0.0
    %2651 = vmatprep.subr.mxu0 0.0
    %2652 = vmatpush1.msra.mxu0 0.0
    %2653 = vmatprep.subr.mxu0 0.0
    %2654 = vmatpush1.msra.mxu0 0.0
    %2655 = vmatprep.subr.mxu0 0.0
    %2656 = vmatpush1.msra.mxu0 0.0
    %2657 = vmatprep.subr.mxu0 0.0
    %2658 = vmatpush1.msra.mxu0 0.0
    %2659 = vmatprep.subr.mxu0 0.0
    %2660 = vmatpush1.msra.mxu0 0.0
    %2661 = vmatprep.subr.mxu0 0.0
    %2662 = vmatpush1.msra.mxu0 0.0
    %2663 = vmatprep.subr.mxu0 0.0
    %2664 = vmatpush1.msra.mxu0 0.0
    %2665 = vmatprep.mubr.f32.mxu0 0.0
    %2666 = vmatmul.mubr.f32.gmra.mrb[0].mxu0 %v2599
    %v2667 = vpop.f32.mrb[0].mxu0
    %v2668 = vadd.f32 0.0, %v2667
    %v2669 = vpop.f32.mrb[0].mxu0
    %2670 = vdwg.mxu0
    %2671 = vrot.lane.b32.xlu0 %v2496, 124
    %v2672 = vpop.permute.xlu0 %2671
    %2673 = vrot.lane.b32.xlu0 %v2496, 108
    %v2674 = vpop.permute.xlu0 %2673
    %v2675 = vsel %vm204, %v2672, 0
    %v2677 = vsel %vm204, %v2674, 0
    %2679 = vmatprep.subr.mxu0 0.0
    %2680 = vmatpush1.xpose.msra.mxu0 %v2677
    %2681 = vmatprep.subr.mxu0 0.0
    %2682 = vmatpush1.xpose.msra.mxu0 0.0
    %2683 = vmatprep.subr.mxu0 0.0
    %2684 = vmatpush1.xpose.msra.mxu0 0.0
    %2685 = vmatprep.subr.mxu0 0.0
    %2686 = vmatpush1.xpose.msra.mxu0 0.0
    %2687 = vmatprep.subr.mxu0 0.0
    %2688 = vmatpush1.xpose.msra.mxu0 0.0
    %2689 = vmatprep.subr.mxu0 0.0
    %2690 = vmatpush1.xpose.msra.mxu0 0.0
    %2691 = vmatprep.subr.mxu0 0.0
    %2692 = vmatpush1.xpose.msra.mxu0 0.0
    %2693 = vmatprep.subr.mxu0 0.0
    %2694 = vmatpush1.xpose.msra.mxu0 0.0
    %2695 = vmatprep.subr.mxu0 0.0
    %2696 = vmatpush1.xpose.msra.mxu0 0.0
    %2697 = vmatprep.subr.mxu0 0.0
    %2698 = vmatpush1.xpose.msra.mxu0 0.0
    %2699 = vmatprep.subr.mxu0 0.0
    %2700 = vmatpush1.xpose.msra.mxu0 0.0
    %2701 = vmatprep.subr.mxu0 0.0
    %2702 = vmatpush1.xpose.msra.mxu0 0.0
    %2703 = vmatprep.subr.mxu0 0.0
    %2704 = vmatpush1.xpose.msra.mxu0 0.0
    %2705 = vmatprep.subr.mxu0 0.0
    %2706 = vmatpush1.xpose.msra.mxu0 0.0
    %2707 = vmatprep.subr.mxu0 0.0
    %2708 = vmatpush1.xpose.msra.mxu0 0.0
    %2709 = vmatprep.subr.mxu0 0.0
    %2710 = vmatpush1.xpose.msra.mxu0 0.0
    %2711 = vmatprep.subr.mxu0 0.0
    %2712 = vmatpush1.xpose.msra.mxu0 0.0
    %2713 = vmatprep.subr.mxu0 0.0
    %2714 = vmatpush1.xpose.msra.mxu0 0.0
    %2715 = vmatprep.subr.mxu0 0.0
    %2716 = vmatpush1.xpose.msra.mxu0 0.0
    %2717 = vmatprep.subr.mxu0 0.0
    %2718 = vmatpush1.xpose.msra.mxu0 0.0
    %2719 = vmatprep.subr.mxu0 0.0
    %2720 = vmatpush1.xpose.msra.mxu0 0.0
    %2721 = vmatprep.subr.mxu0 0.0
    %2722 = vmatpush1.xpose.msra.mxu0 0.0
    %2723 = vmatprep.subr.mxu0 0.0
    %2724 = vmatpush1.xpose.msra.mxu0 0.0
    %2725 = vmatprep.subr.mxu0 0.0
    %2726 = vmatpush1.xpose.msra.mxu0 0.0
    %2727 = vmatprep.subr.mxu0 0.0
    %2728 = vmatpush1.xpose.msra.mxu0 0.0
    %2729 = vmatprep.subr.mxu0 0.0
    %2730 = vmatpush1.xpose.msra.mxu0 0.0
    %2731 = vmatprep.subr.mxu0 0.0
    %2732 = vmatpush1.xpose.msra.mxu0 0.0
    %2733 = vmatprep.subr.mxu0 0.0
    %2734 = vmatpush1.xpose.msra.mxu0 0.0
    %2735 = vmatprep.subr.mxu0 0.0
    %2736 = vmatpush1.xpose.msra.mxu0 0.0
    %2737 = vmatprep.subr.mxu0 0.0
    %2738 = vmatpush1.xpose.msra.mxu0 0.0
    %2739 = vmatprep.subr.mxu0 0.0
    %2740 = vmatpush1.xpose.msra.mxu0 0.0
    %2741 = vmatprep.subr.mxu0 0.0
    %2742 = vmatpush1.xpose.msra.mxu0 0.0
    %2743 = vmatprep.mubr.f32.mxu0 0.0
    %2744 = vmatmul.mubr.f32.gmra.mrb[0].mxu0 %v2675
    %v2745 = vpop.f32.mrb[0].mxu0
    %v2746 = vadd.f32 0.0, %v2745
    %v2747 = vpop.f32.mrb[0].mxu0
    %2748 = vdwg.mxu0
    %v2749 = vsel %vm279, %v2746, -inf
    %2750 = vmax.xlane.f32.xlu0 %v2749
    %v2751 = vpop.xlane.xlu0 %2750
    %v2752 = vsub.f32 %v2746, %v2751
    %v2753 = vmul.f32 %v2752, 1.442695
    %v2754 = vpow.pop %v2753
    %v2755 = vsel %vm279, %v2754, 0.0
    %2756 = vadd.xlane.f32.xlu0 %v2755
    %v2757 = vpop.xlane.xlu0 %2756
    %v2758 = vrcp.pop %v2757
    %v2759 = vmul.f32 %v2754, %v2758
    %2760 = vrot.lane.b32.xlu0 %v2496, 92
    %v2761 = vpop.permute.xlu0 %2760
    %v2764 = vsel %vm279, %v2759, 0
    %2766 = vmatprep.subr.mxu0 0.0
    %2767 = vmatpush1.msra.mxu0 %v2761
    %2768 = vmatprep.subr.mxu0 0.0
    %2769 = vmatpush1.msra.mxu0 0.0
    %2770 = vmatprep.subr.mxu0 0.0
    %2771 = vmatpush1.msra.mxu0 0.0
    %2772 = vmatprep.subr.mxu0 0.0
    %2773 = vmatpush1.msra.mxu0 0.0
    %2774 = vmatprep.subr.mxu0 0.0
    %2775 = vmatpush1.msra.mxu0 0.0
    %2776 = vmatprep.subr.mxu0 0.0
    %2777 = vmatpush1.msra.mxu0 0.0
    %2778 = vmatprep.subr.mxu0 0.0
    %2779 = vmatpush1.msra.mxu0 0.0
    %2780 = vmatprep.subr.mxu0 0.0
    %2781 = vmatpush1.msra.mxu0 0.0
    %2782 = vmatprep.subr.mxu0 0.0
    %2783 = vmatpush1.msra.mxu0 0.0
    %2784 = vmatprep.subr.mxu0 0.0
    %2785 = vmatpush1.msra.mxu0 0.0
    %2786 = vmatprep.subr.mxu0 0.0
    %2787 = vmatpush1.msra.mxu0 0.0
    %2788 = vmatprep.subr.mxu0 0.0
    %2789 = vmatpush1.msra.mxu0 0.0
    %2790 = vmatprep.subr.mxu0 0.0
    %2791 = vmatpush1.msra.mxu0 0.0
    %2792 = vmatprep.subr.mxu0 0.0
    %2793 = vmatpush1.msra.mxu0 0.0
    %2794 = vmatprep.subr.mxu0 0.0
    %2795 = vmatpush1.msra.mxu0 0.0
    %2796 = vmatprep.subr.mxu0 0.0
    %2797 = vmatpush1.msra.mxu0 0.0
    %2798 = vmatprep.subr.mxu0 0.0
    %2799 = vmatpush1.msra.mxu0 0.0
    %2800 = vmatprep.subr.mxu0 0.0
    %2801 = vmatpush1.msra.mxu0 0.0
    %2802 = vmatprep.subr.mxu0 0.0
    %2803 = vmatpush1.msra.mxu0 0.0
    %2804 = vmatprep.subr.mxu0 0.0
    %2805 = vmatpush1.msra.mxu0 0.0
    %2806 = vmatprep.subr.mxu0 0.0
    %2807 = vmatpush1.msra.mxu0 0.0
    %2808 = vmatprep.subr.mxu0 0.0
    %2809 = vmatpush1.msra.mxu0 0.0
    %2810 = vmatprep.subr.mxu0 0.0
    %2811 = vmatpush1.msra.mxu0 0.0
    %2812 = vmatprep.subr.mxu0 0.0
    %2813 = vmatpush1.msra.mxu0 0.0
    %2814 = vmatprep.subr.mxu0 0.0
    %2815 = vmatpush1.msra.mxu0 0.0
    %2816 = vmatprep.subr.mxu0 0.0
    %2817 = vmatpush1.msra.mxu0 0.0
    %2818 = vmatprep.subr.mxu0 0.0
    %2819 = vmatpush1.msra.mxu0 0.0
    %2820 = vmatprep.subr.mxu0 0.0
    %2821 = vmatpush1.msra.mxu0 0.0
    %2822 = vmatprep.subr.mxu0 0.0
    %2823 = vmatpush1.msra.mxu0 0.0
    %2824 = vmatprep.subr.mxu0 0.0
    %2825 = vmatpush1.msra.mxu0 0.0
    %2826 = vmatprep.subr.mxu0 0.0
    %2827 = vmatpush1.msra.mxu0 0.0
    %2828 = vmatprep.subr.mxu0 0.0
    %2829 = vmatpush1.msra.mxu0 0.0
    %2830 = vmatprep.mubr.f32.mxu0 0.0
    %2831 = vmatmul.mubr.f32.gmra.mrb[0].mxu0 %v2764
    %v2832 = vpop.f32.mrb[0].mxu0
    %v2833 = vadd.f32 0.0, %v2832
    %v2834 = vpop.f32.mrb[0].mxu0
    %2835 = vdwg.mxu0
    %v2837 = vrot.slane %v2505, 4
    %v2839 = vsel %vm204, %v2833, 0
    %v2841 = vsel %vm537, %v2837, 0
    %2843 = vmatprep.subr.mxu0 0.0
    %2844 = vmatpush1.msra.mxu0 %v2841
    %2845 = vmatprep.subr.mxu0 0.0
    %2846 = vmatpush1.msra.mxu0 0.0
    %2847 = vmatprep.subr.mxu0 0.0
    %2848 = vmatpush1.msra.mxu0 0.0
    %2849 = vmatprep.subr.mxu0 0.0
    %2850 = vmatpush1.msra.mxu0 0.0
    %2851 = vmatprep.subr.mxu0 0.0
    %2852 = vmatpush1.msra.mxu0 0.0
    %2853 = vmatprep.subr.mxu0 0.0
    %2854 = vmatpush1.msra.mxu0 0.0
    %2855 = vmatprep.subr.mxu0 0.0
    %2856 = vmatpush1.msra.mxu0 0.0
    %2857 = vmatprep.subr.mxu0 0.0
    %2858 = vmatpush1.msra.mxu0 0.0
    %2859 = vmatprep.subr.mxu0 0.0
    %2860 = vmatpush1.msra.mxu0 0.0
    %2861 = vmatprep.subr.mxu0 0.0
    %2862 = vmatpush1.msra.mxu0 0.0
    %2863 = vmatprep.subr.mxu0 0.0
    %2864 = vmatpush1.msra.mxu0 0.0
    %2865 = vmatprep.subr.mxu0 0.0
    %2866 = vmatpush1.msra.mxu0 0.0
    %2867 = vmatprep.subr.mxu0 0.0
    %2868 = vmatpush1.msra.mxu0 0.0
    %2869 = vmatprep.subr.mxu0 0.0
    %2870 = vmatpush1.msra.mxu0 0.0
    %2871 = vmatprep.subr.mxu0 0.0
    %2872 = vmatpush1.msra.mxu0 0.0
    %2873 = vmatprep.subr.mxu0 0.0
    %2874 = vmatpush1.msra.mxu0 0.0
    %2875 = vmatprep.subr.mxu0 0.0
    %2876 = vmatpush1.msra.mxu0 0.0
    %2877 = vmatprep.subr.mxu0 0.0
    %2878 = vmatpush1.msra.mxu0 0.0
    %2879 = vmatprep.subr.mxu0 0.0
    %2880 = vmatpush1.msra.mxu0 0.0
    %2881 = vmatprep.subr.mxu0 0.0
    %2882 = vmatpush1.msra.mxu0 0.0
    %2883 = vmatprep.subr.mxu0 0.0
    %2884 = vmatpush1.msra.mxu0 0.0
    %2885 = vmatprep.subr.mxu0 0.0
    %2886 = vmatpush1.msra.mxu0 0.0
    %2887 = vmatprep.subr.mxu0 0.0
    %2888 = vmatpush1.msra.mxu0 0.0
    %2889 = vmatprep.subr.mxu0 0.0
    %2890 = vmatpush1.msra.mxu0 0.0
    %2891 = vmatprep.subr.mxu0 0.0
    %2892 = vmatpush1.msra.mxu0 0.0
    %2893 = vmatprep.subr.mxu0 0.0
    %2894 = vmatpush1.msra.mxu0 0.0
    %2895 = vmatprep.subr.mxu0 0.0
    %2896 = vmatpush1.msra.mxu0 0.0
    %2897 = vmatprep.subr.mxu0 0.0
    %2898 = vmatpush1.msra.mxu0 0.0
    %2899 = vmatprep.subr.mxu0 0.0
    %2900 = vmatpush1.msra.mxu0 0.0
    %2901 = vmatprep.subr.mxu0 0.0
    %2902 = vmatpush1.msra.mxu0 0.0
    %2903 = vmatprep.subr.mxu0 0.0
    %2904 = vmatpush1.msra.mxu0 0.0
    %2905 = vmatprep.subr.mxu0 0.0
    %2906 = vmatpush1.msra.mxu0 0.0
    %2907 = vmatprep.mubr.f32.mxu0 0.0
    %2908 = vmatmul.mubr.f32.gmra.mrb[0].mxu0 %v2839
    %v2909 = vpop.f32.mrb[0].mxu0
    %v2910 = vadd.f32 0.0, %v2909
    %v2911 = vpop.f32.mrb[0].mxu0
    %2912 = vdwg.mxu0
    %v2914 = vsel %vm204, %v2668, 0
    %v2916 = vsel %vm537, %v2505, 0
    %2918 = vmatprep.subr.mxu0 0.0
    %2919 = vmatpush1.msra.mxu0 %v2916
    %2920 = vmatprep.subr.mxu0 0.0
    %2921 = vmatpush1.msra.mxu0 0.0
    %2922 = vmatprep.subr.mxu0 0.0
    %2923 = vmatpush1.msra.mxu0 0.0
    %2924 = vmatprep.subr.mxu0 0.0
    %2925 = vmatpush1.msra.mxu0 0.0
    %2926 = vmatprep.subr.mxu0 0.0
    %2927 = vmatpush1.msra.mxu0 0.0
    %2928 = vmatprep.subr.mxu0 0.0
    %2929 = vmatpush1.msra.mxu0 0.0
    %2930 = vmatprep.subr.mxu0 0.0
    %2931 = vmatpush1.msra.mxu0 0.0
    %2932 = vmatprep.subr.mxu0 0.0
    %2933 = vmatpush1.msra.mxu0 0.0
    %2934 = vmatprep.subr.mxu0 0.0
    %2935 = vmatpush1.msra.mxu0 0.0
    %2936 = vmatprep.subr.mxu0 0.0
    %2937 = vmatpush1.msra.mxu0 0.0
    %2938 = vmatprep.subr.mxu0 0.0
    %2939 = vmatpush1.msra.mxu0 0.0
    %2940 = vmatprep.subr.mxu0 0.0
    %2941 = vmatpush1.msra.mxu0 0.0
    %2942 = vmatprep.subr.mxu0 0.0
    %2943 = vmatpush1.msra.mxu0 0.0
    %2944 = vmatprep.subr.mxu0 0.0
    %2945 = vmatpush1.msra.mxu0 0.0
    %2946 = vmatprep.subr.mxu0 0.0
    %2947 = vmatpush1.msra.mxu0 0.0
    %2948 = vmatprep.subr.mxu0 0.0
    %2949 = vmatpush1.msra.mxu0 0.0
    %2950 = vmatprep.subr.mxu0 0.0
    %2951 = vmatpush1.msra.mxu0 0.0
    %2952 = vmatprep.subr.mxu0 0.0
    %2953 = vmatpush1.msra.mxu0 0.0
    %2954 = vmatprep.subr.mxu0 0.0
    %2955 = vmatpush1.msra.mxu0 0.0
    %2956 = vmatprep.subr.mxu0 0.0
    %2957 = vmatpush1.msra.mxu0 0.0
    %2958 = vmatprep.subr.mxu0 0.0
    %2959 = vmatpush1.msra.mxu0 0.0
    %2960 = vmatprep.subr.mxu0 0.0
    %2961 = vmatpush1.msra.mxu0 0.0
    %2962 = vmatprep.subr.mxu0 0.0
    %2963 = vmatpush1.msra.mxu0 0.0
    %2964 = vmatprep.subr.mxu0 0.0
    %2965 = vmatpush1.msra.mxu0 0.0
    %2966 = vmatprep.subr.mxu0 0.0
    %2967 = vmatpush1.msra.mxu0 0.0
    %2968 = vmatprep.subr.mxu0 0.0
    %2969 = vmatpush1.msra.mxu0 0.0
    %2970 = vmatprep.subr.mxu0 0.0
    %2971 = vmatpush1.msra.mxu0 0.0
    %2972 = vmatprep.subr.mxu0 0.0
    %2973 = vmatpush1.msra.mxu0 0.0
    %2974 = vmatprep.subr.mxu0 0.0
    %2975 = vmatpush1.msra.mxu0 0.0
    %2976 = vmatprep.subr.mxu0 0.0
    %2977 = vmatpush1.msra.mxu0 0.0
    %2978 = vmatprep.subr.mxu0 0.0
    %2979 = vmatpush1.msra.mxu0 0.0
    %2980 = vmatprep.subr.mxu0 0.0
    %2981 = vmatpush1.msra.mxu0 0.0
    %2982 = vmatprep.mubr.f32.mxu0 0.0
    %2983 = vmatmul.mubr.f32.gmra.mrb[0].mxu0 %v2914
    %v2984 = vpop.f32.mrb[0].mxu0
    %v2985 = vadd.f32 %v2910, %v2984
    %v2986 = vpop.f32.mrb[0].mxu0
    %2987 = vdwg.mxu0
    %2988 = vrot.lane.b32.xlu0 %v2496, 120
    %v2989 = vpop.permute.xlu0 %2988
    %2990 = vrot.lane.b32.xlu0 %v2496, 104
    %v2991 = vpop.permute.xlu0 %2990
    %v2992 = vsel %vm204, %v2989, 0
    %v2994 = vsel %vm204, %v2991, 0
    %2996 = vmatprep.subr.mxu0 0.0
    %2997 = vmatpush1.xpose.msra.mxu0 %v2994
    %2998 = vmatprep.subr.mxu0 0.0
    %2999 = vmatpush1.xpose.msra.mxu0 0.0
    %3000 = vmatprep.subr.mxu0 0.0
    %3001 = vmatpush1.xpose.msra.mxu0 0.0
    %3002 = vmatprep.subr.mxu0 0.0
    %3003 = vmatpush1.xpose.msra.mxu0 0.0
    %3004 = vmatprep.subr.mxu0 0.0
    %3005 = vmatpush1.xpose.msra.mxu0 0.0
    %3006 = vmatprep.subr.mxu0 0.0
    %3007 = vmatpush1.xpose.msra.mxu0 0.0
    %3008 = vmatprep.subr.mxu0 0.0
    %3009 = vmatpush1.xpose.msra.mxu0 0.0
    %3010 = vmatprep.subr.mxu0 0.0
    %3011 = vmatpush1.xpose.msra.mxu0 0.0
    %3012 = vmatprep.subr.mxu0 0.0
    %3013 = vmatpush1.xpose.msra.mxu0 0.0
    %3014 = vmatprep.subr.mxu0 0.0
    %3015 = vmatpush1.xpose.msra.mxu0 0.0
    %3016 = vmatprep.subr.mxu0 0.0
    %3017 = vmatpush1.xpose.msra.mxu0 0.0
    %3018 = vmatprep.subr.mxu0 0.0
    %3019 = vmatpush1.xpose.msra.mxu0 0.0
    %3020 = vmatprep.subr.mxu0 0.0
    %3021 = vmatpush1.xpose.msra.mxu0 0.0
    %3022 = vmatprep.subr.mxu0 0.0
    %3023 = vmatpush1.xpose.msra.mxu0 0.0
    %3024 = vmatprep.subr.mxu0 0.0
    %3025 = vmatpush1.xpose.msra.mxu0 0.0
    %3026 = vmatprep.subr.mxu0 0.0
    %3027 = vmatpush1.xpose.msra.mxu0 0.0
    %3028 = vmatprep.subr.mxu0 0.0
    %3029 = vmatpush1.xpose.msra.mxu0 0.0
    %3030 = vmatprep.subr.mxu0 0.0
    %3031 = vmatpush1.xpose.msra.mxu0 0.0
    %3032 = vmatprep.subr.mxu0 0.0
    %3033 = vmatpush1.xpose.msra.mxu0 0.0
    %3034 = vmatprep.subr.mxu0 0.0
    %3035 = vmatpush1.xpose.msra.mxu0 0.0
    %3036 = vmatprep.subr.mxu0 0.0
    %3037 = vmatpush1.xpose.msra.mxu0 0.0
    %3038 = vmatprep.subr.mxu0 0.0
    %3039 = vmatpush1.xpose.msra.mxu0 0.0
    %3040 = vmatprep.subr.mxu0 0.0
    %3041 = vmatpush1.xpose.msra.mxu0 0.0
    %3042 = vmatprep.subr.mxu0 0.0
    %3043 = vmatpush1.xpose.msra.mxu0 0.0
    %3044 = vmatprep.subr.mxu0 0.0
    %3045 = vmatpush1.xpose.msra.mxu0 0.0
    %3046 = vmatprep.subr.mxu0 0.0
    %3047 = vmatpush1.xpose.msra.mxu0 0.0
    %3048 = vmatprep.subr.mxu0 0.0
    %3049 = vmatpush1.xpose.msra.mxu0 0.0
    %3050 = vmatprep.subr.mxu0 0.0
    %3051 = vmatpush1.xpose.msra.mxu0 0.0
    %3052 = vmatprep.subr.mxu0 0.0
    %3053 = vmatpush1.xpose.msra.mxu0 0.0
    %3054 = vmatprep.subr.mxu0 0.0
    %3055 = vmatpush1.xpose.msra.mxu0 0.0
    %3056 = vmatprep.subr.mxu0 0.0
    %3057 = vmatpush1.xpose.msra.mxu0 0.0
    %3058 = vmatprep.subr.mxu0 0.0
    %3059 = vmatpush1.xpose.msra.mxu0 0.0
    %3060 = vmatprep.mubr.f32.mxu0 0.0
    %3061 = vmatmul.mubr.f32.gmra.mrb[0].mxu0 %v2992
    %v3062 = vpop.f32.mrb[0].mxu0
    %v3063 = vadd.f32 0.0, %v3062
    %v3064 = vpop.f32.mrb[0].mxu0
    %3065 = vdwg.mxu0
    %v3066 = vsel %vm279, %v3063, -inf
    %3067 = vmax.xlane.f32.xlu0 %v3066
    %v3068 = vpop.xlane.xlu0 %3067
    %v3069 = vsub.f32 %v3063, %v3068
    %v3070 = vmul.f32 %v3069, 1.442695
    %v3071 = vpow.pop %v3070
    %v3072 = vsel %vm279, %v3071, 0.0
    %3073 = vadd.xlane.f32.xlu0 %v3072
    %v3074 = vpop.xlane.xlu0 %3073
    %v3075 = vrcp.pop %v3074
    %v3076 = vmul.f32 %v3071, %v3075
    %3077 = vrot.lane.b32.xlu0 %v2496, 88
    %v3078 = vpop.permute.xlu0 %3077
    %v3081 = vsel %vm279, %v3076, 0
    %3083 = vmatprep.subr.mxu0 0.0
    %3084 = vmatpush1.msra.mxu0 %v3078
    %3085 = vmatprep.subr.mxu0 0.0
    %3086 = vmatpush1.msra.mxu0 0.0
    %3087 = vmatprep.subr.mxu0 0.0
    %3088 = vmatpush1.msra.mxu0 0.0
    %3089 = vmatprep.subr.mxu0 0.0
    %3090 = vmatpush1.msra.mxu0 0.0
    %3091 = vmatprep.subr.mxu0 0.0
    %3092 = vmatpush1.msra.mxu0 0.0
    %3093 = vmatprep.subr.mxu0 0.0
    %3094 = vmatpush1.msra.mxu0 0.0
    %3095 = vmatprep.subr.mxu0 0.0
    %3096 = vmatpush1.msra.mxu0 0.0
    %3097 = vmatprep.subr.mxu0 0.0
    %3098 = vmatpush1.msra.mxu0 0.0
    %3099 = vmatprep.subr.mxu0 0.0
    %3100 = vmatpush1.msra.mxu0 0.0
    %3101 = vmatprep.subr.mxu0 0.0
    %3102 = vmatpush1.msra.mxu0 0.0
    %3103 = vmatprep.subr.mxu0 0.0
    %3104 = vmatpush1.msra.mxu0 0.0
    %3105 = vmatprep.subr.mxu0 0.0
    %3106 = vmatpush1.msra.mxu0 0.0
    %3107 = vmatprep.subr.mxu0 0.0
    %3108 = vmatpush1.msra.mxu0 0.0
    %3109 = vmatprep.subr.mxu0 0.0
    %3110 = vmatpush1.msra.mxu0 0.0
    %3111 = vmatprep.subr.mxu0 0.0
    %3112 = vmatpush1.msra.mxu0 0.0
    %3113 = vmatprep.subr.mxu0 0.0
    %3114 = vmatpush1.msra.mxu0 0.0
    %3115 = vmatprep.subr.mxu0 0.0
    %3116 = vmatpush1.msra.mxu0 0.0
    %3117 = vmatprep.subr.mxu0 0.0
    %3118 = vmatpush1.msra.mxu0 0.0
    %3119 = vmatprep.subr.mxu0 0.0
    %3120 = vmatpush1.msra.mxu0 0.0
    %3121 = vmatprep.subr.mxu0 0.0
    %3122 = vmatpush1.msra.mxu0 0.0
    %3123 = vmatprep.subr.mxu0 0.0
    %3124 = vmatpush1.msra.mxu0 0.0
    %3125 = vmatprep.subr.mxu0 0.0
    %3126 = vmatpush1.msra.mxu0 0.0
    %3127 = vmatprep.subr.mxu0 0.0
    %3128 = vmatpush1.msra.mxu0 0.0
    %3129 = vmatprep.subr.mxu0 0.0
    %3130 = vmatpush1.msra.mxu0 0.0
    %3131 = vmatprep.subr.mxu0 0.0
    %3132 = vmatpush1.msra.mxu0 0.0
    %3133 = vmatprep.subr.mxu0 0.0
    %3134 = vmatpush1.msra.mxu0 0.0
    %3135 = vmatprep.subr.mxu0 0.0
    %3136 = vmatpush1.msra.mxu0 0.0
    %3137 = vmatprep.subr.mxu0 0.0
    %3138 = vmatpush1.msra.mxu0 0.0
    %3139 = vmatprep.subr.mxu0 0.0
    %3140 = vmatpush1.msra.mxu0 0.0
    %3141 = vmatprep.subr.mxu0 0.0
    %3142 = vmatpush1.msra.mxu0 0.0
    %3143 = vmatprep.subr.mxu0 0.0
    %3144 = vmatpush1.msra.mxu0 0.0
    %3145 = vmatprep.subr.mxu0 0.0
    %3146 = vmatpush1.msra.mxu0 0.0
    %3147 = vmatprep.mubr.f32.mxu0 0.0
    %3148 = vmatmul.mubr.f32.gmra.mrb[0].mxu0 %v3081
    %v3149 = vpop.f32.mrb[0].mxu0
    %v3150 = vadd.f32 0.0, %v3149
    %v3151 = vpop.f32.mrb[0].mxu0
    %3152 = vdwg.mxu0
    %v3154 = vsel %vm204, %v3150, 0
    %v3157 = vsel %vm537, %v2506, 0
    %3159 = vmatprep.subr.mxu0 0.0
    %3160 = vmatpush1.msra.mxu0 %v3157
    %3161 = vmatprep.subr.mxu0 0.0
    %3162 = vmatpush1.msra.mxu0 0.0
    %3163 = vmatprep.subr.mxu0 0.0
    %3164 = vmatpush1.msra.mxu0 0.0
    %3165 = vmatprep.subr.mxu0 0.0
    %3166 = vmatpush1.msra.mxu0 0.0
    %3167 = vmatprep.subr.mxu0 0.0
    %3168 = vmatpush1.msra.mxu0 0.0
    %3169 = vmatprep.subr.mxu0 0.0
    %3170 = vmatpush1.msra.mxu0 0.0
    %3171 = vmatprep.subr.mxu0 0.0
    %3172 = vmatpush1.msra.mxu0 0.0
    %3173 = vmatprep.subr.mxu0 0.0
    %3174 = vmatpush1.msra.mxu0 0.0
    %3175 = vmatprep.subr.mxu0 0.0
    %3176 = vmatpush1.msra.mxu0 0.0
    %3177 = vmatprep.subr.mxu0 0.0
    %3178 = vmatpush1.msra.mxu0 0.0
    %3179 = vmatprep.subr.mxu0 0.0
    %3180 = vmatpush1.msra.mxu0 0.0
    %3181 = vmatprep.subr.mxu0 0.0
    %3182 = vmatpush1.msra.mxu0 0.0
    %3183 = vmatprep.subr.mxu0 0.0
    %3184 = vmatpush1.msra.mxu0 0.0
    %3185 = vmatprep.subr.mxu0 0.0
    %3186 = vmatpush1.msra.mxu0 0.0
    %3187 = vmatprep.subr.mxu0 0.0
    %3188 = vmatpush1.msra.mxu0 0.0
    %3189 = vmatprep.subr.mxu0 0.0
    %3190 = vmatpush1.msra.mxu0 0.0
    %3191 = vmatprep.subr.mxu0 0.0
    %3192 = vmatpush1.msra.mxu0 0.0
    %3193 = vmatprep.subr.mxu0 0.0
    %3194 = vmatpush1.msra.mxu0 0.0
    %3195 = vmatprep.subr.mxu0 0.0
    %3196 = vmatpush1.msra.mxu0 0.0
    %3197 = vmatprep.subr.mxu0 0.0
    %3198 = vmatpush1.msra.mxu0 0.0
    %3199 = vmatprep.subr.mxu0 0.0
    %3200 = vmatpush1.msra.mxu0 0.0
    %3201 = vmatprep.subr.mxu0 0.0
    %3202 = vmatpush1.msra.mxu0 0.0
    %3203 = vmatprep.subr.mxu0 0.0
    %3204 = vmatpush1.msra.mxu0 0.0
    %3205 = vmatprep.subr.mxu0 0.0
    %3206 = vmatpush1.msra.mxu0 0.0
    %3207 = vmatprep.subr.mxu0 0.0
    %3208 = vmatpush1.msra.mxu0 0.0
    %3209 = vmatprep.subr.mxu0 0.0
    %3210 = vmatpush1.msra.mxu0 0.0
    %3211 = vmatprep.subr.mxu0 0.0
    %3212 = vmatpush1.msra.mxu0 0.0
    %3213 = vmatprep.subr.mxu0 0.0
    %3214 = vmatpush1.msra.mxu0 0.0
    %3215 = vmatprep.subr.mxu0 0.0
    %3216 = vmatpush1.msra.mxu0 0.0
    %3217 = vmatprep.subr.mxu0 0.0
    %3218 = vmatpush1.msra.mxu0 0.0
    %3219 = vmatprep.subr.mxu0 0.0
    %3220 = vmatpush1.msra.mxu0 0.0
    %3221 = vmatprep.subr.mxu0 0.0
    %3222 = vmatpush1.msra.mxu0 0.0
    %3223 = vmatprep.mubr.f32.mxu0 0.0
    %3224 = vmatmul.mubr.f32.gmra.mrb[0].mxu0 %v3154
    %v3225 = vpop.f32.mrb[0].mxu0
    %v3226 = vadd.f32 0.0, %v3225
    %v3227 = vpop.f32.mrb[0].mxu0
    %3228 = vdwg.mxu0
    %v3229 = vadd.f32 %v2985, %v3226
    %3230 = vrot.lane.b32.xlu0 %v2496, 116
    %v3231 = vpop.permute.xlu0 %3230
    %3232 = vrot.lane.b32.xlu0 %v2496, 100
    %v3233 = vpop.permute.xlu0 %3232
    %v3234 = vsel %vm204, %v3231, 0
    %v3236 = vsel %vm204, %v3233, 0
    %3238 = vmatprep.subr.mxu0 0.0
    %3239 = vmatpush1.xpose.msra.mxu0 %v3236
    %3240 = vmatprep.subr.mxu0 0.0
    %3241 = vmatpush1.xpose.msra.mxu0 0.0
    %3242 = vmatprep.subr.mxu0 0.0
    %3243 = vmatpush1.xpose.msra.mxu0 0.0
    %3244 = vmatprep.subr.mxu0 0.0
    %3245 = vmatpush1.xpose.msra.mxu0 0.0
    %3246 = vmatprep.subr.mxu0 0.0
    %3247 = vmatpush1.xpose.msra.mxu0 0.0
    %3248 = vmatprep.subr.mxu0 0.0
    %3249 = vmatpush1.xpose.msra.mxu0 0.0
    %3250 = vmatprep.subr.mxu0 0.0
    %3251 = vmatpush1.xpose.msra.mxu0 0.0
    %3252 = vmatprep.subr.mxu0 0.0
    %3253 = vmatpush1.xpose.msra.mxu0 0.0
    %3254 = vmatprep.subr.mxu0 0.0
    %3255 = vmatpush1.xpose.msra.mxu0 0.0
    %3256 = vmatprep.subr.mxu0 0.0
    %3257 = vmatpush1.xpose.msra.mxu0 0.0
    %3258 = vmatprep.subr.mxu0 0.0
    %3259 = vmatpush1.xpose.msra.mxu0 0.0
    %3260 = vmatprep.subr.mxu0 0.0
    %3261 = vmatpush1.xpose.msra.mxu0 0.0
    %3262 = vmatprep.subr.mxu0 0.0
    %3263 = vmatpush1.xpose.msra.mxu0 0.0
    %3264 = vmatprep.subr.mxu0 0.0
    %3265 = vmatpush1.xpose.msra.mxu0 0.0
    %3266 = vmatprep.subr.mxu0 0.0
    %3267 = vmatpush1.xpose.msra.mxu0 0.0
    %3268 = vmatprep.subr.mxu0 0.0
    %3269 = vmatpush1.xpose.msra.mxu0 0.0
    %3270 = vmatprep.subr.mxu0 0.0
    %3271 = vmatpush1.xpose.msra.mxu0 0.0
    %3272 = vmatprep.subr.mxu0 0.0
    %3273 = vmatpush1.xpose.msra.mxu0 0.0
    %3274 = vmatprep.subr.mxu0 0.0
    %3275 = vmatpush1.xpose.msra.mxu0 0.0
    %3276 = vmatprep.subr.mxu0 0.0
    %3277 = vmatpush1.xpose.msra.mxu0 0.0
    %3278 = vmatprep.subr.mxu0 0.0
    %3279 = vmatpush1.xpose.msra.mxu0 0.0
    %3280 = vmatprep.subr.mxu0 0.0
    %3281 = vmatpush1.xpose.msra.mxu0 0.0
    %3282 = vmatprep.subr.mxu0 0.0
    %3283 = vmatpush1.xpose.msra.mxu0 0.0
    %3284 = vmatprep.subr.mxu0 0.0
    %3285 = vmatpush1.xpose.msra.mxu0 0.0
    %3286 = vmatprep.subr.mxu0 0.0
    %3287 = vmatpush1.xpose.msra.mxu0 0.0
    %3288 = vmatprep.subr.mxu0 0.0
    %3289 = vmatpush1.xpose.msra.mxu0 0.0
    %3290 = vmatprep.subr.mxu0 0.0
    %3291 = vmatpush1.xpose.msra.mxu0 0.0
    %3292 = vmatprep.subr.mxu0 0.0
    %3293 = vmatpush1.xpose.msra.mxu0 0.0
    %3294 = vmatprep.subr.mxu0 0.0
    %3295 = vmatpush1.xpose.msra.mxu0 0.0
    %3296 = vmatprep.subr.mxu0 0.0
    %3297 = vmatpush1.xpose.msra.mxu0 0.0
    %3298 = vmatprep.subr.mxu0 0.0
    %3299 = vmatpush1.xpose.msra.mxu0 0.0
    %3300 = vmatprep.subr.mxu0 0.0
    %3301 = vmatpush1.xpose.msra.mxu0 0.0
    %3302 = vmatprep.mubr.f32.mxu0 0.0
    %3303 = vmatmul.mubr.f32.gmra.mrb[0].mxu0 %v3234
    %v3304 = vpop.f32.mrb[0].mxu0
    %v3305 = vadd.f32 0.0, %v3304
    %v3306 = vpop.f32.mrb[0].mxu0
    %3307 = vdwg.mxu0
    %v3308 = vsel %vm279, %v3305, -inf
    %3309 = vmax.xlane.f32.xlu0 %v3308
    %v3310 = vpop.xlane.xlu0 %3309
    %v3311 = vsub.f32 %v3305, %v3310
    %v3312 = vmul.f32 %v3311, 1.442695
    %v3313 = vpow.pop %v3312
    %v3314 = vsel %vm279, %v3313, 0.0
    %3315 = vadd.xlane.f32.xlu0 %v3314
    %v3316 = vpop.xlane.xlu0 %3315
    %v3317 = vrcp.pop %v3316
    %v3318 = vmul.f32 %v3313, %v3317
    %3319 = vrot.lane.b32.xlu0 %v2496, 84
    %v3320 = vpop.permute.xlu0 %3319
    %v3323 = vsel %vm279, %v3318, 0
    %3325 = vmatprep.subr.mxu0 0.0
    %3326 = vmatpush1.msra.mxu0 %v3320
    %3327 = vmatprep.subr.mxu0 0.0
    %3328 = vmatpush1.msra.mxu0 0.0
    %3329 = vmatprep.subr.mxu0 0.0
    %3330 = vmatpush1.msra.mxu0 0.0
    %3331 = vmatprep.subr.mxu0 0.0
    %3332 = vmatpush1.msra.mxu0 0.0
    %3333 = vmatprep.subr.mxu0 0.0
    %3334 = vmatpush1.msra.mxu0 0.0
    %3335 = vmatprep.subr.mxu0 0.0
    %3336 = vmatpush1.msra.mxu0 0.0
    %3337 = vmatprep.subr.mxu0 0.0
    %3338 = vmatpush1.msra.mxu0 0.0
    %3339 = vmatprep.subr.mxu0 0.0
    %3340 = vmatpush1.msra.mxu0 0.0
    %3341 = vmatprep.subr.mxu0 0.0
    %3342 = vmatpush1.msra.mxu0 0.0
    %3343 = vmatprep.subr.mxu0 0.0
    %3344 = vmatpush1.msra.mxu0 0.0
    %3345 = vmatprep.subr.mxu0 0.0
    %3346 = vmatpush1.msra.mxu0 0.0
    %3347 = vmatprep.subr.mxu0 0.0
    %3348 = vmatpush1.msra.mxu0 0.0
    %3349 = vmatprep.subr.mxu0 0.0
    %3350 = vmatpush1.msra.mxu0 0.0
    %3351 = vmatprep.subr.mxu0 0.0
    %3352 = vmatpush1.msra.mxu0 0.0
    %3353 = vmatprep.subr.mxu0 0.0
    %3354 = vmatpush1.msra.mxu0 0.0
    %3355 = vmatprep.subr.mxu0 0.0
    %3356 = vmatpush1.msra.mxu0 0.0
    %3357 = vmatprep.subr.mxu0 0.0
    %3358 = vmatpush1.msra.mxu0 0.0
    %3359 = vmatprep.subr.mxu0 0.0
    %3360 = vmatpush1.msra.mxu0 0.0
    %3361 = vmatprep.subr.mxu0 0.0
    %3362 = vmatpush1.msra.mxu0 0.0
    %3363 = vmatprep.subr.mxu0 0.0
    %3364 = vmatpush1.msra.mxu0 0.0
    %3365 = vmatprep.subr.mxu0 0.0
    %3366 = vmatpush1.msra.mxu0 0.0
    %3367 = vmatprep.subr.mxu0 0.0
    %3368 = vmatpush1.msra.mxu0 0.0
    %3369 = vmatprep.subr.mxu0 0.0
    %3370 = vmatpush1.msra.mxu0 0.0
    %3371 = vmatprep.subr.mxu0 0.0
    %3372 = vmatpush1.msra.mxu0 0.0
    %3373 = vmatprep.subr.mxu0 0.0
    %3374 = vmatpush1.msra.mxu0 0.0
    %3375 = vmatprep.subr.mxu0 0.0
    %3376 = vmatpush1.msra.mxu0 0.0
    %3377 = vmatprep.subr.mxu0 0.0
    %3378 = vmatpush1.msra.mxu0 0.0
    %3379 = vmatprep.subr.mxu0 0.0
    %3380 = vmatpush1.msra.mxu0 0.0
    %3381 = vmatprep.subr.mxu0 0.0
    %3382 = vmatpush1.msra.mxu0 0.0
    %3383 = vmatprep.subr.mxu0 0.0
    %3384 = vmatpush1.msra.mxu0 0.0
    %3385 = vmatprep.subr.mxu0 0.0
    %3386 = vmatpush1.msra.mxu0 0.0
    %3387 = vmatprep.subr.mxu0 0.0
    %3388 = vmatpush1.msra.mxu0 0.0
    %3389 = vmatprep.mubr.f32.mxu0 0.0
    %3390 = vmatmul.mubr.f32.gmra.mrb[0].mxu0 %v3323
    %v3391 = vpop.f32.mrb[0].mxu0
    %v3392 = vadd.f32 0.0, %v3391
    %v3393 = vpop.f32.mrb[0].mxu0
    %3394 = vdwg.mxu0
    %v3395 = vrot.slane %v2506, 4
    %v3397 = vsel %vm204, %v3392, 0
    %v3399 = vsel %vm537, %v3395, 0
    %3401 = vmatprep.subr.mxu0 0.0
    %3402 = vmatpush1.msra.mxu0 %v3399
    %3403 = vmatprep.subr.mxu0 0.0
    %3404 = vmatpush1.msra.mxu0 0.0
    %3405 = vmatprep.subr.mxu0 0.0
    %3406 = vmatpush1.msra.mxu0 0.0
    %3407 = vmatprep.subr.mxu0 0.0
    %3408 = vmatpush1.msra.mxu0 0.0
    %3409 = vmatprep.subr.mxu0 0.0
    %3410 = vmatpush1.msra.mxu0 0.0
    %3411 = vmatprep.subr.mxu0 0.0
    %3412 = vmatpush1.msra.mxu0 0.0
    %3413 = vmatprep.subr.mxu0 0.0
    %3414 = vmatpush1.msra.mxu0 0.0
    %3415 = vmatprep.subr.mxu0 0.0
    %3416 = vmatpush1.msra.mxu0 0.0
    %3417 = vmatprep.subr.mxu0 0.0
    %3418 = vmatpush1.msra.mxu0 0.0
    %3419 = vmatprep.subr.mxu0 0.0
    %3420 = vmatpush1.msra.mxu0 0.0
    %3421 = vmatprep.subr.mxu0 0.0
    %3422 = vmatpush1.msra.mxu0 0.0
    %3423 = vmatprep.subr.mxu0 0.0
    %3424 = vmatpush1.msra.mxu0 0.0
    %3425 = vmatprep.subr.mxu0 0.0
    %3426 = vmatpush1.msra.mxu0 0.0
    %3427 = vmatprep.subr.mxu0 0.0
    %3428 = vmatpush1.msra.mxu0 0.0
    %3429 = vmatprep.subr.mxu0 0.0
    %3430 = vmatpush1.msra.mxu0 0.0
    %3431 = vmatprep.subr.mxu0 0.0
    %3432 = vmatpush1.msra.mxu0 0.0
    %3433 = vmatprep.subr.mxu0 0.0
    %3434 = vmatpush1.msra.mxu0 0.0
    %3435 = vmatprep.subr.mxu0 0.0
    %3436 = vmatpush1.msra.mxu0 0.0
    %3437 = vmatprep.subr.mxu0 0.0
    %3438 = vmatpush1.msra.mxu0 0.0
    %3439 = vmatprep.subr.mxu0 0.0
    %3440 = vmatpush1.msra.mxu0 0.0
    %3441 = vmatprep.subr.mxu0 0.0
    %3442 = vmatpush1.msra.mxu0 0.0
    %3443 = vmatprep.subr.mxu0 0.0
    %3444 = vmatpush1.msra.mxu0 0.0
    %3445 = vmatprep.subr.mxu0 0.0
    %3446 = vmatpush1.msra.mxu0 0.0
    %3447 = vmatprep.subr.mxu0 0.0
    %3448 = vmatpush1.msra.mxu0 0.0
    %3449 = vmatprep.subr.mxu0 0.0
    %3450 = vmatpush1.msra.mxu0 0.0
    %3451 = vmatprep.subr.mxu0 0.0
    %3452 = vmatpush1.msra.mxu0 0.0
    %3453 = vmatprep.subr.mxu0 0.0
    %3454 = vmatpush1.msra.mxu0 0.0
    %3455 = vmatprep.subr.mxu0 0.0
    %3456 = vmatpush1.msra.mxu0 0.0
    %3457 = vmatprep.subr.mxu0 0.0
    %3458 = vmatpush1.msra.mxu0 0.0
    %3459 = vmatprep.subr.mxu0 0.0
    %3460 = vmatpush1.msra.mxu0 0.0
    %3461 = vmatprep.subr.mxu0 0.0
    %3462 = vmatpush1.msra.mxu0 0.0
    %3463 = vmatprep.subr.mxu0 0.0
    %3464 = vmatpush1.msra.mxu0 0.0
    %3465 = vmatprep.mubr.f32.mxu0 0.0
    %3466 = vmatmul.mubr.f32.gmra.mrb[0].mxu0 %v3397
    %v3467 = vpop.f32.mrb[0].mxu0
    %v3468 = vadd.f32 0.0, %v3467
    %v3469 = vpop.f32.mrb[0].mxu0
    %3470 = vdwg.mxu0
    %v3471 = vadd.f32 %v3229, %v3468
    %3473 = vrot.lane.b32.xlu0 %v2501, 112
    %v3474 = vpop.permute.xlu0 %3473
    %v3475 = vsel %vm204, %v2501, 0
    %v3477 = vsel %vm204, %v3474, 0
    %3479 = vmatprep.subr.mxu0 0.0
    %3480 = vmatpush1.xpose.msra.mxu0 %v3477
    %3481 = vmatprep.subr.mxu0 0.0
    %3482 = vmatpush1.xpose.msra.mxu0 0.0
    %3483 = vmatprep.subr.mxu0 0.0
    %3484 = vmatpush1.xpose.msra.mxu0 0.0
    %3485 = vmatprep.subr.mxu0 0.0
    %3486 = vmatpush1.xpose.msra.mxu0 0.0
    %3487 = vmatprep.subr.mxu0 0.0
    %3488 = vmatpush1.xpose.msra.mxu0 0.0
    %3489 = vmatprep.subr.mxu0 0.0
    %3490 = vmatpush1.xpose.msra.mxu0 0.0
    %3491 = vmatprep.subr.mxu0 0.0
    %3492 = vmatpush1.xpose.msra.mxu0 0.0
    %3493 = vmatprep.subr.mxu0 0.0
    %3494 = vmatpush1.xpose.msra.mxu0 0.0
    %3495 = vmatprep.subr.mxu0 0.0
    %3496 = vmatpush1.xpose.msra.mxu0 0.0
    %3497 = vmatprep.subr.mxu0 0.0
    %3498 = vmatpush1.xpose.msra.mxu0 0.0
    %3499 = vmatprep.subr.mxu0 0.0
    %3500 = vmatpush1.xpose.msra.mxu0 0.0
    %3501 = vmatprep.subr.mxu0 0.0
    %3502 = vmatpush1.xpose.msra.mxu0 0.0
    %3503 = vmatprep.subr.mxu0 0.0
    %3504 = vmatpush1.xpose.msra.mxu0 0.0
    %3505 = vmatprep.subr.mxu0 0.0
    %3506 = vmatpush1.xpose.msra.mxu0 0.0
    %3507 = vmatprep.subr.mxu0 0.0
    %3508 = vmatpush1.xpose.msra.mxu0 0.0
    %3509 = vmatprep.subr.mxu0 0.0
    %3510 = vmatpush1.xpose.msra.mxu0 0.0
    %3511 = vmatprep.subr.mxu0 0.0
    %3512 = vmatpush1.xpose.msra.mxu0 0.0
    %3513 = vmatprep.subr.mxu0 0.0
    %3514 = vmatpush1.xpose.msra.mxu0 0.0
    %3515 = vmatprep.subr.mxu0 0.0
    %3516 = vmatpush1.xpose.msra.mxu0 0.0
    %3517 = vmatprep.subr.mxu0 0.0
    %3518 = vmatpush1.xpose.msra.mxu0 0.0
    %3519 = vmatprep.subr.mxu0 0.0
    %3520 = vmatpush1.xpose.msra.mxu0 0.0
    %3521 = vmatprep.subr.mxu0 0.0
    %3522 = vmatpush1.xpose.msra.mxu0 0.0
    %3523 = vmatprep.subr.mxu0 0.0
    %3524 = vmatpush1.xpose.msra.mxu0 0.0
    %3525 = vmatprep.subr.mxu0 0.0
    %3526 = vmatpush1.xpose.msra.mxu0 0.0
    %3527 = vmatprep.subr.mxu0 0.0
    %3528 = vmatpush1.xpose.msra.mxu0 0.0
    %3529 = vmatprep.subr.mxu0 0.0
    %3530 = vmatpush1.xpose.msra.mxu0 0.0
    %3531 = vmatprep.subr.mxu0 0.0
    %3532 = vmatpush1.xpose.msra.mxu0 0.0
    %3533 = vmatprep.subr.mxu0 0.0
    %3534 = vmatpush1.xpose.msra.mxu0 0.0
    %3535 = vmatprep.subr.mxu0 0.0
    %3536 = vmatpush1.xpose.msra.mxu0 0.0
    %3537 = vmatprep.subr.mxu0 0.0
    %3538 = vmatpush1.xpose.msra.mxu0 0.0
    %3539 = vmatprep.subr.mxu0 0.0
    %3540 = vmatpush1.xpose.msra.mxu0 0.0
    %3541 = vmatprep.subr.mxu0 0.0
    %3542 = vmatpush1.xpose.msra.mxu0 0.0
    %3543 = vmatprep.mubr.f32.mxu0 0.0
    %3544 = vmatmul.mubr.f32.gmra.mrb[0].mxu0 %v3475
    %v3545 = vpop.f32.mrb[0].mxu0
    %v3546 = vadd.f32 0.0, %v3545
    %v3547 = vpop.f32.mrb[0].mxu0
    %3548 = vdwg.mxu0
    %v3549 = vsel %vm279, %v3546, -inf
    %3550 = vmax.xlane.f32.xlu0 %v3549
    %v3551 = vpop.xlane.xlu0 %3550
    %v3552 = vsub.f32 %v3546, %v3551
    %v3553 = vmul.f32 %v3552, 1.442695
    %v3554 = vpow.pop %v3553
    %v3555 = vsel %vm279, %v3554, 0.0
    %3556 = vadd.xlane.f32.xlu0 %v3555
    %v3557 = vpop.xlane.xlu0 %3556
    %v3558 = vrcp.pop %v3557
    %v3559 = vmul.f32 %v3554, %v3558
    %3560 = vrot.lane.b32.xlu0 %v2501, 96
    %v3561 = vpop.permute.xlu0 %3560
    %v3564 = vsel %vm279, %v3559, 0
    %3566 = vmatprep.subr.mxu0 0.0
    %3567 = vmatpush1.msra.mxu0 %v3561
    %3568 = vmatprep.subr.mxu0 0.0
    %3569 = vmatpush1.msra.mxu0 0.0
    %3570 = vmatprep.subr.mxu0 0.0
    %3571 = vmatpush1.msra.mxu0 0.0
    %3572 = vmatprep.subr.mxu0 0.0
    %3573 = vmatpush1.msra.mxu0 0.0
    %3574 = vmatprep.subr.mxu0 0.0
    %3575 = vmatpush1.msra.mxu0 0.0
    %3576 = vmatprep.subr.mxu0 0.0
    %3577 = vmatpush1.msra.mxu0 0.0
    %3578 = vmatprep.subr.mxu0 0.0
    %3579 = vmatpush1.msra.mxu0 0.0
    %3580 = vmatprep.subr.mxu0 0.0
    %3581 = vmatpush1.msra.mxu0 0.0
    %3582 = vmatprep.subr.mxu0 0.0
    %3583 = vmatpush1.msra.mxu0 0.0
    %3584 = vmatprep.subr.mxu0 0.0
    %3585 = vmatpush1.msra.mxu0 0.0
    %3586 = vmatprep.subr.mxu0 0.0
    %3587 = vmatpush1.msra.mxu0 0.0
    %3588 = vmatprep.subr.mxu0 0.0
    %3589 = vmatpush1.msra.mxu0 0.0
    %3590 = vmatprep.subr.mxu0 0.0
    %3591 = vmatpush1.msra.mxu0 0.0
    %3592 = vmatprep.subr.mxu0 0.0
    %3593 = vmatpush1.msra.mxu0 0.0
    %3594 = vmatprep.subr.mxu0 0.0
    %3595 = vmatpush1.msra.mxu0 0.0
    %3596 = vmatprep.subr.mxu0 0.0
    %3597 = vmatpush1.msra.mxu0 0.0
    %3598 = vmatprep.subr.mxu0 0.0
    %3599 = vmatpush1.msra.mxu0 0.0
    %3600 = vmatprep.subr.mxu0 0.0
    %3601 = vmatpush1.msra.mxu0 0.0
    %3602 = vmatprep.subr.mxu0 0.0
    %3603 = vmatpush1.msra.mxu0 0.0
    %3604 = vmatprep.subr.mxu0 0.0
    %3605 = vmatpush1.msra.mxu0 0.0
    %3606 = vmatprep.subr.mxu0 0.0
    %3607 = vmatpush1.msra.mxu0 0.0
    %3608 = vmatprep.subr.mxu0 0.0
    %3609 = vmatpush1.msra.mxu0 0.0
    %3610 = vmatprep.subr.mxu0 0.0
    %3611 = vmatpush1.msra.mxu0 0.0
    %3612 = vmatprep.subr.mxu0 0.0
    %3613 = vmatpush1.msra.mxu0 0.0
    %3614 = vmatprep.subr.mxu0 0.0
    %3615 = vmatpush1.msra.mxu0 0.0
    %3616 = vmatprep.subr.mxu0 0.0
    %3617 = vmatpush1.msra.mxu0 0.0
    %3618 = vmatprep.subr.mxu0 0.0
    %3619 = vmatpush1.msra.mxu0 0.0
    %3620 = vmatprep.subr.mxu0 0.0
    %3621 = vmatpush1.msra.mxu0 0.0
    %3622 = vmatprep.subr.mxu0 0.0
    %3623 = vmatpush1.msra.mxu0 0.0
    %3624 = vmatprep.subr.mxu0 0.0
    %3625 = vmatpush1.msra.mxu0 0.0
    %3626 = vmatprep.subr.mxu0 0.0
    %3627 = vmatpush1.msra.mxu0 0.0
    %3628 = vmatprep.subr.mxu0 0.0
    %3629 = vmatpush1.msra.mxu0 0.0
    %3630 = vmatprep.mubr.f32.mxu0 0.0
    %3631 = vmatmul.mubr.f32.gmra.mrb[0].mxu0 %v3564
    %v3632 = vpop.f32.mrb[0].mxu0
    %v3633 = vadd.f32 0.0, %v3632
    %v3634 = vpop.f32.mrb[0].mxu0
    %3635 = vdwg.mxu0
    %3636 = vrot.lane.b32.xlu0 %v2501, 124
    %v3637 = vpop.permute.xlu0 %3636
    %3638 = vrot.lane.b32.xlu0 %v2501, 108
    %v3639 = vpop.permute.xlu0 %3638
    %v3640 = vsel %vm204, %v3637, 0
    %v3642 = vsel %vm204, %v3639, 0
    %3644 = vmatprep.subr.mxu0 0.0
    %3645 = vmatpush1.xpose.msra.mxu0 %v3642
    %3646 = vmatprep.subr.mxu0 0.0
    %3647 = vmatpush1.xpose.msra.mxu0 0.0
    %3648 = vmatprep.subr.mxu0 0.0
    %3649 = vmatpush1.xpose.msra.mxu0 0.0
    %3650 = vmatprep.subr.mxu0 0.0
    %3651 = vmatpush1.xpose.msra.mxu0 0.0
    %3652 = vmatprep.subr.mxu0 0.0
    %3653 = vmatpush1.xpose.msra.mxu0 0.0
    %3654 = vmatprep.subr.mxu0 0.0
    %3655 = vmatpush1.xpose.msra.mxu0 0.0
    %3656 = vmatprep.subr.mxu0 0.0
    %3657 = vmatpush1.xpose.msra.mxu0 0.0
    %3658 = vmatprep.subr.mxu0 0.0
    %3659 = vmatpush1.xpose.msra.mxu0 0.0
    %3660 = vmatprep.subr.mxu0 0.0
    %3661 = vmatpush1.xpose.msra.mxu0 0.0
    %3662 = vmatprep.subr.mxu0 0.0
    %3663 = vmatpush1.xpose.msra.mxu0 0.0
    %3664 = vmatprep.subr.mxu0 0.0
    %3665 = vmatpush1.xpose.msra.mxu0 0.0
    %3666 = vmatprep.subr.mxu0 0.0
    %3667 = vmatpush1.xpose.msra.mxu0 0.0
    %3668 = vmatprep.subr.mxu0 0.0
    %3669 = vmatpush1.xpose.msra.mxu0 0.0
    %3670 = vmatprep.subr.mxu0 0.0
    %3671 = vmatpush1.xpose.msra.mxu0 0.0
    %3672 = vmatprep.subr.mxu0 0.0
    %3673 = vmatpush1.xpose.msra.mxu0 0.0
    %3674 = vmatprep.subr.mxu0 0.0
    %3675 = vmatpush1.xpose.msra.mxu0 0.0
    %3676 = vmatprep.subr.mxu0 0.0
    %3677 = vmatpush1.xpose.msra.mxu0 0.0
    %3678 = vmatprep.subr.mxu0 0.0
    %3679 = vmatpush1.xpose.msra.mxu0 0.0
    %3680 = vmatprep.subr.mxu0 0.0
    %3681 = vmatpush1.xpose.msra.mxu0 0.0
    %3682 = vmatprep.subr.mxu0 0.0
    %3683 = vmatpush1.xpose.msra.mxu0 0.0
    %3684 = vmatprep.subr.mxu0 0.0
    %3685 = vmatpush1.xpose.msra.mxu0 0.0
    %3686 = vmatprep.subr.mxu0 0.0
    %3687 = vmatpush1.xpose.msra.mxu0 0.0
    %3688 = vmatprep.subr.mxu0 0.0
    %3689 = vmatpush1.xpose.msra.mxu0 0.0
    %3690 = vmatprep.subr.mxu0 0.0
    %3691 = vmatpush1.xpose.msra.mxu0 0.0
    %3692 = vmatprep.subr.mxu0 0.0
    %3693 = vmatpush1.xpose.msra.mxu0 0.0
    %3694 = vmatprep.subr.mxu0 0.0
    %3695 = vmatpush1.xpose.msra.mxu0 0.0
    %3696 = vmatprep.subr.mxu0 0.0
    %3697 = vmatpush1.xpose.msra.mxu0 0.0
    %3698 = vmatprep.subr.mxu0 0.0
    %3699 = vmatpush1.xpose.msra.mxu0 0.0
    %3700 = vmatprep.subr.mxu0 0.0
    %3701 = vmatpush1.xpose.msra.mxu0 0.0
    %3702 = vmatprep.subr.mxu0 0.0
    %3703 = vmatpush1.xpose.msra.mxu0 0.0
    %3704 = vmatprep.subr.mxu0 0.0
    %3705 = vmatpush1.xpose.msra.mxu0 0.0
    %3706 = vmatprep.subr.mxu0 0.0
    %3707 = vmatpush1.xpose.msra.mxu0 0.0
    %3708 = vmatprep.mubr.f32.mxu0 0.0
    %3709 = vmatmul.mubr.f32.gmra.mrb[0].mxu0 %v3640
    %v3710 = vpop.f32.mrb[0].mxu0
    %v3711 = vadd.f32 0.0, %v3710
    %v3712 = vpop.f32.mrb[0].mxu0
    %3713 = vdwg.mxu0
    %v3714 = vsel %vm279, %v3711, -inf
    %3715 = vmax.xlane.f32.xlu0 %v3714
    %v3716 = vpop.xlane.xlu0 %3715
    %v3717 = vsub.f32 %v3711, %v3716
    %v3718 = vmul.f32 %v3717, 1.442695
    %v3719 = vpow.pop %v3718
    %v3720 = vsel %vm279, %v3719, 0.0
    %3721 = vadd.xlane.f32.xlu0 %v3720
    %v3722 = vpop.xlane.xlu0 %3721
    %v3723 = vrcp.pop %v3722
    %v3724 = vmul.f32 %v3719, %v3723
    %3725 = vrot.lane.b32.xlu0 %v2501, 92
    %v3726 = vpop.permute.xlu0 %3725
    %v3729 = vsel %vm279, %v3724, 0
    %3731 = vmatprep.subr.mxu0 0.0
    %3732 = vmatpush1.msra.mxu0 %v3726
    %3733 = vmatprep.subr.mxu0 0.0
    %3734 = vmatpush1.msra.mxu0 0.0
    %3735 = vmatprep.subr.mxu0 0.0
    %3736 = vmatpush1.msra.mxu0 0.0
    %3737 = vmatprep.subr.mxu0 0.0
    %3738 = vmatpush1.msra.mxu0 0.0
    %3739 = vmatprep.subr.mxu0 0.0
    %3740 = vmatpush1.msra.mxu0 0.0
    %3741 = vmatprep.subr.mxu0 0.0
    %3742 = vmatpush1.msra.mxu0 0.0
    %3743 = vmatprep.subr.mxu0 0.0
    %3744 = vmatpush1.msra.mxu0 0.0
    %3745 = vmatprep.subr.mxu0 0.0
    %3746 = vmatpush1.msra.mxu0 0.0
    %3747 = vmatprep.subr.mxu0 0.0
    %3748 = vmatpush1.msra.mxu0 0.0
    %3749 = vmatprep.subr.mxu0 0.0
    %3750 = vmatpush1.msra.mxu0 0.0
    %3751 = vmatprep.subr.mxu0 0.0
    %3752 = vmatpush1.msra.mxu0 0.0
    %3753 = vmatprep.subr.mxu0 0.0
    %3754 = vmatpush1.msra.mxu0 0.0
    %3755 = vmatprep.subr.mxu0 0.0
    %3756 = vmatpush1.msra.mxu0 0.0
    %3757 = vmatprep.subr.mxu0 0.0
    %3758 = vmatpush1.msra.mxu0 0.0
    %3759 = vmatprep.subr.mxu0 0.0
    %3760 = vmatpush1.msra.mxu0 0.0
    %3761 = vmatprep.subr.mxu0 0.0
    %3762 = vmatpush1.msra.mxu0 0.0
    %3763 = vmatprep.subr.mxu0 0.0
    %3764 = vmatpush1.msra.mxu0 0.0
    %3765 = vmatprep.subr.mxu0 0.0
    %3766 = vmatpush1.msra.mxu0 0.0
    %3767 = vmatprep.subr.mxu0 0.0
    %3768 = vmatpush1.msra.mxu0 0.0
    %3769 = vmatprep.subr.mxu0 0.0
    %3770 = vmatpush1.msra.mxu0 0.0
    %3771 = vmatprep.subr.mxu0 0.0
    %3772 = vmatpush1.msra.mxu0 0.0
    %3773 = vmatprep.subr.mxu0 0.0
    %3774 = vmatpush1.msra.mxu0 0.0
    %3775 = vmatprep.subr.mxu0 0.0
    %3776 = vmatpush1.msra.mxu0 0.0
    %3777 = vmatprep.subr.mxu0 0.0
    %3778 = vmatpush1.msra.mxu0 0.0
    %3779 = vmatprep.subr.mxu0 0.0
    %3780 = vmatpush1.msra.mxu0 0.0
    %3781 = vmatprep.subr.mxu0 0.0
    %3782 = vmatpush1.msra.mxu0 0.0
    %3783 = vmatprep.subr.mxu0 0.0
    %3784 = vmatpush1.msra.mxu0 0.0
    %3785 = vmatprep.subr.mxu0 0.0
    %3786 = vmatpush1.msra.mxu0 0.0
    %3787 = vmatprep.subr.mxu0 0.0
    %3788 = vmatpush1.msra.mxu0 0.0
    %3789 = vmatprep.subr.mxu0 0.0
    %3790 = vmatpush1.msra.mxu0 0.0
    %3791 = vmatprep.subr.mxu0 0.0
    %3792 = vmatpush1.msra.mxu0 0.0
    %3793 = vmatprep.subr.mxu0 0.0
    %3794 = vmatpush1.msra.mxu0 0.0
    %3795 = vmatprep.mubr.f32.mxu0 0.0
    %3796 = vmatmul.mubr.f32.gmra.mrb[0].mxu0 %v3729
    %v3797 = vpop.f32.mrb[0].mxu0
    %v3798 = vadd.f32 0.0, %v3797
    %v3799 = vpop.f32.mrb[0].mxu0
    %3800 = vdwg.mxu0
    %v3802 = vsel %vm204, %v3798, 0
    %3804 = vmatprep.subr.mxu0 0.0
    %3805 = vmatpush1.msra.mxu0 %v2841
    %3806 = vmatprep.subr.mxu0 0.0
    %3807 = vmatpush1.msra.mxu0 0.0
    %3808 = vmatprep.subr.mxu0 0.0
    %3809 = vmatpush1.msra.mxu0 0.0
    %3810 = vmatprep.subr.mxu0 0.0
    %3811 = vmatpush1.msra.mxu0 0.0
    %3812 = vmatprep.subr.mxu0 0.0
    %3813 = vmatpush1.msra.mxu0 0.0
    %3814 = vmatprep.subr.mxu0 0.0
    %3815 = vmatpush1.msra.mxu0 0.0
    %3816 = vmatprep.subr.mxu0 0.0
    %3817 = vmatpush1.msra.mxu0 0.0
    %3818 = vmatprep.subr.mxu0 0.0
    %3819 = vmatpush1.msra.mxu0 0.0
    %3820 = vmatprep.subr.mxu0 0.0
    %3821 = vmatpush1.msra.mxu0 0.0
    %3822 = vmatprep.subr.mxu0 0.0
    %3823 = vmatpush1.msra.mxu0 0.0
    %3824 = vmatprep.subr.mxu0 0.0
    %3825 = vmatpush1.msra.mxu0 0.0
    %3826 = vmatprep.subr.mxu0 0.0
    %3827 = vmatpush1.msra.mxu0 0.0
    %3828 = vmatprep.subr.mxu0 0.0
    %3829 = vmatpush1.msra.mxu0 0.0
    %3830 = vmatprep.subr.mxu0 0.0
    %3831 = vmatpush1.msra.mxu0 0.0
    %3832 = vmatprep.subr.mxu0 0.0
    %3833 = vmatpush1.msra.mxu0 0.0
    %3834 = vmatprep.subr.mxu0 0.0
    %3835 = vmatpush1.msra.mxu0 0.0
    %3836 = vmatprep.subr.mxu0 0.0
    %3837 = vmatpush1.msra.mxu0 0.0
    %3838 = vmatprep.subr.mxu0 0.0
    %3839 = vmatpush1.msra.mxu0 0.0
    %3840 = vmatprep.subr.mxu0 0.0
    %3841 = vmatpush1.msra.mxu0 0.0
    %3842 = vmatprep.subr.mxu0 0.0
    %3843 = vmatpush1.msra.mxu0 0.0
    %3844 = vmatprep.subr.mxu0 0.0
    %3845 = vmatpush1.msra.mxu0 0.0
    %3846 = vmatprep.subr.mxu0 0.0
    %3847 = vmatpush1.msra.mxu0 0.0
    %3848 = vmatprep.subr.mxu0 0.0
    %3849 = vmatpush1.msra.mxu0 0.0
    %3850 = vmatprep.subr.mxu0 0.0
    %3851 = vmatpush1.msra.mxu0 0.0
    %3852 = vmatprep.subr.mxu0 0.0
    %3853 = vmatpush1.msra.mxu0 0.0
    %3854 = vmatprep.subr.mxu0 0.0
    %3855 = vmatpush1.msra.mxu0 0.0
    %3856 = vmatprep.subr.mxu0 0.0
    %3857 = vmatpush1.msra.mxu0 0.0
    %3858 = vmatprep.subr.mxu0 0.0
    %3859 = vmatpush1.msra.mxu0 0.0
    %3860 = vmatprep.subr.mxu0 0.0
    %3861 = vmatpush1.msra.mxu0 0.0
    %3862 = vmatprep.subr.mxu0 0.0
    %3863 = vmatpush1.msra.mxu0 0.0
    %3864 = vmatprep.subr.mxu0 0.0
    %3865 = vmatpush1.msra.mxu0 0.0
    %3866 = vmatprep.subr.mxu0 0.0
    %3867 = vmatpush1.msra.mxu0 0.0
    %3868 = vmatprep.mubr.f32.mxu0 0.0
    %3869 = vmatmul.mubr.f32.gmra.mrb[0].mxu0 %v3802
    %v3870 = vpop.f32.mrb[0].mxu0
    %v3871 = vadd.f32 0.0, %v3870
    %v3872 = vpop.f32.mrb[0].mxu0
    %3873 = vdwg.mxu0
    %v3875 = vsel %vm204, %v3633, 0
    %3877 = vmatprep.subr.mxu0 0.0
    %3878 = vmatpush1.msra.mxu0 %v2916
    %3879 = vmatprep.subr.mxu0 0.0
    %3880 = vmatpush1.msra.mxu0 0.0
    %3881 = vmatprep.subr.mxu0 0.0
    %3882 = vmatpush1.msra.mxu0 0.0
    %3883 = vmatprep.subr.mxu0 0.0
    %3884 = vmatpush1.msra.mxu0 0.0
    %3885 = vmatprep.subr.mxu0 0.0
    %3886 = vmatpush1.msra.mxu0 0.0
    %3887 = vmatprep.subr.mxu0 0.0
    %3888 = vmatpush1.msra.mxu0 0.0
    %3889 = vmatprep.subr.mxu0 0.0
    %3890 = vmatpush1.msra.mxu0 0.0
    %3891 = vmatprep.subr.mxu0 0.0
    %3892 = vmatpush1.msra.mxu0 0.0
    %3893 = vmatprep.subr.mxu0 0.0
    %3894 = vmatpush1.msra.mxu0 0.0
    %3895 = vmatprep.subr.mxu0 0.0
    %3896 = vmatpush1.msra.mxu0 0.0
    %3897 = vmatprep.subr.mxu0 0.0
    %3898 = vmatpush1.msra.mxu0 0.0
    %3899 = vmatprep.subr.mxu0 0.0
    %3900 = vmatpush1.msra.mxu0 0.0
    %3901 = vmatprep.subr.mxu0 0.0
    %3902 = vmatpush1.msra.mxu0 0.0
    %3903 = vmatprep.subr.mxu0 0.0
    %3904 = vmatpush1.msra.mxu0 0.0
    %3905 = vmatprep.subr.mxu0 0.0
    %3906 = vmatpush1.msra.mxu0 0.0
    %3907 = vmatprep.subr.mxu0 0.0
    %3908 = vmatpush1.msra.mxu0 0.0
    %3909 = vmatprep.subr.mxu0 0.0
    %3910 = vmatpush1.msra.mxu0 0.0
    %3911 = vmatprep.subr.mxu0 0.0
    %3912 = vmatpush1.msra.mxu0 0.0
    %3913 = vmatprep.subr.mxu0 0.0
    %3914 = vmatpush1.msra.mxu0 0.0
    %3915 = vmatprep.subr.mxu0 0.0
    %3916 = vmatpush1.msra.mxu0 0.0
    %3917 = vmatprep.subr.mxu0 0.0
    %3918 = vmatpush1.msra.mxu0 0.0
    %3919 = vmatprep.subr.mxu0 0.0
    %3920 = vmatpush1.msra.mxu0 0.0
    %3921 = vmatprep.subr.mxu0 0.0
    %3922 = vmatpush1.msra.mxu0 0.0
    %3923 = vmatprep.subr.mxu0 0.0
    %3924 = vmatpush1.msra.mxu0 0.0
    %3925 = vmatprep.subr.mxu0 0.0
    %3926 = vmatpush1.msra.mxu0 0.0
    %3927 = vmatprep.subr.mxu0 0.0
    %3928 = vmatpush1.msra.mxu0 0.0
    %3929 = vmatprep.subr.mxu0 0.0
    %3930 = vmatpush1.msra.mxu0 0.0
    %3931 = vmatprep.subr.mxu0 0.0
    %3932 = vmatpush1.msra.mxu0 0.0
    %3933 = vmatprep.subr.mxu0 0.0
    %3934 = vmatpush1.msra.mxu0 0.0
    %3935 = vmatprep.subr.mxu0 0.0
    %3936 = vmatpush1.msra.mxu0 0.0
    %3937 = vmatprep.subr.mxu0 0.0
    %3938 = vmatpush1.msra.mxu0 0.0
    %3939 = vmatprep.subr.mxu0 0.0
    %3940 = vmatpush1.msra.mxu0 0.0
    %3941 = vmatprep.mubr.f32.mxu0 0.0
    %3942 = vmatmul.mubr.f32.gmra.mrb[0].mxu0 %v3875
    %v3943 = vpop.f32.mrb[0].mxu0
    %v3944 = vadd.f32 %v3871, %v3943
    %v3945 = vpop.f32.mrb[0].mxu0
    %3946 = vdwg.mxu0
    %3947 = vrot.lane.b32.xlu0 %v2501, 120
    %v3948 = vpop.permute.xlu0 %3947
    %3949 = vrot.lane.b32.xlu0 %v2501, 104
    %v3950 = vpop.permute.xlu0 %3949
    %v3951 = vsel %vm204, %v3948, 0
    %v3953 = vsel %vm204, %v3950, 0
    %3955 = vmatprep.subr.mxu0 0.0
    %3956 = vmatpush1.xpose.msra.mxu0 %v3953
    %3957 = vmatprep.subr.mxu0 0.0
    %3958 = vmatpush1.xpose.msra.mxu0 0.0
    %3959 = vmatprep.subr.mxu0 0.0
    %3960 = vmatpush1.xpose.msra.mxu0 0.0
    %3961 = vmatprep.subr.mxu0 0.0
    %3962 = vmatpush1.xpose.msra.mxu0 0.0
    %3963 = vmatprep.subr.mxu0 0.0
    %3964 = vmatpush1.xpose.msra.mxu0 0.0
    %3965 = vmatprep.subr.mxu0 0.0
    %3966 = vmatpush1.xpose.msra.mxu0 0.0
    %3967 = vmatprep.subr.mxu0 0.0
    %3968 = vmatpush1.xpose.msra.mxu0 0.0
    %3969 = vmatprep.subr.mxu0 0.0
    %3970 = vmatpush1.xpose.msra.mxu0 0.0
    %3971 = vmatprep.subr.mxu0 0.0
    %3972 = vmatpush1.xpose.msra.mxu0 0.0
    %3973 = vmatprep.subr.mxu0 0.0
    %3974 = vmatpush1.xpose.msra.mxu0 0.0
    %3975 = vmatprep.subr.mxu0 0.0
    %3976 = vmatpush1.xpose.msra.mxu0 0.0
    %3977 = vmatprep.subr.mxu0 0.0
    %3978 = vmatpush1.xpose.msra.mxu0 0.0
    %3979 = vmatprep.subr.mxu0 0.0
    %3980 = vmatpush1.xpose.msra.mxu0 0.0
    %3981 = vmatprep.subr.mxu0 0.0
    %3982 = vmatpush1.xpose.msra.mxu0 0.0
    %3983 = vmatprep.subr.mxu0 0.0
    %3984 = vmatpush1.xpose.msra.mxu0 0.0
    %3985 = vmatprep.subr.mxu0 0.0
    %3986 = vmatpush1.xpose.msra.mxu0 0.0
    %3987 = vmatprep.subr.mxu0 0.0
    %3988 = vmatpush1.xpose.msra.mxu0 0.0
    %3989 = vmatprep.subr.mxu0 0.0
    %3990 = vmatpush1.xpose.msra.mxu0 0.0
    %3991 = vmatprep.subr.mxu0 0.0
    %3992 = vmatpush1.xpose.msra.mxu0 0.0
    %3993 = vmatprep.subr.mxu0 0.0
    %3994 = vmatpush1.xpose.msra.mxu0 0.0
    %3995 = vmatprep.subr.mxu0 0.0
    %3996 = vmatpush1.xpose.msra.mxu0 0.0
    %3997 = vmatprep.subr.mxu0 0.0
    %3998 = vmatpush1.xpose.msra.mxu0 0.0
    %3999 = vmatprep.subr.mxu0 0.0
    %4000 = vmatpush1.xpose.msra.mxu0 0.0
    %4001 = vmatprep.subr.mxu0 0.0
    %4002 = vmatpush1.xpose.msra.mxu0 0.0
    %4003 = vmatprep.subr.mxu0 0.0
    %4004 = vmatpush1.xpose.msra.mxu0 0.0
    %4005 = vmatprep.subr.mxu0 0.0
    %4006 = vmatpush1.xpose.msra.mxu0 0.0
    %4007 = vmatprep.subr.mxu0 0.0
    %4008 = vmatpush1.xpose.msra.mxu0 0.0
    %4009 = vmatprep.subr.mxu0 0.0
    %4010 = vmatpush1.xpose.msra.mxu0 0.0
    %4011 = vmatprep.subr.mxu0 0.0
    %4012 = vmatpush1.xpose.msra.mxu0 0.0
    %4013 = vmatprep.subr.mxu0 0.0
    %4014 = vmatpush1.xpose.msra.mxu0 0.0
    %4015 = vmatprep.subr.mxu0 0.0
    %4016 = vmatpush1.xpose.msra.mxu0 0.0
    %4017 = vmatprep.subr.mxu0 0.0
    %4018 = vmatpush1.xpose.msra.mxu0 0.0
    %4019 = vmatprep.mubr.f32.mxu0 0.0
    %4020 = vmatmul.mubr.f32.gmra.mrb[0].mxu0 %v3951
    %v4021 = vpop.f32.mrb[0].mxu0
    %v4022 = vadd.f32 0.0, %v4021
    %v4023 = vpop.f32.mrb[0].mxu0
    %4024 = vdwg.mxu0
    %v4025 = vsel %vm279, %v4022, -inf
    %4026 = vmax.xlane.f32.xlu0 %v4025
    %v4027 = vpop.xlane.xlu0 %4026
    %v4028 = vsub.f32 %v4022, %v4027
    %v4029 = vmul.f32 %v4028, 1.442695
    %v4030 = vpow.pop %v4029
    %v4031 = vsel %vm279, %v4030, 0.0
    %4032 = vadd.xlane.f32.xlu0 %v4031
    %v4033 = vpop.xlane.xlu0 %4032
    %v4034 = vrcp.pop %v4033
    %v4035 = vmul.f32 %v4030, %v4034
    %4036 = vrot.lane.b32.xlu0 %v2501, 88
    %v4037 = vpop.permute.xlu0 %4036
    %v4040 = vsel %vm279, %v4035, 0
    %4042 = vmatprep.subr.mxu0 0.0
    %4043 = vmatpush1.msra.mxu0 %v4037
    %4044 = vmatprep.subr.mxu0 0.0
    %4045 = vmatpush1.msra.mxu0 0.0
    %4046 = vmatprep.subr.mxu0 0.0
    %4047 = vmatpush1.msra.mxu0 0.0
    %4048 = vmatprep.subr.mxu0 0.0
    %4049 = vmatpush1.msra.mxu0 0.0
    %4050 = vmatprep.subr.mxu0 0.0
    %4051 = vmatpush1.msra.mxu0 0.0
    %4052 = vmatprep.subr.mxu0 0.0
    %4053 = vmatpush1.msra.mxu0 0.0
    %4054 = vmatprep.subr.mxu0 0.0
    %4055 = vmatpush1.msra.mxu0 0.0
    %4056 = vmatprep.subr.mxu0 0.0
    %4057 = vmatpush1.msra.mxu0 0.0
    %4058 = vmatprep.subr.mxu0 0.0
    %4059 = vmatpush1.msra.mxu0 0.0
    %4060 = vmatprep.subr.mxu0 0.0
    %4061 = vmatpush1.msra.mxu0 0.0
    %4062 = vmatprep.subr.mxu0 0.0
    %4063 = vmatpush1.msra.mxu0 0.0
    %4064 = vmatprep.subr.mxu0 0.0
    %4065 = vmatpush1.msra.mxu0 0.0
    %4066 = vmatprep.subr.mxu0 0.0
    %4067 = vmatpush1.msra.mxu0 0.0
    %4068 = vmatprep.subr.mxu0 0.0
    %4069 = vmatpush1.msra.mxu0 0.0
    %4070 = vmatprep.subr.mxu0 0.0
    %4071 = vmatpush1.msra.mxu0 0.0
    %4072 = vmatprep.subr.mxu0 0.0
    %4073 = vmatpush1.msra.mxu0 0.0
    %4074 = vmatprep.subr.mxu0 0.0
    %4075 = vmatpush1.msra.mxu0 0.0
    %4076 = vmatprep.subr.mxu0 0.0
    %4077 = vmatpush1.msra.mxu0 0.0
    %4078 = vmatprep.subr.mxu0 0.0
    %4079 = vmatpush1.msra.mxu0 0.0
    %4080 = vmatprep.subr.mxu0 0.0
    %4081 = vmatpush1.msra.mxu0 0.0
    %4082 = vmatprep.subr.mxu0 0.0
    %4083 = vmatpush1.msra.mxu0 0.0
    %4084 = vmatprep.subr.mxu0 0.0
    %4085 = vmatpush1.msra.mxu0 0.0
    %4086 = vmatprep.subr.mxu0 0.0
    %4087 = vmatpush1.msra.mxu0 0.0
    %4088 = vmatprep.subr.mxu0 0.0
    %4089 = vmatpush1.msra.mxu0 0.0
    %4090 = vmatprep.subr.mxu0 0.0
    %4091 = vmatpush1.msra.mxu0 0.0
    %4092 = vmatprep.subr.mxu0 0.0
    %4093 = vmatpush1.msra.mxu0 0.0
    %4094 = vmatprep.subr.mxu0 0.0
    %4095 = vmatpush1.msra.mxu0 0.0
    %4096 = vmatprep.subr.mxu0 0.0
    %4097 = vmatpush1.msra.mxu0 0.0
    %4098 = vmatprep.subr.mxu0 0.0
    %4099 = vmatpush1.msra.mxu0 0.0
    %4100 = vmatprep.subr.mxu0 0.0
    %4101 = vmatpush1.msra.mxu0 0.0
    %4102 = vmatprep.subr.mxu0 0.0
    %4103 = vmatpush1.msra.mxu0 0.0
    %4104 = vmatprep.subr.mxu0 0.0
    %4105 = vmatpush1.msra.mxu0 0.0
    %4106 = vmatprep.mubr.f32.mxu0 0.0
    %4107 = vmatmul.mubr.f32.gmra.mrb[0].mxu0 %v4040
    %v4108 = vpop.f32.mrb[0].mxu0
    %v4109 = vadd.f32 0.0, %v4108
    %v4110 = vpop.f32.mrb[0].mxu0
    %4111 = vdwg.mxu0
    %v4113 = vsel %vm204, %v4109, 0
    %4115 = vmatprep.subr.mxu0 0.0
    %4116 = vmatpush1.msra.mxu0 %v3157
    %4117 = vmatprep.subr.mxu0 0.0
    %4118 = vmatpush1.msra.mxu0 0.0
    %4119 = vmatprep.subr.mxu0 0.0
    %4120 = vmatpush1.msra.mxu0 0.0
    %4121 = vmatprep.subr.mxu0 0.0
    %4122 = vmatpush1.msra.mxu0 0.0
    %4123 = vmatprep.subr.mxu0 0.0
    %4124 = vmatpush1.msra.mxu0 0.0
    %4125 = vmatprep.subr.mxu0 0.0
    %4126 = vmatpush1.msra.mxu0 0.0
    %4127 = vmatprep.subr.mxu0 0.0
    %4128 = vmatpush1.msra.mxu0 0.0
    %4129 = vmatprep.subr.mxu0 0.0
    %4130 = vmatpush1.msra.mxu0 0.0
    %4131 = vmatprep.subr.mxu0 0.0
    %4132 = vmatpush1.msra.mxu0 0.0
    %4133 = vmatprep.subr.mxu0 0.0
    %4134 = vmatpush1.msra.mxu0 0.0
    %4135 = vmatprep.subr.mxu0 0.0
    %4136 = vmatpush1.msra.mxu0 0.0
    %4137 = vmatprep.subr.mxu0 0.0
    %4138 = vmatpush1.msra.mxu0 0.0
    %4139 = vmatprep.subr.mxu0 0.0
    %4140 = vmatpush1.msra.mxu0 0.0
    %4141 = vmatprep.subr.mxu0 0.0
    %4142 = vmatpush1.msra.mxu0 0.0
    %4143 = vmatprep.subr.mxu0 0.0
    %4144 = vmatpush1.msra.mxu0 0.0
    %4145 = vmatprep.subr.mxu0 0.0
    %4146 = vmatpush1.msra.mxu0 0.0
    %4147 = vmatprep.subr.mxu0 0.0
    %4148 = vmatpush1.msra.mxu0 0.0
    %4149 = vmatprep.subr.mxu0 0.0
    %4150 = vmatpush1.msra.mxu0 0.0
    %4151 = vmatprep.subr.mxu0 0.0
    %4152 = vmatpush1.msra.mxu0 0.0
    %4153 = vmatprep.subr.mxu0 0.0
    %4154 = vmatpush1.msra.mxu0 0.0
    %4155 = vmatprep.subr.mxu0 0.0
    %4156 = vmatpush1.msra.mxu0 0.0
    %4157 = vmatprep.subr.mxu0 0.0
    %4158 = vmatpush1.msra.mxu0 0.0
    %4159 = vmatprep.subr.mxu0 0.0
    %4160 = vmatpush1.msra.mxu0 0.0
    %4161 = vmatprep.subr.mxu0 0.0
    %4162 = vmatpush1.msra.mxu0 0.0
    %4163 = vmatprep.subr.mxu0 0.0
    %4164 = vmatpush1.msra.mxu0 0.0
    %4165 = vmatprep.subr.mxu0 0.0
    %4166 = vmatpush1.msra.mxu0 0.0
    %4167 = vmatprep.subr.mxu0 0.0
    %4168 = vmatpush1.msra.mxu0 0.0
    %4169 = vmatprep.subr.mxu0 0.0
    %4170 = vmatpush1.msra.mxu0 0.0
    %4171 = vmatprep.subr.mxu0 0.0
    %4172 = vmatpush1.msra.mxu0 0.0
    %4173 = vmatprep.subr.mxu0 0.0
    %4174 = vmatpush1.msra.mxu0 0.0
    %4175 = vmatprep.subr.mxu0 0.0
    %4176 = vmatpush1.msra.mxu0 0.0
    %4177 = vmatprep.subr.mxu0 0.0
    %4178 = vmatpush1.msra.mxu0 0.0
    %4179 = vmatprep.mubr.f32.mxu0 0.0
    %4180 = vmatmul.mubr.f32.gmra.mrb[0].mxu0 %v4113
    %v4181 = vpop.f32.mrb[0].mxu0
    %v4182 = vadd.f32 0.0, %v4181
    %v4183 = vpop.f32.mrb[0].mxu0
    %4184 = vdwg.mxu0
    %v4185 = vadd.f32 %v3944, %v4182
    %4186 = vrot.lane.b32.xlu0 %v2501, 116
    %v4187 = vpop.permute.xlu0 %4186
    %4188 = vrot.lane.b32.xlu0 %v2501, 100
    %v4189 = vpop.permute.xlu0 %4188
    %v4190 = vsel %vm204, %v4187, 0
    %v4192 = vsel %vm204, %v4189, 0
    %4194 = vmatprep.subr.mxu0 0.0
    %4195 = vmatpush1.xpose.msra.mxu0 %v4192
    %4196 = vmatprep.subr.mxu0 0.0
    %4197 = vmatpush1.xpose.msra.mxu0 0.0
    %4198 = vmatprep.subr.mxu0 0.0
    %4199 = vmatpush1.xpose.msra.mxu0 0.0
    %4200 = vmatprep.subr.mxu0 0.0
    %4201 = vmatpush1.xpose.msra.mxu0 0.0
    %4202 = vmatprep.subr.mxu0 0.0
    %4203 = vmatpush1.xpose.msra.mxu0 0.0
    %4204 = vmatprep.subr.mxu0 0.0
    %4205 = vmatpush1.xpose.msra.mxu0 0.0
    %4206 = vmatprep.subr.mxu0 0.0
    %4207 = vmatpush1.xpose.msra.mxu0 0.0
    %4208 = vmatprep.subr.mxu0 0.0
    %4209 = vmatpush1.xpose.msra.mxu0 0.0
    %4210 = vmatprep.subr.mxu0 0.0
    %4211 = vmatpush1.xpose.msra.mxu0 0.0
    %4212 = vmatprep.subr.mxu0 0.0
    %4213 = vmatpush1.xpose.msra.mxu0 0.0
    %4214 = vmatprep.subr.mxu0 0.0
    %4215 = vmatpush1.xpose.msra.mxu0 0.0
    %4216 = vmatprep.subr.mxu0 0.0
    %4217 = vmatpush1.xpose.msra.mxu0 0.0
    %4218 = vmatprep.subr.mxu0 0.0
    %4219 = vmatpush1.xpose.msra.mxu0 0.0
    %4220 = vmatprep.subr.mxu0 0.0
    %4221 = vmatpush1.xpose.msra.mxu0 0.0
    %4222 = vmatprep.subr.mxu0 0.0
    %4223 = vmatpush1.xpose.msra.mxu0 0.0
    %4224 = vmatprep.subr.mxu0 0.0
    %4225 = vmatpush1.xpose.msra.mxu0 0.0
    %4226 = vmatprep.subr.mxu0 0.0
    %4227 = vmatpush1.xpose.msra.mxu0 0.0
    %4228 = vmatprep.subr.mxu0 0.0
    %4229 = vmatpush1.xpose.msra.mxu0 0.0
    %4230 = vmatprep.subr.mxu0 0.0
    %4231 = vmatpush1.xpose.msra.mxu0 0.0
    %4232 = vmatprep.subr.mxu0 0.0
    %4233 = vmatpush1.xpose.msra.mxu0 0.0
    %4234 = vmatprep.subr.mxu0 0.0
    %4235 = vmatpush1.xpose.msra.mxu0 0.0
    %4236 = vmatprep.subr.mxu0 0.0
    %4237 = vmatpush1.xpose.msra.mxu0 0.0
    %4238 = vmatprep.subr.mxu0 0.0
    %4239 = vmatpush1.xpose.msra.mxu0 0.0
    %4240 = vmatprep.subr.mxu0 0.0
    %4241 = vmatpush1.xpose.msra.mxu0 0.0
    %4242 = vmatprep.subr.mxu0 0.0
    %4243 = vmatpush1.xpose.msra.mxu0 0.0
    %4244 = vmatprep.subr.mxu0 0.0
    %4245 = vmatpush1.xpose.msra.mxu0 0.0
    %4246 = vmatprep.subr.mxu0 0.0
    %4247 = vmatpush1.xpose.msra.mxu0 0.0
    %4248 = vmatprep.subr.mxu0 0.0
    %4249 = vmatpush1.xpose.msra.mxu0 0.0
    %4250 = vmatprep.subr.mxu0 0.0
    %4251 = vmatpush1.xpose.msra.mxu0 0.0
    %4252 = vmatprep.subr.mxu0 0.0
    %4253 = vmatpush1.xpose.msra.mxu0 0.0
    %4254 = vmatprep.subr.mxu0 0.0
    %4255 = vmatpush1.xpose.msra.mxu0 0.0
    %4256 = vmatprep.subr.mxu0 0.0
    %4257 = vmatpush1.xpose.msra.mxu0 0.0
    %4258 = vmatprep.mubr.f32.mxu0 0.0
    %4259 = vmatmul.mubr.f32.gmra.mrb[0].mxu0 %v4190
    %v4260 = vpop.f32.mrb[0].mxu0
    %v4261 = vadd.f32 0.0, %v4260
    %v4262 = vpop.f32.mrb[0].mxu0
    %4263 = vdwg.mxu0
    %v4264 = vsel %vm279, %v4261, -inf
    %4265 = vmax.xlane.f32.xlu0 %v4264
    %v4266 = vpop.xlane.xlu0 %4265
    %v4267 = vsub.f32 %v4261, %v4266
    %v4268 = vmul.f32 %v4267, 1.442695
    %v4269 = vpow.pop %v4268
    %v4270 = vsel %vm279, %v4269, 0.0
    %4271 = vadd.xlane.f32.xlu0 %v4270
    %v4272 = vpop.xlane.xlu0 %4271
    %v4273 = vrcp.pop %v4272
    %v4274 = vmul.f32 %v4269, %v4273
    %4275 = vrot.lane.b32.xlu0 %v2501, 84
    %v4276 = vpop.permute.xlu0 %4275
    %v4279 = vsel %vm279, %v4274, 0
    %4281 = vmatprep.subr.mxu0 0.0
    %4282 = vmatpush1.msra.mxu0 %v4276
    %4283 = vmatprep.subr.mxu0 0.0
    %4284 = vmatpush1.msra.mxu0 0.0
    %4285 = vmatprep.subr.mxu0 0.0
    %4286 = vmatpush1.msra.mxu0 0.0
    %4287 = vmatprep.subr.mxu0 0.0
    %4288 = vmatpush1.msra.mxu0 0.0
    %4289 = vmatprep.subr.mxu0 0.0
    %4290 = vmatpush1.msra.mxu0 0.0
    %4291 = vmatprep.subr.mxu0 0.0
    %4292 = vmatpush1.msra.mxu0 0.0
    %4293 = vmatprep.subr.mxu0 0.0
    %4294 = vmatpush1.msra.mxu0 0.0
    %4295 = vmatprep.subr.mxu0 0.0
    %4296 = vmatpush1.msra.mxu0 0.0
    %4297 = vmatprep.subr.mxu0 0.0
    %4298 = vmatpush1.msra.mxu0 0.0
    %4299 = vmatprep.subr.mxu0 0.0
    %4300 = vmatpush1.msra.mxu0 0.0
    %4301 = vmatprep.subr.mxu0 0.0
    %4302 = vmatpush1.msra.mxu0 0.0
    %4303 = vmatprep.subr.mxu0 0.0
    %4304 = vmatpush1.msra.mxu0 0.0
    %4305 = vmatprep.subr.mxu0 0.0
    %4306 = vmatpush1.msra.mxu0 0.0
    %4307 = vmatprep.subr.mxu0 0.0
    %4308 = vmatpush1.msra.mxu0 0.0
    %4309 = vmatprep.subr.mxu0 0.0
    %4310 = vmatpush1.msra.mxu0 0.0
    %4311 = vmatprep.subr.mxu0 0.0
    %4312 = vmatpush1.msra.mxu0 0.0
    %4313 = vmatprep.subr.mxu0 0.0
    %4314 = vmatpush1.msra.mxu0 0.0
    %4315 = vmatprep.subr.mxu0 0.0
    %4316 = vmatpush1.msra.mxu0 0.0
    %4317 = vmatprep.subr.mxu0 0.0
    %4318 = vmatpush1.msra.mxu0 0.0
    %4319 = vmatprep.subr.mxu0 0.0
    %4320 = vmatpush1.msra.mxu0 0.0
    %4321 = vmatprep.subr.mxu0 0.0
    %4322 = vmatpush1.msra.mxu0 0.0
    %4323 = vmatprep.subr.mxu0 0.0
    %4324 = vmatpush1.msra.mxu0 0.0
    %4325 = vmatprep.subr.mxu0 0.0
    %4326 = vmatpush1.msra.mxu0 0.0
    %4327 = vmatprep.subr.mxu0 0.0
    %4328 = vmatpush1.msra.mxu0 0.0
    %4329 = vmatprep.subr.mxu0 0.0
    %4330 = vmatpush1.msra.mxu0 0.0
    %4331 = vmatprep.subr.mxu0 0.0
    %4332 = vmatpush1.msra.mxu0 0.0
    %4333 = vmatprep.subr.mxu0 0.0
    %4334 = vmatpush1.msra.mxu0 0.0
    %4335 = vmatprep.subr.mxu0 0.0
    %4336 = vmatpush1.msra.mxu0 0.0
    %4337 = vmatprep.subr.mxu0 0.0
    %4338 = vmatpush1.msra.mxu0 0.0
    %4339 = vmatprep.subr.mxu0 0.0
    %4340 = vmatpush1.msra.mxu0 0.0
    %4341 = vmatprep.subr.mxu0 0.0
    %4342 = vmatpush1.msra.mxu0 0.0
    %4343 = vmatprep.subr.mxu0 0.0
    %4344 = vmatpush1.msra.mxu0 0.0
    %4345 = vmatprep.mubr.f32.mxu0 0.0
    %4346 = vmatmul.mubr.f32.gmra.mrb[0].mxu0 %v4279
    %v4347 = vpop.f32.mrb[0].mxu0
    %v4348 = vadd.f32 0.0, %v4347
    %v4349 = vpop.f32.mrb[0].mxu0
    %4350 = vdwg.mxu0
    %v4352 = vsel %vm204, %v4348, 0
    %4354 = vmatprep.subr.mxu0 0.0
    %4355 = vmatpush1.msra.mxu0 %v3399
    %4356 = vmatprep.subr.mxu0 0.0
    %4357 = vmatpush1.msra.mxu0 0.0
    %4358 = vmatprep.subr.mxu0 0.0
    %4359 = vmatpush1.msra.mxu0 0.0
    %4360 = vmatprep.subr.mxu0 0.0
    %4361 = vmatpush1.msra.mxu0 0.0
    %4362 = vmatprep.subr.mxu0 0.0
    %4363 = vmatpush1.msra.mxu0 0.0
    %4364 = vmatprep.subr.mxu0 0.0
    %4365 = vmatpush1.msra.mxu0 0.0
    %4366 = vmatprep.subr.mxu0 0.0
    %4367 = vmatpush1.msra.mxu0 0.0
    %4368 = vmatprep.subr.mxu0 0.0
    %4369 = vmatpush1.msra.mxu0 0.0
    %4370 = vmatprep.subr.mxu0 0.0
    %4371 = vmatpush1.msra.mxu0 0.0
    %4372 = vmatprep.subr.mxu0 0.0
    %4373 = vmatpush1.msra.mxu0 0.0
    %4374 = vmatprep.subr.mxu0 0.0
    %4375 = vmatpush1.msra.mxu0 0.0
    %4376 = vmatprep.subr.mxu0 0.0
    %4377 = vmatpush1.msra.mxu0 0.0
    %4378 = vmatprep.subr.mxu0 0.0
    %4379 = vmatpush1.msra.mxu0 0.0
    %4380 = vmatprep.subr.mxu0 0.0
    %4381 = vmatpush1.msra.mxu0 0.0
    %4382 = vmatprep.subr.mxu0 0.0
    %4383 = vmatpush1.msra.mxu0 0.0
    %4384 = vmatprep.subr.mxu0 0.0
    %4385 = vmatpush1.msra.mxu0 0.0
    %4386 = vmatprep.subr.mxu0 0.0
    %4387 = vmatpush1.msra.mxu0 0.0
    %4388 = vmatprep.subr.mxu0 0.0
    %4389 = vmatpush1.msra.mxu0 0.0
    %4390 = vmatprep.subr.mxu0 0.0
    %4391 = vmatpush1.msra.mxu0 0.0
    %4392 = vmatprep.subr.mxu0 0.0
    %4393 = vmatpush1.msra.mxu0 0.0
    %4394 = vmatprep.subr.mxu0 0.0
    %4395 = vmatpush1.msra.mxu0 0.0
    %4396 = vmatprep.subr.mxu0 0.0
    %4397 = vmatpush1.msra.mxu0 0.0
    %4398 = vmatprep.subr.mxu0 0.0
    %4399 = vmatpush1.msra.mxu0 0.0
    %4400 = vmatprep.subr.mxu0 0.0
    %4401 = vmatpush1.msra.mxu0 0.0
    %4402 = vmatprep.subr.mxu0 0.0
    %4403 = vmatpush1.msra.mxu0 0.0
    %4404 = vmatprep.subr.mxu0 0.0
    %4405 = vmatpush1.msra.mxu0 0.0
    %4406 = vmatprep.subr.mxu0 0.0
    %4407 = vmatpush1.msra.mxu0 0.0
    %4408 = vmatprep.subr.mxu0 0.0
    %4409 = vmatpush1.msra.mxu0 0.0
    %4410 = vmatprep.subr.mxu0 0.0
    %4411 = vmatpush1.msra.mxu0 0.0
    %4412 = vmatprep.subr.mxu0 0.0
    %4413 = vmatpush1.msra.mxu0 0.0
    %4414 = vmatprep.subr.mxu0 0.0
    %4415 = vmatpush1.msra.mxu0 0.0
    %4416 = vmatprep.subr.mxu0 0.0
    %4417 = vmatpush1.msra.mxu0 0.0
    %4418 = vmatprep.mubr.f32.mxu0 0.0
    %4419 = vmatmul.mubr.f32.gmra.mrb[0].mxu0 %v4352
    %v4420 = vpop.f32.mrb[0].mxu0
    %v4421 = vadd.f32 0.0, %v4420
    %v4422 = vpop.f32.mrb[0].mxu0
    %4423 = vdwg.mxu0
    %v4424 = vadd.f32 %v4185, %v4421
    %s4425 = scalar_lea.vmem %s6, 1
    %v4426 = vld [vmem:[%s4425] sm:$0x1]
    %v4428 = vlaneseq
    %v4429 = vshrl.u32 %v4428, 7
    %v4430 = vsub.s32 0, %v4429
    %v4431 = vrot.slane %v4426, %v4430
    %v4433 = vadd.f32 %v3471, %v4431
    %v4434 = vadd.f32 %v4424, %v4431
    %v4435 = vadd.f32 %v2364, %v4433
    %v4436 = vadd.f32 %v2365, %v4434
    %s4437 = scalar_lea.vmem %s7, 1
    %v4438 = vld [vmem:[%s4437] sm:$0x1]
    %s4439 = scalar_lea.vmem %s8, 1
    %v4440 = vld [vmem:[%s4439] sm:$0x1]
    %v4441 = vsel %vm65, %v4435, 0.0
    %4442 = vadd.xlane.f32.xlu0 %v4441
    %v4443 = vpop.xlane.xlu0 %4442
    %v4444 = vsel %vm65, %v4436, 0.0
    %4445 = vadd.xlane.f32.xlu0 %v4444
    %v4446 = vpop.xlane.xlu0 %4445
    %v4447 = vmul.f32 %v4443, %v72
    %v4448 = vmul.f32 %v4446, %v72
    %v4449 = vsub.f32 %v4435, %v4447
    %v4450 = vsub.f32 %v4436, %v4448
    %v4451 = vmul.f32 %v4449, %v4449
    %v4452 = vmul.f32 %v4450, %v4450
    %v4453 = vsel %vm65, %v4451, 0.0
    %4454 = vadd.xlane.f32.xlu0 %v4453
    %v4455 = vpop.xlane.xlu0 %4454
    %v4456 = vsel %vm65, %v4452, 0.0
    %4457 = vadd.xlane.f32.xlu0 %v4456
    %v4458 = vpop.xlane.xlu0 %4457
    %v4459 = vmul.f32 %v4455, %v72
    %v4460 = vmul.f32 %v4458, %v72
    %v4461 = vadd.f32 %v4459, 1e-05
    %v4462 = vadd.f32 %v4460, 1e-05
    %v4463 = vrsqrt.pop %v4461
    %v4464 = vrsqrt.pop %v4462
    %v4465 = vmul.f32 %v4449, %v4463
    %v4466 = vmul.f32 %v4450, %v4464
    %v4468 = vlaneseq
    %v4469 = vshrl.u32 %v4468, 7
    %v4470 = vsub.s32 0, %v4469
    %v4471 = vrot.slane %v4438, %v4470
    %v4473 = vmul.f32 %v4465, %v4471
    %v4474 = vmul.f32 %v4466, %v4471
    %v4476 = vlaneseq
    %v4477 = vshrl.u32 %v4476, 7
    %v4478 = vsub.s32 0, %v4477
    %v4479 = vrot.slane %v4440, %v4478
    %v4481 = vadd.f32 %v4473, %v4479
    %v4482 = vadd.f32 %v4474, %v4479
    %s4483 = scalar_lea.vmem %s9, 16
    %v4484 = vld [vmem:[%s4483] sm:$0xff]
    %v4485 = vld [vmem:[%s4483 + $0x8] sm:$0xff]
    %s4486 = scalar_lea.vmem %s10, 1
    %v4487 = vld [vmem:[%s4486] sm:$0x1]
    %v4489 = vlaneseq
    %v4490 = vshrl.u32 %v4489, 7
    %v4491 = vsub.s32 0, %v4490
    %v4492 = vrot.slane %v4487, %v4491
    %v4495 = vsel %vm65, %v4481, 0
    %v4498 = vsel %vm65, %v4482, 0
    %4500 = vmatprep.subr.mxu0 0.0
    %4501 = vmatpush1.msra.mxu0 %v4484
    %4502 = vmatprep.subr.mxu0 0.0
    %4503 = vmatpush1.msra.mxu0 %v4485
    %4504 = vmatprep.subr.mxu0 0.0
    %4505 = vmatpush1.msra.mxu0 0.0
    %4506 = vmatprep.subr.mxu0 0.0
    %4507 = vmatpush1.msra.mxu0 0.0
    %4508 = vmatprep.subr.mxu0 0.0
    %4509 = vmatpush1.msra.mxu0 0.0
    %4510 = vmatprep.subr.mxu0 0.0
    %4511 = vmatpush1.msra.mxu0 0.0
    %4512 = vmatprep.subr.mxu0 0.0
    %4513 = vmatpush1.msra.mxu0 0.0
    %4514 = vmatprep.subr.mxu0 0.0
    %4515 = vmatpush1.msra.mxu0 0.0
    %4516 = vmatprep.subr.mxu0 0.0
    %4517 = vmatpush1.msra.mxu0 0.0
    %4518 = vmatprep.subr.mxu0 0.0
    %4519 = vmatpush1.msra.mxu0 0.0
    %4520 = vmatprep.subr.mxu0 0.0
    %4521 = vmatpush1.msra.mxu0 0.0
    %4522 = vmatprep.subr.mxu0 0.0
    %4523 = vmatpush1.msra.mxu0 0.0
    %4524 = vmatprep.subr.mxu0 0.0
    %4525 = vmatpush1.msra.mxu0 0.0
    %4526 = vmatprep.subr.mxu0 0.0
    %4527 = vmatpush1.msra.mxu0 0.0
    %4528 = vmatprep.subr.mxu0 0.0
    %4529 = vmatpush1.msra.mxu0 0.0
    %4530 = vmatprep.subr.mxu0 0.0
    %4531 = vmatpush1.msra.mxu0 0.0
    %4532 = vmatprep.subr.mxu0 0.0
    %4533 = vmatpush1.msra.mxu0 0.0
    %4534 = vmatprep.subr.mxu0 0.0
    %4535 = vmatpush1.msra.mxu0 0.0
    %4536 = vmatprep.subr.mxu0 0.0
    %4537 = vmatpush1.msra.mxu0 0.0
    %4538 = vmatprep.subr.mxu0 0.0
    %4539 = vmatpush1.msra.mxu0 0.0
    %4540 = vmatprep.subr.mxu0 0.0
    %4541 = vmatpush1.msra.mxu0 0.0
    %4542 = vmatprep.subr.mxu0 0.0
    %4543 = vmatpush1.msra.mxu0 0.0
    %4544 = vmatprep.subr.mxu0 0.0
    %4545 = vmatpush1.msra.mxu0 0.0
    %4546 = vmatprep.subr.mxu0 0.0
    %4547 = vmatpush1.msra.mxu0 0.0
    %4548 = vmatprep.subr.mxu0 0.0
    %4549 = vmatpush1.msra.mxu0 0.0
    %4550 = vmatprep.subr.mxu0 0.0
    %4551 = vmatpush1.msra.mxu0 0.0
    %4552 = vmatprep.subr.mxu0 0.0
    %4553 = vmatpush1.msra.mxu0 0.0
    %4554 = vmatprep.subr.mxu0 0.0
    %4555 = vmatpush1.msra.mxu0 0.0
    %4556 = vmatprep.subr.mxu0 0.0
    %4557 = vmatpush1.msra.mxu0 0.0
    %4558 = vmatprep.subr.mxu0 0.0
    %4559 = vmatpush1.msra.mxu0 0.0
    %4560 = vmatprep.subr.mxu0 0.0
    %4561 = vmatpush1.msra.mxu0 0.0
    %4562 = vmatprep.subr.mxu0 0.0
    %4563 = vmatpush1.msra.mxu0 0.0
    %4564 = vmatprep.mubr.f32.mxu0 0.0
    %4565 = vmatmul.mubr.f32.gmra.mrb[0].mxu0 %v4495
    %v4566 = vpop.f32.mrb[0].mxu0
    %v4567 = vadd.f32 %v4492, %v4566
    %v4568 = vpop.f32.mrb[0].mxu0
    %4569 = vmatprep.mubr.f32.mxu0 0.0
    %4570 = vmatmul.mubr.f32.gmra.mrb[0].mxu0 %v4498
    %v4571 = vpop.f32.mrb[0].mxu0
    %v4572 = vadd.f32 %v4492, %v4571
    %v4573 = vpop.f32.mrb[0].mxu0
    %4574 = vdwg.mxu0
    %v4575 = vmax.f32 %v4567, 0.0
    %v4576 = vmax.f32 %v4572, 0.0
    %s4577 = scalar_lea.vmem %s11, 32
    %v4578 = vld [vmem:[%s4577] sm:$0xff]
    %v4579 = vld [vmem:[%s4577 + $0x8] sm:$0xff]
    %v4580 = vld [vmem:[%s4577 + $0x10] sm:$0xff]
    %v4581 = vld [vmem:[%s4577 + $0x18] sm:$0xff]
    %v4583 = vsel %vm2273, %v4575, 0
    %v4586 = vsel %vm2273, %v4576, 0
    %4588 = vmatprep.subr.mxu0 0.0
    %4589 = vmatpush1.msra.mxu0 %v4578
    %4590 = vmatprep.subr.mxu0 0.0
    %4591 = vmatpush1.msra.mxu0 %v4579
    %4592 = vmatprep.subr.mxu0 0.0
    %4593 = vmatpush1.msra.mxu0 %v4580
    %4594 = vmatprep.subr.mxu0 0.0
    %4595 = vmatpush1.msra.mxu0 %v4581
    %4596 = vmatprep.subr.mxu0 0.0
    %4597 = vmatpush1.msra.mxu0 0.0
    %4598 = vmatprep.subr.mxu0 0.0
    %4599 = vmatpush1.msra.mxu0 0.0
    %4600 = vmatprep.subr.mxu0 0.0
    %4601 = vmatpush1.msra.mxu0 0.0
    %4602 = vmatprep.subr.mxu0 0.0
    %4603 = vmatpush1.msra.mxu0 0.0
    %4604 = vmatprep.subr.mxu0 0.0
    %4605 = vmatpush1.msra.mxu0 0.0
    %4606 = vmatprep.subr.mxu0 0.0
    %4607 = vmatpush1.msra.mxu0 0.0
    %4608 = vmatprep.subr.mxu0 0.0
    %4609 = vmatpush1.msra.mxu0 0.0
    %4610 = vmatprep.subr.mxu0 0.0
    %4611 = vmatpush1.msra.mxu0 0.0
    %4612 = vmatprep.subr.mxu0 0.0
    %4613 = vmatpush1.msra.mxu0 0.0
    %4614 = vmatprep.subr.mxu0 0.0
    %4615 = vmatpush1.msra.mxu0 0.0
    %4616 = vmatprep.subr.mxu0 0.0
    %4617 = vmatpush1.msra.mxu0 0.0
    %4618 = vmatprep.subr.mxu0 0.0
    %4619 = vmatpush1.msra.mxu0 0.0
    %4620 = vmatprep.subr.mxu0 0.0
    %4621 = vmatpush1.msra.mxu0 0.0
    %4622 = vmatprep.subr.mxu0 0.0
    %4623 = vmatpush1.msra.mxu0 0.0
    %4624 = vmatprep.subr.mxu0 0.0
    %4625 = vmatpush1.msra.mxu0 0.0
    %4626 = vmatprep.subr.mxu0 0.0
    %4627 = vmatpush1.msra.mxu0 0.0
    %4628 = vmatprep.subr.mxu0 0.0
    %4629 = vmatpush1.msra.mxu0 0.0
    %4630 = vmatprep.subr.mxu0 0.0
    %4631 = vmatpush1.msra.mxu0 0.0
    %4632 = vmatprep.subr.mxu0 0.0
    %4633 = vmatpush1.msra.mxu0 0.0
    %4634 = vmatprep.subr.mxu0 0.0
    %4635 = vmatpush1.msra.mxu0 0.0
    %4636 = vmatprep.subr.mxu0 0.0
    %4637 = vmatpush1.msra.mxu0 0.0
    %4638 = vmatprep.subr.mxu0 0.0
    %4639 = vmatpush1.msra.mxu0 0.0
    %4640 = vmatprep.subr.mxu0 0.0
    %4641 = vmatpush1.msra.mxu0 0.0
    %4642 = vmatprep.subr.mxu0 0.0
    %4643 = vmatpush1.msra.mxu0 0.0
    %4644 = vmatprep.subr.mxu0 0.0
    %4645 = vmatpush1.msra.mxu0 0.0
    %4646 = vmatprep.subr.mxu0 0.0
    %4647 = vmatpush1.msra.mxu0 0.0
    %4648 = vmatprep.subr.mxu0 0.0
    %4649 = vmatpush1.msra.mxu0 0.0
    %4650 = vmatprep.subr.mxu0 0.0
    %4651 = vmatpush1.msra.mxu0 0.0
    %4652 = vmatprep.mubr.f32.mxu0 0.0
    %4653 = vmatmul.mubr.f32.gmra.mrb[0].mxu0 %v4583
    %v4654 = vpop.f32.mrb[0].mxu0
    %v4655 = vadd.f32 0.0, %v4654
    %v4656 = vpop.f32.mrb[0].mxu0
    %4657 = vmatprep.mubr.f32.mxu0 0.0
    %4658 = vmatmul.mubr.f32.gmra.mrb[0].mxu0 %v4586
    %v4659 = vpop.f32.mrb[0].mxu0
    %v4660 = vadd.f32 0.0, %v4659
    %v4661 = vpop.f32.mrb[0].mxu0
    %4662 = vdwg.mxu0
    %v4663 = vadd.f32 %v4435, %v4655
    %v4664 = vadd.f32 %v4436, %v4660
    %s4665 = scalar_lea.vmem %s12, 1
    %v4666 = vld [vmem:[%s4665] sm:$0x1]
    %v4668 = vlaneseq
    %v4669 = vshrl.u32 %v4668, 7
    %v4670 = vsub.s32 0, %v4669
    %v4671 = vrot.slane %v4666, %v4670
    %v4673 = vadd.f32 %v4663, %v4671
    %v4674 = vadd.f32 %v4664, %v4671
    %v4675 = vld [vmem:[%s13] sm:$0x1]
    %v4676 = vld [vmem:[%s14] sm:$0x1]
    %v4677 = vsel %vm65, %v4673, 0.0
    %4678 = vadd.xlane.f32.xlu0 %v4677
    %v4679 = vpop.xlane.xlu0 %4678
    %v4680 = vsel %vm65, %v4674, 0.0
    %4681 = vadd.xlane.f32.xlu0 %v4680
    %v4682 = vpop.xlane.xlu0 %4681
    %v4683 = vmul.f32 %v4679, %v72
    %v4684 = vmul.f32 %v4682, %v72
    %v4685 = vsub.f32 %v4673, %v4683
    %v4686 = vsub.f32 %v4674, %v4684
    %v4687 = vmul.f32 %v4685, %v4685
    %v4688 = vmul.f32 %v4686, %v4686
    %v4689 = vsel %vm65, %v4687, 0.0
    %4690 = vadd.xlane.f32.xlu0 %v4689
    %v4691 = vpop.xlane.xlu0 %4690
    %v4692 = vsel %vm65, %v4688, 0.0
    %4693 = vadd.xlane.f32.xlu0 %v4692
    %v4694 = vpop.xlane.xlu0 %4693
    %v4695 = vmul.f32 %v4691, %v72
    %v4696 = vmul.f32 %v4694, %v72
    %v4697 = vadd.f32 %v4695, 1e-05
    %v4698 = vadd.f32 %v4696, 1e-05
    %v4699 = vrsqrt.pop %v4697
    %v4700 = vrsqrt.pop %v4698
    %v4701 = vmul.f32 %v4685, %v4699
    %v4702 = vmul.f32 %v4686, %v4700
    %v4704 = vlaneseq
    %v4705 = vshrl.u32 %v4704, 7
    %v4706 = vsub.s32 0, %v4705
    %v4707 = vrot.slane %v4675, %v4706
    %v4709 = vmul.f32 %v4701, %v4707
    %v4710 = vmul.f32 %v4702, %v4707
    %v4712 = vlaneseq
    %v4713 = vshrl.u32 %v4712, 7
    %v4714 = vsub.s32 0, %v4713
    %v4715 = vrot.slane %v4676, %v4714
    %v4717 = vadd.f32 %v4709, %v4715
    %v4718 = vadd.f32 %v4710, %v4715
    %v4719 = vld [vmem:[%s15] sm:$0x1]
    %v4720 = vld [vmem:[#allocation2] sm:$0x1]
    %4722 = vset.pattern.permute.xlu0 0
    %4723 = vperm.xlu0 %4722, %v4720
    %v4724 = vpop.permute.xlu0 %4723
    %v4726 = vlaneseq
    %v4727 = vshrl.u32 %v4726, 7
    %v4728 = vsub.s32 0, %v4727
    %v4729 = vrot.slane %v4724, %v4728
    %v4731 = vsel %vm65, %v4719, 0
    %v4734 = vsel %vm65, %v4717, 0
    %v4737 = vsel %vm65, %v4718, 0
    %4739 = vmatprep.subr.mxu0 0.0
    %4740 = vmatpush1.xpose.msra.mxu0 %v4734
    %4741 = vmatprep.subr.mxu0 0.0
    %4742 = vmatpush1.xpose.msra.mxu0 %v4737
    %4743 = vmatprep.subr.mxu0 0.0
    %4744 = vmatpush1.xpose.msra.mxu0 0.0
    %4745 = vmatprep.subr.mxu0 0.0
    %4746 = vmatpush1.xpose.msra.mxu0 0.0
    %4747 = vmatprep.subr.mxu0 0.0
    %4748 = vmatpush1.xpose.msra.mxu0 0.0
    %4749 = vmatprep.subr.mxu0 0.0
    %4750 = vmatpush1.xpose.msra.mxu0 0.0
    %4751 = vmatprep.subr.mxu0 0.0
    %4752 = vmatpush1.xpose.msra.mxu0 0.0
    %4753 = vmatprep.subr.mxu0 0.0
    %4754 = vmatpush1.xpose.msra.mxu0 0.0
    %4755 = vmatprep.subr.mxu0 0.0
    %4756 = vmatpush1.xpose.msra.mxu0 0.0
    %4757 = vmatprep.subr.mxu0 0.0
    %4758 = vmatpush1.xpose.msra.mxu0 0.0
    %4759 = vmatprep.subr.mxu0 0.0
    %4760 = vmatpush1.xpose.msra.mxu0 0.0
    %4761 = vmatprep.subr.mxu0 0.0
    %4762 = vmatpush1.xpose.msra.mxu0 0.0
    %4763 = vmatprep.subr.mxu0 0.0
    %4764 = vmatpush1.xpose.msra.mxu0 0.0
    %4765 = vmatprep.subr.mxu0 0.0
    %4766 = vmatpush1.xpose.msra.mxu0 0.0
    %4767 = vmatprep.subr.mxu0 0.0
    %4768 = vmatpush1.xpose.msra.mxu0 0.0
    %4769 = vmatprep.subr.mxu0 0.0
    %4770 = vmatpush1.xpose.msra.mxu0 0.0
    %4771 = vmatprep.subr.mxu0 0.0
    %4772 = vmatpush1.xpose.msra.mxu0 0.0
    %4773 = vmatprep.subr.mxu0 0.0
    %4774 = vmatpush1.xpose.msra.mxu0 0.0
    %4775 = vmatprep.subr.mxu0 0.0
    %4776 = vmatpush1.xpose.msra.mxu0 0.0
    %4777 = vmatprep.subr.mxu0 0.0
    %4778 = vmatpush1.xpose.msra.mxu0 0.0
    %4779 = vmatprep.subr.mxu0 0.0
    %4780 = vmatpush1.xpose.msra.mxu0 0.0
    %4781 = vmatprep.subr.mxu0 0.0
    %4782 = vmatpush1.xpose.msra.mxu0 0.0
    %4783 = vmatprep.subr.mxu0 0.0
    %4784 = vmatpush1.xpose.msra.mxu0 0.0
    %4785 = vmatprep.subr.mxu0 0.0
    %4786 = vmatpush1.xpose.msra.mxu0 0.0
    %4787 = vmatprep.subr.mxu0 0.0
    %4788 = vmatpush1.xpose.msra.mxu0 0.0
    %4789 = vmatprep.subr.mxu0 0.0
    %4790 = vmatpush1.xpose.msra.mxu0 0.0
    %4791 = vmatprep.subr.mxu0 0.0
    %4792 = vmatpush1.xpose.msra.mxu0 0.0
    %4793 = vmatprep.subr.mxu0 0.0
    %4794 = vmatpush1.xpose.msra.mxu0 0.0
    %4795 = vmatprep.subr.mxu0 0.0
    %4796 = vmatpush1.xpose.msra.mxu0 0.0
    %4797 = vmatprep.subr.mxu0 0.0
    %4798 = vmatpush1.xpose.msra.mxu0 0.0
    %4799 = vmatprep.subr.mxu0 0.0
    %4800 = vmatpush1.xpose.msra.mxu0 0.0
    %4801 = vmatprep.subr.mxu0 0.0
    %4802 = vmatpush1.xpose.msra.mxu0 0.0
    %4803 = vmatprep.mubr.f32.mxu0 0.0
    %4804 = vmatmul.mubr.f32.gmra.mrb[0].mxu0 %v4731
    %v4805 = vpop.f32.mrb[0].mxu0
    %v4806 = vadd.f32 %v4729, %v4805
    %v4807 = vpop.f32.mrb[0].mxu0
    %4808 = vdwg.mxu0
    %vm4809 = vcmask 122880
    %4810 = vst.msk [vmem:[%s17] sm:$0x1] %vm4809, %v4806
    %v4811 = vrot.slane %v4717, 7
    %v4813 = vrot.slane %v4718, 6
    %vm4815 = vcmask 1040384
    %v4816 = vsel %vm4815, %v4811, %v4813
    %vm4817 = vcmask 123904
    %4818 = vst.msk [vmem:[#allocation3] sm:$0x3] %vm4817, %v4816
    // Predicated region
    $region70: #{transformer_forward.1} parent=1 // pred_check
      _
    $region71: #{transformer_forward.1} parent=1 // pred_check_branch
      %4820 = sbr.rel (0) target = $region73
    $region72: #{transformer_forward.1} parent=1 // pred_region
      _
    $region73: #{transformer_forward.1} parent=1 // pred_fallthru
      _
    // Predicated region
    $region74: #{transformer_forward.1} parent=1 // pred_check
      _
    $region75: #{transformer_forward.1} parent=1 // pred_check_branch
      %4822 = sbr.rel (0) target = $region77
    $region76: #{transformer_forward.1} parent=1 // pred_region
      %s4824 = ssub.s32 32, 32
      %4825 = vsyncadd [#allocation4], %s4824
      %s4827 = sshll.u32 [#allocation3], 4
      %s4828 = int_to_ptr.vmem [resolvable:$true] %s4827
      %4830 = dma.vmem_to_hbm [thread:$0]  %s4828, 32, %s18, [#allocation4]
    $region77: #{transformer_forward.1} parent=1 // pred_fallthru
      _
    // Predicated region
    $region78: #{transformer_forward.1} parent=1 // pred_check
      _
    $region79: #{transformer_forward.1} parent=1 // pred_check_branch
      %4832 = sbr.rel (0) target = $region81
    $region80: #{transformer_forward.1} parent=1 // pred_region
      _
    $region81: #{transformer_forward.1} parent=1 // pred_fallthru
      _
    // Predicated region
    $region82: #{transformer_forward.1} parent=1 // pred_check
      _
    $region83: #{transformer_forward.1} parent=1 // pred_check_branch
      %4834 = sbr.rel (0) target = $region85
    $region84: #{transformer_forward.1} parent=1 // pred_region
      %4835 = dma.done [#allocation4], 32
    $region85: #{transformer_forward.1} parent=1 // pred_fallthru
      _
    %4836 = vsyncpa [#allocation4], 1

</llo_original>
